<compile_context>
chip_gen: v6e
topology: v6e:2x2x1
jax: 0.10.0
libtpu: 0.0.40
codegen_flags: <defaults>
</compile_context>

<pallas_src>
import jax
import jax.numpy as jnp
from jax.experimental import pallas as pl
from jax.experimental.pallas import tpu as pltpu

# ~4 MiB per block: big enough to amortize the ~0.35 us per-grid-step overhead
# for every dtype, small enough that (in + out) * double-buffering (16 MiB)
# fits the explicit 32 MiB scoped-VMEM limit on every generation (incl. v7x's
# 64 MiB physical VMEM per TC).
_TARGET_BLOCK_BYTES = 4 * 1024 * 1024
_VMEM_LIMIT_BYTES = 32 * 1024 * 1024

# Below this size the pallas_call launch + reshape plumbing dominates; XLA's
# fused negate is already at roofline for tiny tensors.
_MIN_PALLAS_BYTES = 512 * 1024


def _neg_kernel(x_ref, o_ref):
    # Elementwise negation in the input's native dtype.
    o_ref[...] = -x_ref[...]


def _dimension_semantics(grid_r: int):
    """Use CORE_PARALLEL on v7x (2 TCs/chip) so both cores' DMA paths stream;
    plain 'parallel' elsewhere (v5e/v6e have a single TensorCore)."""
    try:
        kind = jax.devices()[0].device_kind.lower()
    except Exception:  # pragma: no cover - defensive
        kind = ""
    if grid_r >= 2 and ("v7" in kind or "7x" in kind):
        return (pltpu.CORE_PARALLEL,)
    return ("parallel",)


def neg(x: jax.Array) -> jax.Array:
    """Elementwise negation. Works for any shape / dtype."""
    orig_shape = x.shape
    n = x.size
    itemsize = jnp.dtype(x.dtype).itemsize

    # Fast path: tiny tensors, or element counts that are not a multiple of
    # 128 lanes (avoids any pad/slice HBM round trip). XLA's elementwise
    # negate is at the HBM roofline for these cases anyway.
    if n == 0 or n * itemsize < _MIN_PALLAS_BYTES or n % 128 != 0:
        return -x

    # Pick the widest lane-dense column count (multiple of 128) that divides n
    # so we can reshape without padding. n % 128 == 0, so cols=128 always works.
    cols = 128
    for c in (4096, 2048, 1024, 512, 256):
        if n % c == 0:
            cols = c
            break
    rows = n // cols
    x2d = jnp.ravel(x).reshape(rows, cols)

    # Block rows: aim for ~_TARGET_BLOCK_BYTES bytes per block (dtype-aware),
    # rounded down to a multiple of 8 sublanes. When the array is smaller than
    # one block, use the full row extent (allowed by the (8,128) rule since it
    # equals the array dim). A non-divisible last block is masked by Pallas.
    block_r_target = max(8, _TARGET_BLOCK_BYTES // (cols * itemsize))
    block_r_target = max(8, (block_r_target // 8) * 8)
    if rows <= block_r_target:
        block_r = rows
        grid_r = 1
    else:
        block_r = block_r_target
        grid_r = pl.cdiv(rows, block_r)

    out2d = pl.pallas_call(
        _neg_kernel,
        out_shape=jax.ShapeDtypeStruct((rows, cols), x.dtype),
        grid_spec=pltpu.PrefetchScalarGridSpec(
            num_scalar_prefetch=0,
            grid=(grid_r,),
            in_specs=[pl.BlockSpec((block_r, cols), lambda i: (i, 0))],
            out_specs=pl.BlockSpec((block_r, cols), lambda i: (i, 0)),
        ),
        compiler_params=pltpu.CompilerParams(
            dimension_semantics=_dimension_semantics(grid_r),
            vmem_limit_bytes=_VMEM_LIMIT_BYTES,
        ),
        cost_estimate=pl.CostEstimate(
            flops=n, transcendentals=0, bytes_accessed=2 * n * itemsize
        ),
        # TODO(synk): pass input_output_aliases={0: 0} when the caller donates
        # x to avoid a second full-size HBM buffer.
    )(x2d)

    return out2d.reshape(orig_shape)


def neg_ref(x: jax.Array) -> jax.Array:
    """Pure-JAX reference for correctness checking."""
    return -x


if __name__ == "__main__":
    key = jax.random.PRNGKey(0)

    # Small NCHW-style input (batch=2, channels=4, spatial=16x16): exercises
    # the small-tensor fast path.
    x = jax.random.normal(key, (2, 4, 16, 16), dtype=jnp.float32) * 3.0
    out = jax.block_until_ready(neg(x))
    assert out.shape == x.shape and out.dtype == x.dtype
    assert jnp.array_equal(out, neg_ref(x)), "mismatch vs reference (small f32)"

    # Larger f32 input: exercises the Pallas path with >1 grid step and a
    # masked (non-divisible) last block.
    x_big = jax.random.normal(jax.random.PRNGKey(1), (1024, 1536), dtype=jnp.float32)
    out_big = jax.block_until_ready(neg(x_big))
    assert out_big.shape == x_big.shape and out_big.dtype == x_big.dtype
    assert jnp.array_equal(out_big, neg_ref(x_big)), "mismatch vs reference (large f32)"

    # Large bf16 input: exercises byte-sized tiling with native-dtype I/O.
    x_bf = jax.random.normal(jax.random.PRNGKey(2), (512, 2048), dtype=jnp.bfloat16)
    out_bf = jax.block_until_ready(neg(x_bf))
    assert out_bf.shape == x_bf.shape and out_bf.dtype == x_bf.dtype
    assert jnp.array_equal(out_bf, neg_ref(x_bf)), "mismatch vs reference (large bf16)"

    # Ragged shape: routed to the pure-JAX fallback (no pad/slice round trip).
    x_rag = jax.random.normal(jax.random.PRNGKey(3), (3, 5, 7), dtype=jnp.bfloat16)
    out_rag = jax.block_until_ready(neg(x_rag))
    assert out_rag.shape == x_rag.shape and out_rag.dtype == x_rag.dtype
    assert jnp.array_equal(out_rag, neg_ref(x_rag)), "mismatch vs reference (ragged)"

    print("KERNEL_OK")
</pallas_src>

<mosaic_0001>
module attributes {stable_mosaic.version = 11 : i64} {
  func.func @_neg_kernel(%arg0: i32, %arg1: memref<256x4096xf32, #tpu.memory_space<vmem>>, %arg2: memref<256x4096xf32, #tpu.memory_space<vmem>>) attributes {dimension_semantics = [#tpu.dimension_semantics<parallel>], iteration_bounds = array<i64: 2>, scalar_prefetch = 0 : i64, scratch_operands = 0 : i64, tpu.core_type = #tpu.core_type<tc>, window_params = [{transform_indices = @transform_0, window_bounds = array<i64: 256, 4096>}, {transform_indices = @transform_1, window_bounds = array<i64: 256, 4096>}]} {
    %c0 = arith.constant 0 : index
    %c0_0 = arith.constant 0 : index
    %0 = vector.load %arg1[%c0, %c0_0] : memref<256x4096xf32, #tpu.memory_space<vmem>>, vector<256x4096xf32>
    %cst = arith.constant 0.000000e+00 : f32
    %1 = vector.broadcast %cst : f32 to vector<256x4096xf32>
    %2 = arith.subf %1, %0 : vector<256x4096xf32>
    %c0_1 = arith.constant 0 : index
    %c0_2 = arith.constant 0 : index
    %3 = vector.load %arg2[%c0_1, %c0_2] : memref<256x4096xf32, #tpu.memory_space<vmem>>, vector<256x4096xf32>
    tpu.vector_store %arg2[%c0_1, %c0_2], %2 {strides = array<i32>} : memref<256x4096xf32, #tpu.memory_space<vmem>>, vector<256x4096xf32>,
    return
  }
  func.func @transform_0(%arg0: i32) -> (i32, i32) {
    %c0_i32 = arith.constant 0 : i32
    %c0_i32_0 = arith.constant 0 : i32
    return %arg0, %c0_i32 : i32, i32
  }
  func.func @transform_1(%arg0: i32) -> (i32, i32) {
    %c0_i32 = arith.constant 0 : i32
    %c0_i32_0 = arith.constant 0 : i32
    return %arg0, %c0_i32 : i32, i32
  }
}

</mosaic_0001>

<llo_original>
// kernel: tpu_custom_call.1
$region0: #{tpu_custom_call.1}
  #allocation0 [shape = 'u32[]', space=smem, size = 0x4, offset = 0x4, fixed_abs, tag = 'smem constant byte address 0x4 - core index']
  #allocation1 [shape = 'u32[144,128]{1,0:T(1,128)}', space=vmem, size = 0x12000, scoped, tag = 'internal scratch']
  %s0 = inlined_call_operand.hbm [shape: f32[384,4096], index: 0, kind: input, shape index: {}]
  %s1 = inlined_call_operand.hbm [shape: f32[384,4096], index: 1, kind: output, shape index: {}]
  %s2 = sld [smem:[#allocation0]]
  $region41: #{tpu_custom_call.1} parent=0
    _
  %s4 = ssub.s32 1, %s2
  %s5 = scalar_select 0, %s4, %s2
  $region1: #{tpu_custom_call.1} parent=0
    #allocation2 [shape = 'u8[8388608]{0}', space=vmem, size = 0x800000, scoped, tag = 'input window, operand 0']
    #allocation3 [shape = 's32[2]{0}', space=sflag, size = 0x8, scoped, tag = 'scoped memory for tpu_custom_call.1']
    #allocation4 [shape = 's32[2]{0}', space=sflag, size = 0x8, scoped, tag = 'scoped memory for tpu_custom_call.1']
    #allocation5 [shape = 'u8[8388608]{0}', space=vmem, size = 0x800000, scoped, tag = 'output window, operand 0']
    %6 = vsyncpa [#allocation3], 0
    %s7 = scalar_lea.sflag [#allocation3], 1
    %8 = vsyncpa %s7, 0
    %9 = vsyncpa [#allocation4], 0
    %s10 = scalar_lea.sflag [#allocation4], 1
    %11 = vsyncpa %s10, 0
    loop: start=0, step=1, limit=4
    $region2: #{tpu_custom_call.1} parent=1 // loop_pre_header
      _
    $region3: #{tpu_custom_call.1} parent=1 // loop_header
      %s13 = sphi 0, %s17
      %p14 = scmp.ge.s32.totalorder %s13, 4
      %s23 = sphi 0, %s25
      %s26 = sphi 0, %s23
      %s27 = sphi 0, %s26
      %s43 = sphi 0, %s27
      %s49 = sphi 0, %s51
      %s52 = sphi 0, %s49
      %s53 = sphi 0, %s52
      %s69 = sphi 0, %s53
    $region4: #{tpu_custom_call.1} parent=1 // loop_header_branch
      %16 = sbr.rel (%p14) target = $region8
    $region5: #{tpu_custom_call.1} parent=1 // loop_body
      %s18 = ssub.s32 %s13, 1
      %s19 = ssub.s32 %s13, 2
      %s20 = sadd.s32 %s13, 1
      %s21 = ssub.s32 %s13, %s20
      %p22 = scmp.eq.s32.totalorder %s21, 0
      %s24 = sadd.s32 %s23, 1
      %s25 = scalar_select %p22, %s23, %s24
      %p28 = pneg %p22
      %p29 = scmp.eq.s32.totalorder %s13, 1
      %p30 = por %p28, %p29
      %p31 = scmp.ne.s32.totalorder %s23, %s26
      %p32 = scmp.eq.s32.totalorder %s13, 0
      %p33 = por %p31, %p32
      %p34 = scmp.ne.s32.totalorder %s23, %s26
      %p35 = scmp.eq.s32.totalorder %s18, 1
      %p36 = por %p34, %p35
      %p37 = scmp.ne.s32.totalorder %s26, %s27
      %p38 = scmp.eq.s32.totalorder %s18, 0
      %p39 = por %p37, %p38
      %p40 = scmp.ne.s32.totalorder %s26, %s27
      %p41 = scmp.eq.s32.totalorder %s19, 1
      %p42 = por %p40, %p41
      %p44 = scmp.ne.s32.totalorder %s27, %s43
      %p45 = scmp.eq.s32.totalorder %s19, 0
      %p46 = por %p44, %p45
      %s47 = ssub.s32 %s13, %s20
      %p48 = scmp.eq.s32.totalorder %s47, 0
      %s50 = sadd.s32 %s49, 1
      %s51 = scalar_select %p48, %s49, %s50
      %p54 = pneg %p48
      %p55 = scmp.eq.s32.totalorder %s13, 1
      %p56 = por %p54, %p55
      %p57 = scmp.ne.s32.totalorder %s49, %s52
      %p58 = scmp.eq.s32.totalorder %s13, 0
      %p59 = por %p57, %p58
      %p60 = scmp.ne.s32.totalorder %s49, %s52
      %p61 = scmp.eq.s32.totalorder %s18, 1
      %p62 = por %p60, %p61
      %p63 = scmp.ne.s32.totalorder %s52, %s53
      %p64 = scmp.eq.s32.totalorder %s18, 0
      %p65 = por %p63, %p64
      %p66 = scmp.ne.s32.totalorder %s52, %s53
      %p67 = scmp.eq.s32.totalorder %s19, 1
      %p68 = por %p66, %p67
      %p70 = scmp.ne.s32.totalorder %s53, %s69
      %p71 = scmp.eq.s32.totalorder %s19, 0
      %p72 = por %p70, %p71
      %p73 = scmp.le.s32.totalorder 1, %s13
      %p74 = scmp.lt.s32.totalorder %s13, 3
      %p75 = pnand %p73, %p74
      %p76 = pneg %p75
      // Predicated region
      $region9: #{tpu_custom_call.1} parent=5 // pred_check
        _
      $region10: #{tpu_custom_call.1} parent=5 // pred_check_branch
        %78 = sbr.rel (%p75) target = $region12
      $region11: #{tpu_custom_call.1} parent=5 // pred_region
        %s79 = ssub.s32 %s13, 1
      $region12: #{tpu_custom_call.1} parent=5 // pred_fallthru
        _
      %p80 = scmp.lt.s32.totalorder %s13, 2
      // Predicated region
      $region13: #{tpu_custom_call.1} parent=5 // pred_check
        %p81 = pneg %p80
      $region14: #{tpu_custom_call.1} parent=5 // pred_check_branch
        %83 = sbr.rel (%p81) target = $region16
      $region15: #{tpu_custom_call.1} parent=5 // pred_region
        // Predicated region
        $region17: #{tpu_custom_call.1} parent=15 // pred_check
          %p84 = pneg %p33
        $region18: #{tpu_custom_call.1} parent=15 // pred_check_branch
          %86 = sbr.rel (%p84) target = $region20
        $region19: #{tpu_custom_call.1} parent=15 // pred_region
          %s87 = sand.u32 %s23, 1
          %s88 = scalar_lea.sflag [#allocation3], %s87
          %s89 = sand.u32 %s23, 1
          %s90 = smul.addr %s89, 8192
          %s91 = scalar_lea.vmem [#allocation2], %s90
          %s92 = smul.u32 32, %s13
          %s93 = ssub.s32 48, %s92
          %p94 = scmp.lt.s32.totalorder %s93, 32
          %s95 = scalar_select %p94, %s93, 32
          %s96 = smul.u32 128, %s95
          %s97 = smul.u32 %s96, 32
          %s99 = ssub.s32 131072, %s97
          %100 = vsyncadd %s88, %s99
          %p101 = scmp.ne.s32.totalorder 0, %s97
          %s102 = smul.addr %s92, 32
          %s103 = smul.addr %s102, 128
          %s104 = scalar_lea.hbm %s0, %s103
          %s105 = smul.u32 256, %s95
          %s106 = sshll.u32 %s91, 4
          %s107 = int_to_ptr.vmem [resolvable:$true] %s106
          %s108 = sshll.u32 %s105, 4
          %112 = dma.hbm_to_vmem [thread:$0]  (%p101), %s104, %s108, %s107, %s88, 4096, 4096, 256
        $region20: #{tpu_custom_call.1} parent=15 // pred_fallthru
          _
      $region16: #{tpu_custom_call.1} parent=5 // pred_fallthru
        _
      %p113 = scmp.le.s32.totalorder 1, %s13
      %p114 = scmp.lt.s32.totalorder %s13, 3
      %p115 = pnand %p113, %p114
      %p116 = pneg %p115
      // Predicated region
      $region21: #{tpu_custom_call.1} parent=5 // pred_check
        _
      $region22: #{tpu_custom_call.1} parent=5 // pred_check_branch
        %118 = sbr.rel (%p115) target = $region24
      $region23: #{tpu_custom_call.1} parent=5 // pred_region
        %s119 = ssub.s32 %s13, 1
        %s120 = sand.u32 %s26, 1
        %s121 = scalar_lea.sflag [#allocation3], %s120
        %s122 = sand.u32 %s26, 1
        %s123 = smul.addr %s122, 8192
        %s124 = scalar_lea.vmem [#allocation2], %s123
        // Predicated region
        $region25: #{tpu_custom_call.1} parent=23 // pred_check
          %p125 = pneg %p39
        $region26: #{tpu_custom_call.1} parent=23 // pred_check_branch
          %127 = sbr.rel (%p125) target = $region28
        $region27: #{tpu_custom_call.1} parent=23 // pred_region
          %128 = dma.done %s121, 131072
        $region28: #{tpu_custom_call.1} parent=23 // pred_fallthru
          _
        %s129 = sand.u32 %s26, 1
        %s130 = scalar_lea.sflag [#allocation3], %s129
        %s131 = sand.u32 %s26, 1
        %s132 = smul.addr %s131, 8192
        %s133 = scalar_lea.vmem [#allocation2], %s132
        %p134 = pneg %p39
        %p135 = pneg %p36
        %p136 = pneg %p65
        %p137 = pneg %p62
        %s138 = sand.u32 %s52, 1
        %s139 = scalar_lea.sflag [#allocation4], %s138
        %s140 = sand.u32 %s52, 1
        %s141 = smul.addr %s140, 8192
        %s142 = scalar_lea.vmem [#allocation5], %s141
        %s143 = smul.u32 32, %s18
        %s144 = ssub.s32 48, %s143
        %p145 = scmp.lt.s32.totalorder %s144, 32
        %s146 = scalar_select %p145, %s144, 32
        %s147 = smul.u32 128, %s146
        %s148 = smul.u32 %s147, 32
        %s149 = smul.u32 32, %s18
        %s150 = ssub.s32 48, %s149
        %p151 = scmp.lt.s32.totalorder %s150, 32
        %s152 = scalar_select %p151, %s150, 32
        %s153 = smul.u32 128, %s152
        %s154 = smul.u32 %s153, 32
        %v155 = vld [vmem:[%s124] sm:$0xff]
        %v156 = vld [vmem:[%s124 + $0x8] sm:$0xff]
        %v157 = vld [vmem:[%s124 + $0x10] sm:$0xff]
        %v158 = vld [vmem:[%s124 + $0x18] sm:$0xff]
        %v159 = vld [vmem:[%s124 + $0x20] sm:$0xff]
        %v160 = vld [vmem:[%s124 + $0x28] sm:$0xff]
        %v161 = vld [vmem:[%s124 + $0x30] sm:$0xff]
        %v162 = vld [vmem:[%s124 + $0x38] sm:$0xff]
        %v163 = vld [vmem:[%s124 + $0x40] sm:$0xff]
        %v164 = vld [vmem:[%s124 + $0x48] sm:$0xff]
        %v165 = vld [vmem:[%s124 + $0x50] sm:$0xff]
        %v166 = vld [vmem:[%s124 + $0x58] sm:$0xff]
        %v167 = vld [vmem:[%s124 + $0x60] sm:$0xff]
        %v168 = vld [vmem:[%s124 + $0x68] sm:$0xff]
        %v169 = vld [vmem:[%s124 + $0x70] sm:$0xff]
        %v170 = vld [vmem:[%s124 + $0x78] sm:$0xff]
        %v171 = vld [vmem:[%s124 + $0x80] sm:$0xff]
        %v172 = vld [vmem:[%s124 + $0x88] sm:$0xff]
        %v173 = vld [vmem:[%s124 + $0x90] sm:$0xff]
        %v174 = vld [vmem:[%s124 + $0x98] sm:$0xff]
        %v175 = vld [vmem:[%s124 + $0xa0] sm:$0xff]
        %v176 = vld [vmem:[%s124 + $0xa8] sm:$0xff]
        %v177 = vld [vmem:[%s124 + $0xb0] sm:$0xff]
        %v178 = vld [vmem:[%s124 + $0xb8] sm:$0xff]
        %v179 = vld [vmem:[%s124 + $0xc0] sm:$0xff]
        %v180 = vld [vmem:[%s124 + $0xc8] sm:$0xff]
        %v181 = vld [vmem:[%s124 + $0xd0] sm:$0xff]
        %v182 = vld [vmem:[%s124 + $0xd8] sm:$0xff]
        %v183 = vld [vmem:[%s124 + $0xe0] sm:$0xff]
        %v184 = vld [vmem:[%s124 + $0xe8] sm:$0xff]
        %v185 = vld [vmem:[%s124 + $0xf0] sm:$0xff]
        %v186 = vld [vmem:[%s124 + $0xf8] sm:$0xff]
        %v187 = vld [vmem:[%s124 + $0x100] sm:$0xff]
        %v188 = vld [vmem:[%s124 + $0x108] sm:$0xff]
        %v189 = vld [vmem:[%s124 + $0x110] sm:$0xff]
        %v190 = vld [vmem:[%s124 + $0x118] sm:$0xff]
        %v191 = vld [vmem:[%s124 + $0x120] sm:$0xff]
        %v192 = vld [vmem:[%s124 + $0x128] sm:$0xff]
        %v193 = vld [vmem:[%s124 + $0x130] sm:$0xff]
        %v194 = vld [vmem:[%s124 + $0x138] sm:$0xff]
        %v195 = vld [vmem:[%s124 + $0x140] sm:$0xff]
        %v196 = vld [vmem:[%s124 + $0x148] sm:$0xff]
        %v197 = vld [vmem:[%s124 + $0x150] sm:$0xff]
        %v198 = vld [vmem:[%s124 + $0x158] sm:$0xff]
        %v199 = vld [vmem:[%s124 + $0x160] sm:$0xff]
        %v200 = vld [vmem:[%s124 + $0x168] sm:$0xff]
        %v201 = vld [vmem:[%s124 + $0x170] sm:$0xff]
        %v202 = vld [vmem:[%s124 + $0x178] sm:$0xff]
        %v203 = vld [vmem:[%s124 + $0x180] sm:$0xff]
        %v204 = vld [vmem:[%s124 + $0x188] sm:$0xff]
        %v205 = vld [vmem:[%s124 + $0x190] sm:$0xff]
        %v206 = vld [vmem:[%s124 + $0x198] sm:$0xff]
        %v207 = vld [vmem:[%s124 + $0x1a0] sm:$0xff]
        %v208 = vld [vmem:[%s124 + $0x1a8] sm:$0xff]
        %v209 = vld [vmem:[%s124 + $0x1b0] sm:$0xff]
        %v210 = vld [vmem:[%s124 + $0x1b8] sm:$0xff]
        %v211 = vld [vmem:[%s124 + $0x1c0] sm:$0xff]
        %v212 = vld [vmem:[%s124 + $0x1c8] sm:$0xff]
        %v213 = vld [vmem:[%s124 + $0x1d0] sm:$0xff]
        %v214 = vld [vmem:[%s124 + $0x1d8] sm:$0xff]
        %v215 = vld [vmem:[%s124 + $0x1e0] sm:$0xff]
        %v216 = vld [vmem:[%s124 + $0x1e8] sm:$0xff]
        %v217 = vld [vmem:[%s124 + $0x1f0] sm:$0xff]
        %v218 = vld [vmem:[%s124 + $0x1f8] sm:$0xff]
        %v219 = vld [vmem:[%s124 + $0x200] sm:$0xff]
        %v220 = vld [vmem:[%s124 + $0x208] sm:$0xff]
        %v221 = vld [vmem:[%s124 + $0x210] sm:$0xff]
        %v222 = vld [vmem:[%s124 + $0x218] sm:$0xff]
        %v223 = vld [vmem:[%s124 + $0x220] sm:$0xff]
        %v224 = vld [vmem:[%s124 + $0x228] sm:$0xff]
        %v225 = vld [vmem:[%s124 + $0x230] sm:$0xff]
        %v226 = vld [vmem:[%s124 + $0x238] sm:$0xff]
        %v227 = vld [vmem:[%s124 + $0x240] sm:$0xff]
        %v228 = vld [vmem:[%s124 + $0x248] sm:$0xff]
        %v229 = vld [vmem:[%s124 + $0x250] sm:$0xff]
        %v230 = vld [vmem:[%s124 + $0x258] sm:$0xff]
        %v231 = vld [vmem:[%s124 + $0x260] sm:$0xff]
        %v232 = vld [vmem:[%s124 + $0x268] sm:$0xff]
        %v233 = vld [vmem:[%s124 + $0x270] sm:$0xff]
        %v234 = vld [vmem:[%s124 + $0x278] sm:$0xff]
        %v235 = vld [vmem:[%s124 + $0x280] sm:$0xff]
        %v236 = vld [vmem:[%s124 + $0x288] sm:$0xff]
        %v237 = vld [vmem:[%s124 + $0x290] sm:$0xff]
        %v238 = vld [vmem:[%s124 + $0x298] sm:$0xff]
        %v239 = vld [vmem:[%s124 + $0x2a0] sm:$0xff]
        %v240 = vld [vmem:[%s124 + $0x2a8] sm:$0xff]
        %v241 = vld [vmem:[%s124 + $0x2b0] sm:$0xff]
        %v242 = vld [vmem:[%s124 + $0x2b8] sm:$0xff]
        %v243 = vld [vmem:[%s124 + $0x2c0] sm:$0xff]
        %v244 = vld [vmem:[%s124 + $0x2c8] sm:$0xff]
        %v245 = vld [vmem:[%s124 + $0x2d0] sm:$0xff]
        %v246 = vld [vmem:[%s124 + $0x2d8] sm:$0xff]
        %v247 = vld [vmem:[%s124 + $0x2e0] sm:$0xff]
        %v248 = vld [vmem:[%s124 + $0x2e8] sm:$0xff]
        %v249 = vld [vmem:[%s124 + $0x2f0] sm:$0xff]
        %v250 = vld [vmem:[%s124 + $0x2f8] sm:$0xff]
        %v251 = vld [vmem:[%s124 + $0x300] sm:$0xff]
        %v252 = vld [vmem:[%s124 + $0x308] sm:$0xff]
        %v253 = vld [vmem:[%s124 + $0x310] sm:$0xff]
        %v254 = vld [vmem:[%s124 + $0x318] sm:$0xff]
        %v255 = vld [vmem:[%s124 + $0x320] sm:$0xff]
        %v256 = vld [vmem:[%s124 + $0x328] sm:$0xff]
        %v257 = vld [vmem:[%s124 + $0x330] sm:$0xff]
        %v258 = vld [vmem:[%s124 + $0x338] sm:$0xff]
        %v259 = vld [vmem:[%s124 + $0x340] sm:$0xff]
        %v260 = vld [vmem:[%s124 + $0x348] sm:$0xff]
        %v261 = vld [vmem:[%s124 + $0x350] sm:$0xff]
        %v262 = vld [vmem:[%s124 + $0x358] sm:$0xff]
        %v263 = vld [vmem:[%s124 + $0x360] sm:$0xff]
        %v264 = vld [vmem:[%s124 + $0x368] sm:$0xff]
        %v265 = vld [vmem:[%s124 + $0x370] sm:$0xff]
        %v266 = vld [vmem:[%s124 + $0x378] sm:$0xff]
        %v267 = vld [vmem:[%s124 + $0x380] sm:$0xff]
        %v268 = vld [vmem:[%s124 + $0x388] sm:$0xff]
        %v269 = vld [vmem:[%s124 + $0x390] sm:$0xff]
        %v270 = vld [vmem:[%s124 + $0x398] sm:$0xff]
        %v271 = vld [vmem:[%s124 + $0x3a0] sm:$0xff]
        %v272 = vld [vmem:[%s124 + $0x3a8] sm:$0xff]
        %v273 = vld [vmem:[%s124 + $0x3b0] sm:$0xff]
        %v274 = vld [vmem:[%s124 + $0x3b8] sm:$0xff]
        %v275 = vld [vmem:[%s124 + $0x3c0] sm:$0xff]
        %v276 = vld [vmem:[%s124 + $0x3c8] sm:$0xff]
        %v277 = vld [vmem:[%s124 + $0x3d0] sm:$0xff]
        %v278 = vld [vmem:[%s124 + $0x3d8] sm:$0xff]
        %v279 = vld [vmem:[%s124 + $0x3e0] sm:$0xff]
        %v280 = vld [vmem:[%s124 + $0x3e8] sm:$0xff]
        %v281 = vld [vmem:[%s124 + $0x3f0] sm:$0xff]
        %v282 = vld [vmem:[%s124 + $0x3f8] sm:$0xff]
        %v283 = vld [vmem:[%s124 + $0x400] sm:$0xff]
        %v284 = vld [vmem:[%s124 + $0x408] sm:$0xff]
        %v285 = vld [vmem:[%s124 + $0x410] sm:$0xff]
        %v286 = vld [vmem:[%s124 + $0x418] sm:$0xff]
        %v287 = vld [vmem:[%s124 + $0x420] sm:$0xff]
        %v288 = vld [vmem:[%s124 + $0x428] sm:$0xff]
        %v289 = vld [vmem:[%s124 + $0x430] sm:$0xff]
        %v290 = vld [vmem:[%s124 + $0x438] sm:$0xff]
        %v291 = vld [vmem:[%s124 + $0x440] sm:$0xff]
        %v292 = vld [vmem:[%s124 + $0x448] sm:$0xff]
        %v293 = vld [vmem:[%s124 + $0x450] sm:$0xff]
        %v294 = vld [vmem:[%s124 + $0x458] sm:$0xff]
        %v295 = vld [vmem:[%s124 + $0x460] sm:$0xff]
        %v296 = vld [vmem:[%s124 + $0x468] sm:$0xff]
        %v297 = vld [vmem:[%s124 + $0x470] sm:$0xff]
        %v298 = vld [vmem:[%s124 + $0x478] sm:$0xff]
        %v299 = vld [vmem:[%s124 + $0x480] sm:$0xff]
        %v300 = vld [vmem:[%s124 + $0x488] sm:$0xff]
        %v301 = vld [vmem:[%s124 + $0x490] sm:$0xff]
        %v302 = vld [vmem:[%s124 + $0x498] sm:$0xff]
        %v303 = vld [vmem:[%s124 + $0x4a0] sm:$0xff]
        %v304 = vld [vmem:[%s124 + $0x4a8] sm:$0xff]
        %v305 = vld [vmem:[%s124 + $0x4b0] sm:$0xff]
        %v306 = vld [vmem:[%s124 + $0x4b8] sm:$0xff]
        %v307 = vld [vmem:[%s124 + $0x4c0] sm:$0xff]
        %v308 = vld [vmem:[%s124 + $0x4c8] sm:$0xff]
        %v309 = vld [vmem:[%s124 + $0x4d0] sm:$0xff]
        %v310 = vld [vmem:[%s124 + $0x4d8] sm:$0xff]
        %v311 = vld [vmem:[%s124 + $0x4e0] sm:$0xff]
        %v312 = vld [vmem:[%s124 + $0x4e8] sm:$0xff]
        %v313 = vld [vmem:[%s124 + $0x4f0] sm:$0xff]
        %v314 = vld [vmem:[%s124 + $0x4f8] sm:$0xff]
        %v315 = vld [vmem:[%s124 + $0x500] sm:$0xff]
        %v316 = vld [vmem:[%s124 + $0x508] sm:$0xff]
        %v317 = vld [vmem:[%s124 + $0x510] sm:$0xff]
        %v318 = vld [vmem:[%s124 + $0x518] sm:$0xff]
        %v319 = vld [vmem:[%s124 + $0x520] sm:$0xff]
        %v320 = vld [vmem:[%s124 + $0x528] sm:$0xff]
        %v321 = vld [vmem:[%s124 + $0x530] sm:$0xff]
        %v322 = vld [vmem:[%s124 + $0x538] sm:$0xff]
        %v323 = vld [vmem:[%s124 + $0x540] sm:$0xff]
        %v324 = vld [vmem:[%s124 + $0x548] sm:$0xff]
        %v325 = vld [vmem:[%s124 + $0x550] sm:$0xff]
        %v326 = vld [vmem:[%s124 + $0x558] sm:$0xff]
        %v327 = vld [vmem:[%s124 + $0x560] sm:$0xff]
        %v328 = vld [vmem:[%s124 + $0x568] sm:$0xff]
        %v329 = vld [vmem:[%s124 + $0x570] sm:$0xff]
        %v330 = vld [vmem:[%s124 + $0x578] sm:$0xff]
        %v331 = vld [vmem:[%s124 + $0x580] sm:$0xff]
        %v332 = vld [vmem:[%s124 + $0x588] sm:$0xff]
        %v333 = vld [vmem:[%s124 + $0x590] sm:$0xff]
        %v334 = vld [vmem:[%s124 + $0x598] sm:$0xff]
        %v335 = vld [vmem:[%s124 + $0x5a0] sm:$0xff]
        %v336 = vld [vmem:[%s124 + $0x5a8] sm:$0xff]
        %v337 = vld [vmem:[%s124 + $0x5b0] sm:$0xff]
        %v338 = vld [vmem:[%s124 + $0x5b8] sm:$0xff]
        %v339 = vld [vmem:[%s124 + $0x5c0] sm:$0xff]
        %v340 = vld [vmem:[%s124 + $0x5c8] sm:$0xff]
        %v341 = vld [vmem:[%s124 + $0x5d0] sm:$0xff]
        %v342 = vld [vmem:[%s124 + $0x5d8] sm:$0xff]
        %v343 = vld [vmem:[%s124 + $0x5e0] sm:$0xff]
        %v344 = vld [vmem:[%s124 + $0x5e8] sm:$0xff]
        %v345 = vld [vmem:[%s124 + $0x5f0] sm:$0xff]
        %v346 = vld [vmem:[%s124 + $0x5f8] sm:$0xff]
        %v347 = vld [vmem:[%s124 + $0x600] sm:$0xff]
        %v348 = vld [vmem:[%s124 + $0x608] sm:$0xff]
        %v349 = vld [vmem:[%s124 + $0x610] sm:$0xff]
        %v350 = vld [vmem:[%s124 + $0x618] sm:$0xff]
        %v351 = vld [vmem:[%s124 + $0x620] sm:$0xff]
        %v352 = vld [vmem:[%s124 + $0x628] sm:$0xff]
        %v353 = vld [vmem:[%s124 + $0x630] sm:$0xff]
        %v354 = vld [vmem:[%s124 + $0x638] sm:$0xff]
        %v355 = vld [vmem:[%s124 + $0x640] sm:$0xff]
        %v356 = vld [vmem:[%s124 + $0x648] sm:$0xff]
        %v357 = vld [vmem:[%s124 + $0x650] sm:$0xff]
        %v358 = vld [vmem:[%s124 + $0x658] sm:$0xff]
        %v359 = vld [vmem:[%s124 + $0x660] sm:$0xff]
        %v360 = vld [vmem:[%s124 + $0x668] sm:$0xff]
        %v361 = vld [vmem:[%s124 + $0x670] sm:$0xff]
        %v362 = vld [vmem:[%s124 + $0x678] sm:$0xff]
        %v363 = vld [vmem:[%s124 + $0x680] sm:$0xff]
        %v364 = vld [vmem:[%s124 + $0x688] sm:$0xff]
        %v365 = vld [vmem:[%s124 + $0x690] sm:$0xff]
        %v366 = vld [vmem:[%s124 + $0x698] sm:$0xff]
        %v367 = vld [vmem:[%s124 + $0x6a0] sm:$0xff]
        %v368 = vld [vmem:[%s124 + $0x6a8] sm:$0xff]
        %v369 = vld [vmem:[%s124 + $0x6b0] sm:$0xff]
        %v370 = vld [vmem:[%s124 + $0x6b8] sm:$0xff]
        %v371 = vld [vmem:[%s124 + $0x6c0] sm:$0xff]
        %v372 = vld [vmem:[%s124 + $0x6c8] sm:$0xff]
        %v373 = vld [vmem:[%s124 + $0x6d0] sm:$0xff]
        %v374 = vld [vmem:[%s124 + $0x6d8] sm:$0xff]
        %v375 = vld [vmem:[%s124 + $0x6e0] sm:$0xff]
        %v376 = vld [vmem:[%s124 + $0x6e8] sm:$0xff]
        %v377 = vld [vmem:[%s124 + $0x6f0] sm:$0xff]
        %v378 = vld [vmem:[%s124 + $0x6f8] sm:$0xff]
        %v379 = vld [vmem:[%s124 + $0x700] sm:$0xff]
        %v380 = vld [vmem:[%s124 + $0x708] sm:$0xff]
        %v381 = vld [vmem:[%s124 + $0x710] sm:$0xff]
        %v382 = vld [vmem:[%s124 + $0x718] sm:$0xff]
        %v383 = vld [vmem:[%s124 + $0x720] sm:$0xff]
        %v384 = vld [vmem:[%s124 + $0x728] sm:$0xff]
        %v385 = vld [vmem:[%s124 + $0x730] sm:$0xff]
        %v386 = vld [vmem:[%s124 + $0x738] sm:$0xff]
        %v387 = vld [vmem:[%s124 + $0x740] sm:$0xff]
        %v388 = vld [vmem:[%s124 + $0x748] sm:$0xff]
        %v389 = vld [vmem:[%s124 + $0x750] sm:$0xff]
        %v390 = vld [vmem:[%s124 + $0x758] sm:$0xff]
        %v391 = vld [vmem:[%s124 + $0x760] sm:$0xff]
        %v392 = vld [vmem:[%s124 + $0x768] sm:$0xff]
        %v393 = vld [vmem:[%s124 + $0x770] sm:$0xff]
        %v394 = vld [vmem:[%s124 + $0x778] sm:$0xff]
        %v395 = vld [vmem:[%s124 + $0x780] sm:$0xff]
        %v396 = vld [vmem:[%s124 + $0x788] sm:$0xff]
        %v397 = vld [vmem:[%s124 + $0x790] sm:$0xff]
        %v398 = vld [vmem:[%s124 + $0x798] sm:$0xff]
        %v399 = vld [vmem:[%s124 + $0x7a0] sm:$0xff]
        %v400 = vld [vmem:[%s124 + $0x7a8] sm:$0xff]
        %v401 = vld [vmem:[%s124 + $0x7b0] sm:$0xff]
        %v402 = vld [vmem:[%s124 + $0x7b8] sm:$0xff]
        %v403 = vld [vmem:[%s124 + $0x7c0] sm:$0xff]
        %v404 = vld [vmem:[%s124 + $0x7c8] sm:$0xff]
        %v405 = vld [vmem:[%s124 + $0x7d0] sm:$0xff]
        %v406 = vld [vmem:[%s124 + $0x7d8] sm:$0xff]
        %v407 = vld [vmem:[%s124 + $0x7e0] sm:$0xff]
        %v408 = vld [vmem:[%s124 + $0x7e8] sm:$0xff]
        %v409 = vld [vmem:[%s124 + $0x7f0] sm:$0xff]
        %v410 = vld [vmem:[%s124 + $0x7f8] sm:$0xff]
        %v411 = vld [vmem:[%s124 + $0x800] sm:$0xff]
        %v412 = vld [vmem:[%s124 + $0x808] sm:$0xff]
        %v413 = vld [vmem:[%s124 + $0x810] sm:$0xff]
        %v414 = vld [vmem:[%s124 + $0x818] sm:$0xff]
        %v415 = vld [vmem:[%s124 + $0x820] sm:$0xff]
        %v416 = vld [vmem:[%s124 + $0x828] sm:$0xff]
        %v417 = vld [vmem:[%s124 + $0x830] sm:$0xff]
        %v418 = vld [vmem:[%s124 + $0x838] sm:$0xff]
        %v419 = vld [vmem:[%s124 + $0x840] sm:$0xff]
        %v420 = vld [vmem:[%s124 + $0x848] sm:$0xff]
        %v421 = vld [vmem:[%s124 + $0x850] sm:$0xff]
        %v422 = vld [vmem:[%s124 + $0x858] sm:$0xff]
        %v423 = vld [vmem:[%s124 + $0x860] sm:$0xff]
        %v424 = vld [vmem:[%s124 + $0x868] sm:$0xff]
        %v425 = vld [vmem:[%s124 + $0x870] sm:$0xff]
        %v426 = vld [vmem:[%s124 + $0x878] sm:$0xff]
        %v427 = vld [vmem:[%s124 + $0x880] sm:$0xff]
        %v428 = vld [vmem:[%s124 + $0x888] sm:$0xff]
        %v429 = vld [vmem:[%s124 + $0x890] sm:$0xff]
        %v430 = vld [vmem:[%s124 + $0x898] sm:$0xff]
        %v431 = vld [vmem:[%s124 + $0x8a0] sm:$0xff]
        %v432 = vld [vmem:[%s124 + $0x8a8] sm:$0xff]
        %v433 = vld [vmem:[%s124 + $0x8b0] sm:$0xff]
        %v434 = vld [vmem:[%s124 + $0x8b8] sm:$0xff]
        %v435 = vld [vmem:[%s124 + $0x8c0] sm:$0xff]
        %v436 = vld [vmem:[%s124 + $0x8c8] sm:$0xff]
        %v437 = vld [vmem:[%s124 + $0x8d0] sm:$0xff]
        %v438 = vld [vmem:[%s124 + $0x8d8] sm:$0xff]
        %v439 = vld [vmem:[%s124 + $0x8e0] sm:$0xff]
        %v440 = vld [vmem:[%s124 + $0x8e8] sm:$0xff]
        %v441 = vld [vmem:[%s124 + $0x8f0] sm:$0xff]
        %v442 = vld [vmem:[%s124 + $0x8f8] sm:$0xff]
        %v443 = vld [vmem:[%s124 + $0x900] sm:$0xff]
        %v444 = vld [vmem:[%s124 + $0x908] sm:$0xff]
        %v445 = vld [vmem:[%s124 + $0x910] sm:$0xff]
        %v446 = vld [vmem:[%s124 + $0x918] sm:$0xff]
        %v447 = vld [vmem:[%s124 + $0x920] sm:$0xff]
        %v448 = vld [vmem:[%s124 + $0x928] sm:$0xff]
        %v449 = vld [vmem:[%s124 + $0x930] sm:$0xff]
        %v450 = vld [vmem:[%s124 + $0x938] sm:$0xff]
        %v451 = vld [vmem:[%s124 + $0x940] sm:$0xff]
        %v452 = vld [vmem:[%s124 + $0x948] sm:$0xff]
        %v453 = vld [vmem:[%s124 + $0x950] sm:$0xff]
        %v454 = vld [vmem:[%s124 + $0x958] sm:$0xff]
        %v455 = vld [vmem:[%s124 + $0x960] sm:$0xff]
        %v456 = vld [vmem:[%s124 + $0x968] sm:$0xff]
        %v457 = vld [vmem:[%s124 + $0x970] sm:$0xff]
        %v458 = vld [vmem:[%s124 + $0x978] sm:$0xff]
        %v459 = vld [vmem:[%s124 + $0x980] sm:$0xff]
        %v460 = vld [vmem:[%s124 + $0x988] sm:$0xff]
        %v461 = vld [vmem:[%s124 + $0x990] sm:$0xff]
        %v462 = vld [vmem:[%s124 + $0x998] sm:$0xff]
        %v463 = vld [vmem:[%s124 + $0x9a0] sm:$0xff]
        %v464 = vld [vmem:[%s124 + $0x9a8] sm:$0xff]
        %v465 = vld [vmem:[%s124 + $0x9b0] sm:$0xff]
        %v466 = vld [vmem:[%s124 + $0x9b8] sm:$0xff]
        %v467 = vld [vmem:[%s124 + $0x9c0] sm:$0xff]
        %v468 = vld [vmem:[%s124 + $0x9c8] sm:$0xff]
        %v469 = vld [vmem:[%s124 + $0x9d0] sm:$0xff]
        %v470 = vld [vmem:[%s124 + $0x9d8] sm:$0xff]
        %v471 = vld [vmem:[%s124 + $0x9e0] sm:$0xff]
        %v472 = vld [vmem:[%s124 + $0x9e8] sm:$0xff]
        %v473 = vld [vmem:[%s124 + $0x9f0] sm:$0xff]
        %v474 = vld [vmem:[%s124 + $0x9f8] sm:$0xff]
        %v475 = vld [vmem:[%s124 + $0xa00] sm:$0xff]
        %v476 = vld [vmem:[%s124 + $0xa08] sm:$0xff]
        %v477 = vld [vmem:[%s124 + $0xa10] sm:$0xff]
        %v478 = vld [vmem:[%s124 + $0xa18] sm:$0xff]
        %v479 = vld [vmem:[%s124 + $0xa20] sm:$0xff]
        %v480 = vld [vmem:[%s124 + $0xa28] sm:$0xff]
        %v481 = vld [vmem:[%s124 + $0xa30] sm:$0xff]
        %v482 = vld [vmem:[%s124 + $0xa38] sm:$0xff]
        %v483 = vld [vmem:[%s124 + $0xa40] sm:$0xff]
        %v484 = vld [vmem:[%s124 + $0xa48] sm:$0xff]
        %v485 = vld [vmem:[%s124 + $0xa50] sm:$0xff]
        %v486 = vld [vmem:[%s124 + $0xa58] sm:$0xff]
        %v487 = vld [vmem:[%s124 + $0xa60] sm:$0xff]
        %v488 = vld [vmem:[%s124 + $0xa68] sm:$0xff]
        %v489 = vld [vmem:[%s124 + $0xa70] sm:$0xff]
        %v490 = vld [vmem:[%s124 + $0xa78] sm:$0xff]
        %v491 = vld [vmem:[%s124 + $0xa80] sm:$0xff]
        %v492 = vld [vmem:[%s124 + $0xa88] sm:$0xff]
        %v493 = vld [vmem:[%s124 + $0xa90] sm:$0xff]
        %v494 = vld [vmem:[%s124 + $0xa98] sm:$0xff]
        %v495 = vld [vmem:[%s124 + $0xaa0] sm:$0xff]
        %v496 = vld [vmem:[%s124 + $0xaa8] sm:$0xff]
        %v497 = vld [vmem:[%s124 + $0xab0] sm:$0xff]
        %v498 = vld [vmem:[%s124 + $0xab8] sm:$0xff]
        %v499 = vld [vmem:[%s124 + $0xac0] sm:$0xff]
        %v500 = vld [vmem:[%s124 + $0xac8] sm:$0xff]
        %v501 = vld [vmem:[%s124 + $0xad0] sm:$0xff]
        %v502 = vld [vmem:[%s124 + $0xad8] sm:$0xff]
        %v503 = vld [vmem:[%s124 + $0xae0] sm:$0xff]
        %v504 = vld [vmem:[%s124 + $0xae8] sm:$0xff]
        %v505 = vld [vmem:[%s124 + $0xaf0] sm:$0xff]
        %v506 = vld [vmem:[%s124 + $0xaf8] sm:$0xff]
        %v507 = vld [vmem:[%s124 + $0xb00] sm:$0xff]
        %v508 = vld [vmem:[%s124 + $0xb08] sm:$0xff]
        %v509 = vld [vmem:[%s124 + $0xb10] sm:$0xff]
        %v510 = vld [vmem:[%s124 + $0xb18] sm:$0xff]
        %v511 = vld [vmem:[%s124 + $0xb20] sm:$0xff]
        %v512 = vld [vmem:[%s124 + $0xb28] sm:$0xff]
        %v513 = vld [vmem:[%s124 + $0xb30] sm:$0xff]
        %v514 = vld [vmem:[%s124 + $0xb38] sm:$0xff]
        %v515 = vld [vmem:[%s124 + $0xb40] sm:$0xff]
        %v516 = vld [vmem:[%s124 + $0xb48] sm:$0xff]
        %v517 = vld [vmem:[%s124 + $0xb50] sm:$0xff]
        %v518 = vld [vmem:[%s124 + $0xb58] sm:$0xff]
        %v519 = vld [vmem:[%s124 + $0xb60] sm:$0xff]
        %v520 = vld [vmem:[%s124 + $0xb68] sm:$0xff]
        %v521 = vld [vmem:[%s124 + $0xb70] sm:$0xff]
        %v522 = vld [vmem:[%s124 + $0xb78] sm:$0xff]
        %v523 = vld [vmem:[%s124 + $0xb80] sm:$0xff]
        %v524 = vld [vmem:[%s124 + $0xb88] sm:$0xff]
        %v525 = vld [vmem:[%s124 + $0xb90] sm:$0xff]
        %v526 = vld [vmem:[%s124 + $0xb98] sm:$0xff]
        %v527 = vld [vmem:[%s124 + $0xba0] sm:$0xff]
        %v528 = vld [vmem:[%s124 + $0xba8] sm:$0xff]
        %v529 = vld [vmem:[%s124 + $0xbb0] sm:$0xff]
        %v530 = vld [vmem:[%s124 + $0xbb8] sm:$0xff]
        %v531 = vld [vmem:[%s124 + $0xbc0] sm:$0xff]
        %v532 = vld [vmem:[%s124 + $0xbc8] sm:$0xff]
        %v533 = vld [vmem:[%s124 + $0xbd0] sm:$0xff]
        %v534 = vld [vmem:[%s124 + $0xbd8] sm:$0xff]
        %v535 = vld [vmem:[%s124 + $0xbe0] sm:$0xff]
        %v536 = vld [vmem:[%s124 + $0xbe8] sm:$0xff]
        %v537 = vld [vmem:[%s124 + $0xbf0] sm:$0xff]
        %v538 = vld [vmem:[%s124 + $0xbf8] sm:$0xff]
        %v539 = vld [vmem:[%s124 + $0xc00] sm:$0xff]
        %v540 = vld [vmem:[%s124 + $0xc08] sm:$0xff]
        %v541 = vld [vmem:[%s124 + $0xc10] sm:$0xff]
        %v542 = vld [vmem:[%s124 + $0xc18] sm:$0xff]
        %v543 = vld [vmem:[%s124 + $0xc20] sm:$0xff]
        %v544 = vld [vmem:[%s124 + $0xc28] sm:$0xff]
        %v545 = vld [vmem:[%s124 + $0xc30] sm:$0xff]
        %v546 = vld [vmem:[%s124 + $0xc38] sm:$0xff]
        %v547 = vld [vmem:[%s124 + $0xc40] sm:$0xff]
        %v548 = vld [vmem:[%s124 + $0xc48] sm:$0xff]
        %v549 = vld [vmem:[%s124 + $0xc50] sm:$0xff]
        %v550 = vld [vmem:[%s124 + $0xc58] sm:$0xff]
        %v551 = vld [vmem:[%s124 + $0xc60] sm:$0xff]
        %v552 = vld [vmem:[%s124 + $0xc68] sm:$0xff]
        %v553 = vld [vmem:[%s124 + $0xc70] sm:$0xff]
        %v554 = vld [vmem:[%s124 + $0xc78] sm:$0xff]
        %v555 = vld [vmem:[%s124 + $0xc80] sm:$0xff]
        %v556 = vld [vmem:[%s124 + $0xc88] sm:$0xff]
        %v557 = vld [vmem:[%s124 + $0xc90] sm:$0xff]
        %v558 = vld [vmem:[%s124 + $0xc98] sm:$0xff]
        %v559 = vld [vmem:[%s124 + $0xca0] sm:$0xff]
        %v560 = vld [vmem:[%s124 + $0xca8] sm:$0xff]
        %v561 = vld [vmem:[%s124 + $0xcb0] sm:$0xff]
        %v562 = vld [vmem:[%s124 + $0xcb8] sm:$0xff]
        %v563 = vld [vmem:[%s124 + $0xcc0] sm:$0xff]
        %v564 = vld [vmem:[%s124 + $0xcc8] sm:$0xff]
        %v565 = vld [vmem:[%s124 + $0xcd0] sm:$0xff]
        %v566 = vld [vmem:[%s124 + $0xcd8] sm:$0xff]
        %v567 = vld [vmem:[%s124 + $0xce0] sm:$0xff]
        %v568 = vld [vmem:[%s124 + $0xce8] sm:$0xff]
        %v569 = vld [vmem:[%s124 + $0xcf0] sm:$0xff]
        %v570 = vld [vmem:[%s124 + $0xcf8] sm:$0xff]
        %v571 = vld [vmem:[%s124 + $0xd00] sm:$0xff]
        %v572 = vld [vmem:[%s124 + $0xd08] sm:$0xff]
        %v573 = vld [vmem:[%s124 + $0xd10] sm:$0xff]
        %v574 = vld [vmem:[%s124 + $0xd18] sm:$0xff]
        %v575 = vld [vmem:[%s124 + $0xd20] sm:$0xff]
        %v576 = vld [vmem:[%s124 + $0xd28] sm:$0xff]
        %v577 = vld [vmem:[%s124 + $0xd30] sm:$0xff]
        %v578 = vld [vmem:[%s124 + $0xd38] sm:$0xff]
        %v579 = vld [vmem:[%s124 + $0xd40] sm:$0xff]
        %v580 = vld [vmem:[%s124 + $0xd48] sm:$0xff]
        %v581 = vld [vmem:[%s124 + $0xd50] sm:$0xff]
        %v582 = vld [vmem:[%s124 + $0xd58] sm:$0xff]
        %v583 = vld [vmem:[%s124 + $0xd60] sm:$0xff]
        %v584 = vld [vmem:[%s124 + $0xd68] sm:$0xff]
        %v585 = vld [vmem:[%s124 + $0xd70] sm:$0xff]
        %v586 = vld [vmem:[%s124 + $0xd78] sm:$0xff]
        %v587 = vld [vmem:[%s124 + $0xd80] sm:$0xff]
        %v588 = vld [vmem:[%s124 + $0xd88] sm:$0xff]
        %v589 = vld [vmem:[%s124 + $0xd90] sm:$0xff]
        %v590 = vld [vmem:[%s124 + $0xd98] sm:$0xff]
        %v591 = vld [vmem:[%s124 + $0xda0] sm:$0xff]
        %v592 = vld [vmem:[%s124 + $0xda8] sm:$0xff]
        %v593 = vld [vmem:[%s124 + $0xdb0] sm:$0xff]
        %v594 = vld [vmem:[%s124 + $0xdb8] sm:$0xff]
        %v595 = vld [vmem:[%s124 + $0xdc0] sm:$0xff]
        %v596 = vld [vmem:[%s124 + $0xdc8] sm:$0xff]
        %v597 = vld [vmem:[%s124 + $0xdd0] sm:$0xff]
        %v598 = vld [vmem:[%s124 + $0xdd8] sm:$0xff]
        %v599 = vld [vmem:[%s124 + $0xde0] sm:$0xff]
        %v600 = vld [vmem:[%s124 + $0xde8] sm:$0xff]
        %v601 = vld [vmem:[%s124 + $0xdf0] sm:$0xff]
        %v602 = vld [vmem:[%s124 + $0xdf8] sm:$0xff]
        %v603 = vld [vmem:[%s124 + $0xe00] sm:$0xff]
        %v604 = vld [vmem:[%s124 + $0xe08] sm:$0xff]
        %v605 = vld [vmem:[%s124 + $0xe10] sm:$0xff]
        %v606 = vld [vmem:[%s124 + $0xe18] sm:$0xff]
        %v607 = vld [vmem:[%s124 + $0xe20] sm:$0xff]
        %v608 = vld [vmem:[%s124 + $0xe28] sm:$0xff]
        %v609 = vld [vmem:[%s124 + $0xe30] sm:$0xff]
        %v610 = vld [vmem:[%s124 + $0xe38] sm:$0xff]
        %v611 = vld [vmem:[%s124 + $0xe40] sm:$0xff]
        %v612 = vld [vmem:[%s124 + $0xe48] sm:$0xff]
        %v613 = vld [vmem:[%s124 + $0xe50] sm:$0xff]
        %v614 = vld [vmem:[%s124 + $0xe58] sm:$0xff]
        %v615 = vld [vmem:[%s124 + $0xe60] sm:$0xff]
        %v616 = vld [vmem:[%s124 + $0xe68] sm:$0xff]
        %v617 = vld [vmem:[%s124 + $0xe70] sm:$0xff]
        %v618 = vld [vmem:[%s124 + $0xe78] sm:$0xff]
        %v619 = vld [vmem:[%s124 + $0xe80] sm:$0xff]
        %v620 = vld [vmem:[%s124 + $0xe88] sm:$0xff]
        %v621 = vld [vmem:[%s124 + $0xe90] sm:$0xff]
        %v622 = vld [vmem:[%s124 + $0xe98] sm:$0xff]
        %v623 = vld [vmem:[%s124 + $0xea0] sm:$0xff]
        %v624 = vld [vmem:[%s124 + $0xea8] sm:$0xff]
        %v625 = vld [vmem:[%s124 + $0xeb0] sm:$0xff]
        %v626 = vld [vmem:[%s124 + $0xeb8] sm:$0xff]
        %v627 = vld [vmem:[%s124 + $0xec0] sm:$0xff]
        %v628 = vld [vmem:[%s124 + $0xec8] sm:$0xff]
        %v629 = vld [vmem:[%s124 + $0xed0] sm:$0xff]
        %v630 = vld [vmem:[%s124 + $0xed8] sm:$0xff]
        %v631 = vld [vmem:[%s124 + $0xee0] sm:$0xff]
        %v632 = vld [vmem:[%s124 + $0xee8] sm:$0xff]
        %v633 = vld [vmem:[%s124 + $0xef0] sm:$0xff]
        %v634 = vld [vmem:[%s124 + $0xef8] sm:$0xff]
        %v635 = vld [vmem:[%s124 + $0xf00] sm:$0xff]
        %v636 = vld [vmem:[%s124 + $0xf08] sm:$0xff]
        %v637 = vld [vmem:[%s124 + $0xf10] sm:$0xff]
        %v638 = vld [vmem:[%s124 + $0xf18] sm:$0xff]
        %v639 = vld [vmem:[%s124 + $0xf20] sm:$0xff]
        %v640 = vld [vmem:[%s124 + $0xf28] sm:$0xff]
        %v641 = vld [vmem:[%s124 + $0xf30] sm:$0xff]
        %v642 = vld [vmem:[%s124 + $0xf38] sm:$0xff]
        %v643 = vld [vmem:[%s124 + $0xf40] sm:$0xff]
        %v644 = vld [vmem:[%s124 + $0xf48] sm:$0xff]
        %v645 = vld [vmem:[%s124 + $0xf50] sm:$0xff]
        %v646 = vld [vmem:[%s124 + $0xf58] sm:$0xff]
        %v647 = vld [vmem:[%s124 + $0xf60] sm:$0xff]
        %v648 = vld [vmem:[%s124 + $0xf68] sm:$0xff]
        %v649 = vld [vmem:[%s124 + $0xf70] sm:$0xff]
        %v650 = vld [vmem:[%s124 + $0xf78] sm:$0xff]
        %v651 = vld [vmem:[%s124 + $0xf80] sm:$0xff]
        %v652 = vld [vmem:[%s124 + $0xf88] sm:$0xff]
        %v653 = vld [vmem:[%s124 + $0xf90] sm:$0xff]
        %v654 = vld [vmem:[%s124 + $0xf98] sm:$0xff]
        %v655 = vld [vmem:[%s124 + $0xfa0] sm:$0xff]
        %v656 = vld [vmem:[%s124 + $0xfa8] sm:$0xff]
        %v657 = vld [vmem:[%s124 + $0xfb0] sm:$0xff]
        %v658 = vld [vmem:[%s124 + $0xfb8] sm:$0xff]
        %v659 = vld [vmem:[%s124 + $0xfc0] sm:$0xff]
        %v660 = vld [vmem:[%s124 + $0xfc8] sm:$0xff]
        %v661 = vld [vmem:[%s124 + $0xfd0] sm:$0xff]
        %v662 = vld [vmem:[%s124 + $0xfd8] sm:$0xff]
        %v663 = vld [vmem:[%s124 + $0xfe0] sm:$0xff]
        %v664 = vld [vmem:[%s124 + $0xfe8] sm:$0xff]
        %v665 = vld [vmem:[%s124 + $0xff0] sm:$0xff]
        %v666 = vld [vmem:[%s124 + $0xff8] sm:$0xff]
        %v667 = vld [vmem:[%s124 + $0x1000] sm:$0xff]
        %v668 = vld [vmem:[%s124 + $0x1008] sm:$0xff]
        %v669 = vld [vmem:[%s124 + $0x1010] sm:$0xff]
        %v670 = vld [vmem:[%s124 + $0x1018] sm:$0xff]
        %v671 = vld [vmem:[%s124 + $0x1020] sm:$0xff]
        %v672 = vld [vmem:[%s124 + $0x1028] sm:$0xff]
        %v673 = vld [vmem:[%s124 + $0x1030] sm:$0xff]
        %v674 = vld [vmem:[%s124 + $0x1038] sm:$0xff]
        %v675 = vld [vmem:[%s124 + $0x1040] sm:$0xff]
        %v676 = vld [vmem:[%s124 + $0x1048] sm:$0xff]
        %v677 = vld [vmem:[%s124 + $0x1050] sm:$0xff]
        %v678 = vld [vmem:[%s124 + $0x1058] sm:$0xff]
        %v679 = vld [vmem:[%s124 + $0x1060] sm:$0xff]
        %v680 = vld [vmem:[%s124 + $0x1068] sm:$0xff]
        %v681 = vld [vmem:[%s124 + $0x1070] sm:$0xff]
        %v682 = vld [vmem:[%s124 + $0x1078] sm:$0xff]
        %v683 = vld [vmem:[%s124 + $0x1080] sm:$0xff]
        %v684 = vld [vmem:[%s124 + $0x1088] sm:$0xff]
        %v685 = vld [vmem:[%s124 + $0x1090] sm:$0xff]
        %v686 = vld [vmem:[%s124 + $0x1098] sm:$0xff]
        %v687 = vld [vmem:[%s124 + $0x10a0] sm:$0xff]
        %v688 = vld [vmem:[%s124 + $0x10a8] sm:$0xff]
        %v689 = vld [vmem:[%s124 + $0x10b0] sm:$0xff]
        %v690 = vld [vmem:[%s124 + $0x10b8] sm:$0xff]
        %v691 = vld [vmem:[%s124 + $0x10c0] sm:$0xff]
        %v692 = vld [vmem:[%s124 + $0x10c8] sm:$0xff]
        %v693 = vld [vmem:[%s124 + $0x10d0] sm:$0xff]
        %v694 = vld [vmem:[%s124 + $0x10d8] sm:$0xff]
        %v695 = vld [vmem:[%s124 + $0x10e0] sm:$0xff]
        %v696 = vld [vmem:[%s124 + $0x10e8] sm:$0xff]
        %v697 = vld [vmem:[%s124 + $0x10f0] sm:$0xff]
        %v698 = vld [vmem:[%s124 + $0x10f8] sm:$0xff]
        %v699 = vld [vmem:[%s124 + $0x1100] sm:$0xff]
        %v700 = vld [vmem:[%s124 + $0x1108] sm:$0xff]
        %v701 = vld [vmem:[%s124 + $0x1110] sm:$0xff]
        %v702 = vld [vmem:[%s124 + $0x1118] sm:$0xff]
        %v703 = vld [vmem:[%s124 + $0x1120] sm:$0xff]
        %v704 = vld [vmem:[%s124 + $0x1128] sm:$0xff]
        %v705 = vld [vmem:[%s124 + $0x1130] sm:$0xff]
        %v706 = vld [vmem:[%s124 + $0x1138] sm:$0xff]
        %v707 = vld [vmem:[%s124 + $0x1140] sm:$0xff]
        %v708 = vld [vmem:[%s124 + $0x1148] sm:$0xff]
        %v709 = vld [vmem:[%s124 + $0x1150] sm:$0xff]
        %v710 = vld [vmem:[%s124 + $0x1158] sm:$0xff]
        %v711 = vld [vmem:[%s124 + $0x1160] sm:$0xff]
        %v712 = vld [vmem:[%s124 + $0x1168] sm:$0xff]
        %v713 = vld [vmem:[%s124 + $0x1170] sm:$0xff]
        %v714 = vld [vmem:[%s124 + $0x1178] sm:$0xff]
        %v715 = vld [vmem:[%s124 + $0x1180] sm:$0xff]
        %v716 = vld [vmem:[%s124 + $0x1188] sm:$0xff]
        %v717 = vld [vmem:[%s124 + $0x1190] sm:$0xff]
        %v718 = vld [vmem:[%s124 + $0x1198] sm:$0xff]
        %v719 = vld [vmem:[%s124 + $0x11a0] sm:$0xff]
        %v720 = vld [vmem:[%s124 + $0x11a8] sm:$0xff]
        %v721 = vld [vmem:[%s124 + $0x11b0] sm:$0xff]
        %v722 = vld [vmem:[%s124 + $0x11b8] sm:$0xff]
        %v723 = vld [vmem:[%s124 + $0x11c0] sm:$0xff]
        %v724 = vld [vmem:[%s124 + $0x11c8] sm:$0xff]
        %v725 = vld [vmem:[%s124 + $0x11d0] sm:$0xff]
        %v726 = vld [vmem:[%s124 + $0x11d8] sm:$0xff]
        %v727 = vld [vmem:[%s124 + $0x11e0] sm:$0xff]
        %v728 = vld [vmem:[%s124 + $0x11e8] sm:$0xff]
        %v729 = vld [vmem:[%s124 + $0x11f0] sm:$0xff]
        %v730 = vld [vmem:[%s124 + $0x11f8] sm:$0xff]
        %v731 = vld [vmem:[%s124 + $0x1200] sm:$0xff]
        %v732 = vld [vmem:[%s124 + $0x1208] sm:$0xff]
        %v733 = vld [vmem:[%s124 + $0x1210] sm:$0xff]
        %v734 = vld [vmem:[%s124 + $0x1218] sm:$0xff]
        %v735 = vld [vmem:[%s124 + $0x1220] sm:$0xff]
        %v736 = vld [vmem:[%s124 + $0x1228] sm:$0xff]
        %v737 = vld [vmem:[%s124 + $0x1230] sm:$0xff]
        %v738 = vld [vmem:[%s124 + $0x1238] sm:$0xff]
        %v739 = vld [vmem:[%s124 + $0x1240] sm:$0xff]
        %v740 = vld [vmem:[%s124 + $0x1248] sm:$0xff]
        %v741 = vld [vmem:[%s124 + $0x1250] sm:$0xff]
        %v742 = vld [vmem:[%s124 + $0x1258] sm:$0xff]
        %v743 = vld [vmem:[%s124 + $0x1260] sm:$0xff]
        %v744 = vld [vmem:[%s124 + $0x1268] sm:$0xff]
        %v745 = vld [vmem:[%s124 + $0x1270] sm:$0xff]
        %v746 = vld [vmem:[%s124 + $0x1278] sm:$0xff]
        %v747 = vld [vmem:[%s124 + $0x1280] sm:$0xff]
        %v748 = vld [vmem:[%s124 + $0x1288] sm:$0xff]
        %v749 = vld [vmem:[%s124 + $0x1290] sm:$0xff]
        %v750 = vld [vmem:[%s124 + $0x1298] sm:$0xff]
        %v751 = vld [vmem:[%s124 + $0x12a0] sm:$0xff]
        %v752 = vld [vmem:[%s124 + $0x12a8] sm:$0xff]
        %v753 = vld [vmem:[%s124 + $0x12b0] sm:$0xff]
        %v754 = vld [vmem:[%s124 + $0x12b8] sm:$0xff]
        %v755 = vld [vmem:[%s124 + $0x12c0] sm:$0xff]
        %v756 = vld [vmem:[%s124 + $0x12c8] sm:$0xff]
        %v757 = vld [vmem:[%s124 + $0x12d0] sm:$0xff]
        %v758 = vld [vmem:[%s124 + $0x12d8] sm:$0xff]
        %v759 = vld [vmem:[%s124 + $0x12e0] sm:$0xff]
        %v760 = vld [vmem:[%s124 + $0x12e8] sm:$0xff]
        %v761 = vld [vmem:[%s124 + $0x12f0] sm:$0xff]
        %v762 = vld [vmem:[%s124 + $0x12f8] sm:$0xff]
        %v763 = vld [vmem:[%s124 + $0x1300] sm:$0xff]
        %v764 = vld [vmem:[%s124 + $0x1308] sm:$0xff]
        %v765 = vld [vmem:[%s124 + $0x1310] sm:$0xff]
        %v766 = vld [vmem:[%s124 + $0x1318] sm:$0xff]
        %v767 = vld [vmem:[%s124 + $0x1320] sm:$0xff]
        %v768 = vld [vmem:[%s124 + $0x1328] sm:$0xff]
        %v769 = vld [vmem:[%s124 + $0x1330] sm:$0xff]
        %v770 = vld [vmem:[%s124 + $0x1338] sm:$0xff]
        %v771 = vld [vmem:[%s124 + $0x1340] sm:$0xff]
        %v772 = vld [vmem:[%s124 + $0x1348] sm:$0xff]
        %v773 = vld [vmem:[%s124 + $0x1350] sm:$0xff]
        %v774 = vld [vmem:[%s124 + $0x1358] sm:$0xff]
        %v775 = vld [vmem:[%s124 + $0x1360] sm:$0xff]
        %v776 = vld [vmem:[%s124 + $0x1368] sm:$0xff]
        %v777 = vld [vmem:[%s124 + $0x1370] sm:$0xff]
        %v778 = vld [vmem:[%s124 + $0x1378] sm:$0xff]
        %v779 = vld [vmem:[%s124 + $0x1380] sm:$0xff]
        %v780 = vld [vmem:[%s124 + $0x1388] sm:$0xff]
        %v781 = vld [vmem:[%s124 + $0x1390] sm:$0xff]
        %v782 = vld [vmem:[%s124 + $0x1398] sm:$0xff]
        %v783 = vld [vmem:[%s124 + $0x13a0] sm:$0xff]
        %v784 = vld [vmem:[%s124 + $0x13a8] sm:$0xff]
        %v785 = vld [vmem:[%s124 + $0x13b0] sm:$0xff]
        %v786 = vld [vmem:[%s124 + $0x13b8] sm:$0xff]
        %v787 = vld [vmem:[%s124 + $0x13c0] sm:$0xff]
        %v788 = vld [vmem:[%s124 + $0x13c8] sm:$0xff]
        %v789 = vld [vmem:[%s124 + $0x13d0] sm:$0xff]
        %v790 = vld [vmem:[%s124 + $0x13d8] sm:$0xff]
        %v791 = vld [vmem:[%s124 + $0x13e0] sm:$0xff]
        %v792 = vld [vmem:[%s124 + $0x13e8] sm:$0xff]
        %v793 = vld [vmem:[%s124 + $0x13f0] sm:$0xff]
        %v794 = vld [vmem:[%s124 + $0x13f8] sm:$0xff]
        %v795 = vld [vmem:[%s124 + $0x1400] sm:$0xff]
        %v796 = vld [vmem:[%s124 + $0x1408] sm:$0xff]
        %v797 = vld [vmem:[%s124 + $0x1410] sm:$0xff]
        %v798 = vld [vmem:[%s124 + $0x1418] sm:$0xff]
        %v799 = vld [vmem:[%s124 + $0x1420] sm:$0xff]
        %v800 = vld [vmem:[%s124 + $0x1428] sm:$0xff]
        %v801 = vld [vmem:[%s124 + $0x1430] sm:$0xff]
        %v802 = vld [vmem:[%s124 + $0x1438] sm:$0xff]
        %v803 = vld [vmem:[%s124 + $0x1440] sm:$0xff]
        %v804 = vld [vmem:[%s124 + $0x1448] sm:$0xff]
        %v805 = vld [vmem:[%s124 + $0x1450] sm:$0xff]
        %v806 = vld [vmem:[%s124 + $0x1458] sm:$0xff]
        %v807 = vld [vmem:[%s124 + $0x1460] sm:$0xff]
        %v808 = vld [vmem:[%s124 + $0x1468] sm:$0xff]
        %v809 = vld [vmem:[%s124 + $0x1470] sm:$0xff]
        %v810 = vld [vmem:[%s124 + $0x1478] sm:$0xff]
        %v811 = vld [vmem:[%s124 + $0x1480] sm:$0xff]
        %v812 = vld [vmem:[%s124 + $0x1488] sm:$0xff]
        %v813 = vld [vmem:[%s124 + $0x1490] sm:$0xff]
        %v814 = vld [vmem:[%s124 + $0x1498] sm:$0xff]
        %v815 = vld [vmem:[%s124 + $0x14a0] sm:$0xff]
        %v816 = vld [vmem:[%s124 + $0x14a8] sm:$0xff]
        %v817 = vld [vmem:[%s124 + $0x14b0] sm:$0xff]
        %v818 = vld [vmem:[%s124 + $0x14b8] sm:$0xff]
        %v819 = vld [vmem:[%s124 + $0x14c0] sm:$0xff]
        %v820 = vld [vmem:[%s124 + $0x14c8] sm:$0xff]
        %v821 = vld [vmem:[%s124 + $0x14d0] sm:$0xff]
        %v822 = vld [vmem:[%s124 + $0x14d8] sm:$0xff]
        %v823 = vld [vmem:[%s124 + $0x14e0] sm:$0xff]
        %v824 = vld [vmem:[%s124 + $0x14e8] sm:$0xff]
        %v825 = vld [vmem:[%s124 + $0x14f0] sm:$0xff]
        %v826 = vld [vmem:[%s124 + $0x14f8] sm:$0xff]
        %v827 = vld [vmem:[%s124 + $0x1500] sm:$0xff]
        %v828 = vld [vmem:[%s124 + $0x1508] sm:$0xff]
        %v829 = vld [vmem:[%s124 + $0x1510] sm:$0xff]
        %v830 = vld [vmem:[%s124 + $0x1518] sm:$0xff]
        %v831 = vld [vmem:[%s124 + $0x1520] sm:$0xff]
        %v832 = vld [vmem:[%s124 + $0x1528] sm:$0xff]
        %v833 = vld [vmem:[%s124 + $0x1530] sm:$0xff]
        %v834 = vld [vmem:[%s124 + $0x1538] sm:$0xff]
        %v835 = vld [vmem:[%s124 + $0x1540] sm:$0xff]
        %v836 = vld [vmem:[%s124 + $0x1548] sm:$0xff]
        %v837 = vld [vmem:[%s124 + $0x1550] sm:$0xff]
        %v838 = vld [vmem:[%s124 + $0x1558] sm:$0xff]
        %v839 = vld [vmem:[%s124 + $0x1560] sm:$0xff]
        %v840 = vld [vmem:[%s124 + $0x1568] sm:$0xff]
        %v841 = vld [vmem:[%s124 + $0x1570] sm:$0xff]
        %v842 = vld [vmem:[%s124 + $0x1578] sm:$0xff]
        %v843 = vld [vmem:[%s124 + $0x1580] sm:$0xff]
        %v844 = vld [vmem:[%s124 + $0x1588] sm:$0xff]
        %v845 = vld [vmem:[%s124 + $0x1590] sm:$0xff]
        %v846 = vld [vmem:[%s124 + $0x1598] sm:$0xff]
        %v847 = vld [vmem:[%s124 + $0x15a0] sm:$0xff]
        %v848 = vld [vmem:[%s124 + $0x15a8] sm:$0xff]
        %v849 = vld [vmem:[%s124 + $0x15b0] sm:$0xff]
        %v850 = vld [vmem:[%s124 + $0x15b8] sm:$0xff]
        %v851 = vld [vmem:[%s124 + $0x15c0] sm:$0xff]
        %v852 = vld [vmem:[%s124 + $0x15c8] sm:$0xff]
        %v853 = vld [vmem:[%s124 + $0x15d0] sm:$0xff]
        %v854 = vld [vmem:[%s124 + $0x15d8] sm:$0xff]
        %v855 = vld [vmem:[%s124 + $0x15e0] sm:$0xff]
        %v856 = vld [vmem:[%s124 + $0x15e8] sm:$0xff]
        %v857 = vld [vmem:[%s124 + $0x15f0] sm:$0xff]
        %v858 = vld [vmem:[%s124 + $0x15f8] sm:$0xff]
        %v859 = vld [vmem:[%s124 + $0x1600] sm:$0xff]
        %v860 = vld [vmem:[%s124 + $0x1608] sm:$0xff]
        %v861 = vld [vmem:[%s124 + $0x1610] sm:$0xff]
        %v862 = vld [vmem:[%s124 + $0x1618] sm:$0xff]
        %v863 = vld [vmem:[%s124 + $0x1620] sm:$0xff]
        %v864 = vld [vmem:[%s124 + $0x1628] sm:$0xff]
        %v865 = vld [vmem:[%s124 + $0x1630] sm:$0xff]
        %v866 = vld [vmem:[%s124 + $0x1638] sm:$0xff]
        %v867 = vld [vmem:[%s124 + $0x1640] sm:$0xff]
        %v868 = vld [vmem:[%s124 + $0x1648] sm:$0xff]
        %v869 = vld [vmem:[%s124 + $0x1650] sm:$0xff]
        %v870 = vld [vmem:[%s124 + $0x1658] sm:$0xff]
        %v871 = vld [vmem:[%s124 + $0x1660] sm:$0xff]
        %v872 = vld [vmem:[%s124 + $0x1668] sm:$0xff]
        %v873 = vld [vmem:[%s124 + $0x1670] sm:$0xff]
        %v874 = vld [vmem:[%s124 + $0x1678] sm:$0xff]
        %v875 = vld [vmem:[%s124 + $0x1680] sm:$0xff]
        %v876 = vld [vmem:[%s124 + $0x1688] sm:$0xff]
        %v877 = vld [vmem:[%s124 + $0x1690] sm:$0xff]
        %v878 = vld [vmem:[%s124 + $0x1698] sm:$0xff]
        %v879 = vld [vmem:[%s124 + $0x16a0] sm:$0xff]
        %v880 = vld [vmem:[%s124 + $0x16a8] sm:$0xff]
        %v881 = vld [vmem:[%s124 + $0x16b0] sm:$0xff]
        %v882 = vld [vmem:[%s124 + $0x16b8] sm:$0xff]
        %v883 = vld [vmem:[%s124 + $0x16c0] sm:$0xff]
        %v884 = vld [vmem:[%s124 + $0x16c8] sm:$0xff]
        %v885 = vld [vmem:[%s124 + $0x16d0] sm:$0xff]
        %v886 = vld [vmem:[%s124 + $0x16d8] sm:$0xff]
        %v887 = vld [vmem:[%s124 + $0x16e0] sm:$0xff]
        %v888 = vld [vmem:[%s124 + $0x16e8] sm:$0xff]
        %v889 = vld [vmem:[%s124 + $0x16f0] sm:$0xff]
        %v890 = vld [vmem:[%s124 + $0x16f8] sm:$0xff]
        %v891 = vld [vmem:[%s124 + $0x1700] sm:$0xff]
        %v892 = vld [vmem:[%s124 + $0x1708] sm:$0xff]
        %v893 = vld [vmem:[%s124 + $0x1710] sm:$0xff]
        %v894 = vld [vmem:[%s124 + $0x1718] sm:$0xff]
        %v895 = vld [vmem:[%s124 + $0x1720] sm:$0xff]
        %v896 = vld [vmem:[%s124 + $0x1728] sm:$0xff]
        %v897 = vld [vmem:[%s124 + $0x1730] sm:$0xff]
        %v898 = vld [vmem:[%s124 + $0x1738] sm:$0xff]
        %v899 = vld [vmem:[%s124 + $0x1740] sm:$0xff]
        %v900 = vld [vmem:[%s124 + $0x1748] sm:$0xff]
        %v901 = vld [vmem:[%s124 + $0x1750] sm:$0xff]
        %v902 = vld [vmem:[%s124 + $0x1758] sm:$0xff]
        %v903 = vld [vmem:[%s124 + $0x1760] sm:$0xff]
        %v904 = vld [vmem:[%s124 + $0x1768] sm:$0xff]
        %v905 = vld [vmem:[%s124 + $0x1770] sm:$0xff]
        %v906 = vld [vmem:[%s124 + $0x1778] sm:$0xff]
        %v907 = vld [vmem:[%s124 + $0x1780] sm:$0xff]
        %v908 = vld [vmem:[%s124 + $0x1788] sm:$0xff]
        %v909 = vld [vmem:[%s124 + $0x1790] sm:$0xff]
        %v910 = vld [vmem:[%s124 + $0x1798] sm:$0xff]
        %v911 = vld [vmem:[%s124 + $0x17a0] sm:$0xff]
        %v912 = vld [vmem:[%s124 + $0x17a8] sm:$0xff]
        %v913 = vld [vmem:[%s124 + $0x17b0] sm:$0xff]
        %v914 = vld [vmem:[%s124 + $0x17b8] sm:$0xff]
        %v915 = vld [vmem:[%s124 + $0x17c0] sm:$0xff]
        %v916 = vld [vmem:[%s124 + $0x17c8] sm:$0xff]
        %v917 = vld [vmem:[%s124 + $0x17d0] sm:$0xff]
        %v918 = vld [vmem:[%s124 + $0x17d8] sm:$0xff]
        %v919 = vld [vmem:[%s124 + $0x17e0] sm:$0xff]
        %v920 = vld [vmem:[%s124 + $0x17e8] sm:$0xff]
        %v921 = vld [vmem:[%s124 + $0x17f0] sm:$0xff]
        %v922 = vld [vmem:[%s124 + $0x17f8] sm:$0xff]
        %v923 = vld [vmem:[%s124 + $0x1800] sm:$0xff]
        %v924 = vld [vmem:[%s124 + $0x1808] sm:$0xff]
        %v925 = vld [vmem:[%s124 + $0x1810] sm:$0xff]
        %v926 = vld [vmem:[%s124 + $0x1818] sm:$0xff]
        %v927 = vld [vmem:[%s124 + $0x1820] sm:$0xff]
        %v928 = vld [vmem:[%s124 + $0x1828] sm:$0xff]
        %v929 = vld [vmem:[%s124 + $0x1830] sm:$0xff]
        %v930 = vld [vmem:[%s124 + $0x1838] sm:$0xff]
        %v931 = vld [vmem:[%s124 + $0x1840] sm:$0xff]
        %v932 = vld [vmem:[%s124 + $0x1848] sm:$0xff]
        %v933 = vld [vmem:[%s124 + $0x1850] sm:$0xff]
        %v934 = vld [vmem:[%s124 + $0x1858] sm:$0xff]
        %v935 = vld [vmem:[%s124 + $0x1860] sm:$0xff]
        %v936 = vld [vmem:[%s124 + $0x1868] sm:$0xff]
        %v937 = vld [vmem:[%s124 + $0x1870] sm:$0xff]
        %v938 = vld [vmem:[%s124 + $0x1878] sm:$0xff]
        %v939 = vld [vmem:[%s124 + $0x1880] sm:$0xff]
        %v940 = vld [vmem:[%s124 + $0x1888] sm:$0xff]
        %v941 = vld [vmem:[%s124 + $0x1890] sm:$0xff]
        %v942 = vld [vmem:[%s124 + $0x1898] sm:$0xff]
        %v943 = vld [vmem:[%s124 + $0x18a0] sm:$0xff]
        %v944 = vld [vmem:[%s124 + $0x18a8] sm:$0xff]
        %v945 = vld [vmem:[%s124 + $0x18b0] sm:$0xff]
        %v946 = vld [vmem:[%s124 + $0x18b8] sm:$0xff]
        %v947 = vld [vmem:[%s124 + $0x18c0] sm:$0xff]
        %v948 = vld [vmem:[%s124 + $0x18c8] sm:$0xff]
        %v949 = vld [vmem:[%s124 + $0x18d0] sm:$0xff]
        %v950 = vld [vmem:[%s124 + $0x18d8] sm:$0xff]
        %v951 = vld [vmem:[%s124 + $0x18e0] sm:$0xff]
        %v952 = vld [vmem:[%s124 + $0x18e8] sm:$0xff]
        %v953 = vld [vmem:[%s124 + $0x18f0] sm:$0xff]
        %v954 = vld [vmem:[%s124 + $0x18f8] sm:$0xff]
        %v955 = vld [vmem:[%s124 + $0x1900] sm:$0xff]
        %v956 = vld [vmem:[%s124 + $0x1908] sm:$0xff]
        %v957 = vld [vmem:[%s124 + $0x1910] sm:$0xff]
        %v958 = vld [vmem:[%s124 + $0x1918] sm:$0xff]
        %v959 = vld [vmem:[%s124 + $0x1920] sm:$0xff]
        %v960 = vld [vmem:[%s124 + $0x1928] sm:$0xff]
        %v961 = vld [vmem:[%s124 + $0x1930] sm:$0xff]
        %v962 = vld [vmem:[%s124 + $0x1938] sm:$0xff]
        %v963 = vld [vmem:[%s124 + $0x1940] sm:$0xff]
        %v964 = vld [vmem:[%s124 + $0x1948] sm:$0xff]
        %v965 = vld [vmem:[%s124 + $0x1950] sm:$0xff]
        %v966 = vld [vmem:[%s124 + $0x1958] sm:$0xff]
        %v967 = vld [vmem:[%s124 + $0x1960] sm:$0xff]
        %v968 = vld [vmem:[%s124 + $0x1968] sm:$0xff]
        %v969 = vld [vmem:[%s124 + $0x1970] sm:$0xff]
        %v970 = vld [vmem:[%s124 + $0x1978] sm:$0xff]
        %v971 = vld [vmem:[%s124 + $0x1980] sm:$0xff]
        %v972 = vld [vmem:[%s124 + $0x1988] sm:$0xff]
        %v973 = vld [vmem:[%s124 + $0x1990] sm:$0xff]
        %v974 = vld [vmem:[%s124 + $0x1998] sm:$0xff]
        %v975 = vld [vmem:[%s124 + $0x19a0] sm:$0xff]
        %v976 = vld [vmem:[%s124 + $0x19a8] sm:$0xff]
        %v977 = vld [vmem:[%s124 + $0x19b0] sm:$0xff]
        %v978 = vld [vmem:[%s124 + $0x19b8] sm:$0xff]
        %v979 = vld [vmem:[%s124 + $0x19c0] sm:$0xff]
        %v980 = vld [vmem:[%s124 + $0x19c8] sm:$0xff]
        %v981 = vld [vmem:[%s124 + $0x19d0] sm:$0xff]
        %v982 = vld [vmem:[%s124 + $0x19d8] sm:$0xff]
        %v983 = vld [vmem:[%s124 + $0x19e0] sm:$0xff]
        %v984 = vld [vmem:[%s124 + $0x19e8] sm:$0xff]
        %v985 = vld [vmem:[%s124 + $0x19f0] sm:$0xff]
        %v986 = vld [vmem:[%s124 + $0x19f8] sm:$0xff]
        %v987 = vld [vmem:[%s124 + $0x1a00] sm:$0xff]
        %v988 = vld [vmem:[%s124 + $0x1a08] sm:$0xff]
        %v989 = vld [vmem:[%s124 + $0x1a10] sm:$0xff]
        %v990 = vld [vmem:[%s124 + $0x1a18] sm:$0xff]
        %v991 = vld [vmem:[%s124 + $0x1a20] sm:$0xff]
        %v992 = vld [vmem:[%s124 + $0x1a28] sm:$0xff]
        %v993 = vld [vmem:[%s124 + $0x1a30] sm:$0xff]
        %v994 = vld [vmem:[%s124 + $0x1a38] sm:$0xff]
        %v995 = vld [vmem:[%s124 + $0x1a40] sm:$0xff]
        %v996 = vld [vmem:[%s124 + $0x1a48] sm:$0xff]
        %v997 = vld [vmem:[%s124 + $0x1a50] sm:$0xff]
        %v998 = vld [vmem:[%s124 + $0x1a58] sm:$0xff]
        %v999 = vld [vmem:[%s124 + $0x1a60] sm:$0xff]
        %v1000 = vld [vmem:[%s124 + $0x1a68] sm:$0xff]
        %v1001 = vld [vmem:[%s124 + $0x1a70] sm:$0xff]
        %v1002 = vld [vmem:[%s124 + $0x1a78] sm:$0xff]
        %v1003 = vld [vmem:[%s124 + $0x1a80] sm:$0xff]
        %v1004 = vld [vmem:[%s124 + $0x1a88] sm:$0xff]
        %v1005 = vld [vmem:[%s124 + $0x1a90] sm:$0xff]
        %v1006 = vld [vmem:[%s124 + $0x1a98] sm:$0xff]
        %v1007 = vld [vmem:[%s124 + $0x1aa0] sm:$0xff]
        %v1008 = vld [vmem:[%s124 + $0x1aa8] sm:$0xff]
        %v1009 = vld [vmem:[%s124 + $0x1ab0] sm:$0xff]
        %v1010 = vld [vmem:[%s124 + $0x1ab8] sm:$0xff]
        %v1011 = vld [vmem:[%s124 + $0x1ac0] sm:$0xff]
        %v1012 = vld [vmem:[%s124 + $0x1ac8] sm:$0xff]
        %v1013 = vld [vmem:[%s124 + $0x1ad0] sm:$0xff]
        %v1014 = vld [vmem:[%s124 + $0x1ad8] sm:$0xff]
        %v1015 = vld [vmem:[%s124 + $0x1ae0] sm:$0xff]
        %v1016 = vld [vmem:[%s124 + $0x1ae8] sm:$0xff]
        %v1017 = vld [vmem:[%s124 + $0x1af0] sm:$0xff]
        %v1018 = vld [vmem:[%s124 + $0x1af8] sm:$0xff]
        %v1019 = vld [vmem:[%s124 + $0x1b00] sm:$0xff]
        %v1020 = vld [vmem:[%s124 + $0x1b08] sm:$0xff]
        %v1021 = vld [vmem:[%s124 + $0x1b10] sm:$0xff]
        %v1022 = vld [vmem:[%s124 + $0x1b18] sm:$0xff]
        %v1023 = vld [vmem:[%s124 + $0x1b20] sm:$0xff]
        %v1024 = vld [vmem:[%s124 + $0x1b28] sm:$0xff]
        %v1025 = vld [vmem:[%s124 + $0x1b30] sm:$0xff]
        %v1026 = vld [vmem:[%s124 + $0x1b38] sm:$0xff]
        %v1027 = vld [vmem:[%s124 + $0x1b40] sm:$0xff]
        %v1028 = vld [vmem:[%s124 + $0x1b48] sm:$0xff]
        %v1029 = vld [vmem:[%s124 + $0x1b50] sm:$0xff]
        %v1030 = vld [vmem:[%s124 + $0x1b58] sm:$0xff]
        %v1031 = vld [vmem:[%s124 + $0x1b60] sm:$0xff]
        %v1032 = vld [vmem:[%s124 + $0x1b68] sm:$0xff]
        %v1033 = vld [vmem:[%s124 + $0x1b70] sm:$0xff]
        %v1034 = vld [vmem:[%s124 + $0x1b78] sm:$0xff]
        %v1035 = vld [vmem:[%s124 + $0x1b80] sm:$0xff]
        %v1036 = vld [vmem:[%s124 + $0x1b88] sm:$0xff]
        %v1037 = vld [vmem:[%s124 + $0x1b90] sm:$0xff]
        %v1038 = vld [vmem:[%s124 + $0x1b98] sm:$0xff]
        %v1039 = vld [vmem:[%s124 + $0x1ba0] sm:$0xff]
        %v1040 = vld [vmem:[%s124 + $0x1ba8] sm:$0xff]
        %v1041 = vld [vmem:[%s124 + $0x1bb0] sm:$0xff]
        %v1042 = vld [vmem:[%s124 + $0x1bb8] sm:$0xff]
        %v1043 = vld [vmem:[%s124 + $0x1bc0] sm:$0xff]
        %v1044 = vld [vmem:[%s124 + $0x1bc8] sm:$0xff]
        %v1045 = vld [vmem:[%s124 + $0x1bd0] sm:$0xff]
        %v1046 = vld [vmem:[%s124 + $0x1bd8] sm:$0xff]
        %v1047 = vld [vmem:[%s124 + $0x1be0] sm:$0xff]
        %v1048 = vld [vmem:[%s124 + $0x1be8] sm:$0xff]
        %v1049 = vld [vmem:[%s124 + $0x1bf0] sm:$0xff]
        %v1050 = vld [vmem:[%s124 + $0x1bf8] sm:$0xff]
        %v1051 = vld [vmem:[%s124 + $0x1c00] sm:$0xff]
        %v1052 = vld [vmem:[%s124 + $0x1c08] sm:$0xff]
        %v1053 = vld [vmem:[%s124 + $0x1c10] sm:$0xff]
        %v1054 = vld [vmem:[%s124 + $0x1c18] sm:$0xff]
        %v1055 = vld [vmem:[%s124 + $0x1c20] sm:$0xff]
        %v1056 = vld [vmem:[%s124 + $0x1c28] sm:$0xff]
        %v1057 = vld [vmem:[%s124 + $0x1c30] sm:$0xff]
        %v1058 = vld [vmem:[%s124 + $0x1c38] sm:$0xff]
        %v1059 = vld [vmem:[%s124 + $0x1c40] sm:$0xff]
        %v1060 = vld [vmem:[%s124 + $0x1c48] sm:$0xff]
        %v1061 = vld [vmem:[%s124 + $0x1c50] sm:$0xff]
        %v1062 = vld [vmem:[%s124 + $0x1c58] sm:$0xff]
        %v1063 = vld [vmem:[%s124 + $0x1c60] sm:$0xff]
        %v1064 = vld [vmem:[%s124 + $0x1c68] sm:$0xff]
        %v1065 = vld [vmem:[%s124 + $0x1c70] sm:$0xff]
        %v1066 = vld [vmem:[%s124 + $0x1c78] sm:$0xff]
        %v1067 = vld [vmem:[%s124 + $0x1c80] sm:$0xff]
        %v1068 = vld [vmem:[%s124 + $0x1c88] sm:$0xff]
        %v1069 = vld [vmem:[%s124 + $0x1c90] sm:$0xff]
        %v1070 = vld [vmem:[%s124 + $0x1c98] sm:$0xff]
        %v1071 = vld [vmem:[%s124 + $0x1ca0] sm:$0xff]
        %v1072 = vld [vmem:[%s124 + $0x1ca8] sm:$0xff]
        %v1073 = vld [vmem:[%s124 + $0x1cb0] sm:$0xff]
        %v1074 = vld [vmem:[%s124 + $0x1cb8] sm:$0xff]
        %v1075 = vld [vmem:[%s124 + $0x1cc0] sm:$0xff]
        %v1076 = vld [vmem:[%s124 + $0x1cc8] sm:$0xff]
        %v1077 = vld [vmem:[%s124 + $0x1cd0] sm:$0xff]
        %v1078 = vld [vmem:[%s124 + $0x1cd8] sm:$0xff]
        %v1079 = vld [vmem:[%s124 + $0x1ce0] sm:$0xff]
        %v1080 = vld [vmem:[%s124 + $0x1ce8] sm:$0xff]
        %v1081 = vld [vmem:[%s124 + $0x1cf0] sm:$0xff]
        %v1082 = vld [vmem:[%s124 + $0x1cf8] sm:$0xff]
        %v1083 = vld [vmem:[%s124 + $0x1d00] sm:$0xff]
        %v1084 = vld [vmem:[%s124 + $0x1d08] sm:$0xff]
        %v1085 = vld [vmem:[%s124 + $0x1d10] sm:$0xff]
        %v1086 = vld [vmem:[%s124 + $0x1d18] sm:$0xff]
        %v1087 = vld [vmem:[%s124 + $0x1d20] sm:$0xff]
        %v1088 = vld [vmem:[%s124 + $0x1d28] sm:$0xff]
        %v1089 = vld [vmem:[%s124 + $0x1d30] sm:$0xff]
        %v1090 = vld [vmem:[%s124 + $0x1d38] sm:$0xff]
        %v1091 = vld [vmem:[%s124 + $0x1d40] sm:$0xff]
        %v1092 = vld [vmem:[%s124 + $0x1d48] sm:$0xff]
        %v1093 = vld [vmem:[%s124 + $0x1d50] sm:$0xff]
        %v1094 = vld [vmem:[%s124 + $0x1d58] sm:$0xff]
        %v1095 = vld [vmem:[%s124 + $0x1d60] sm:$0xff]
        %v1096 = vld [vmem:[%s124 + $0x1d68] sm:$0xff]
        %v1097 = vld [vmem:[%s124 + $0x1d70] sm:$0xff]
        %v1098 = vld [vmem:[%s124 + $0x1d78] sm:$0xff]
        %v1099 = vld [vmem:[%s124 + $0x1d80] sm:$0xff]
        %v1100 = vld [vmem:[%s124 + $0x1d88] sm:$0xff]
        %v1101 = vld [vmem:[%s124 + $0x1d90] sm:$0xff]
        %v1102 = vld [vmem:[%s124 + $0x1d98] sm:$0xff]
        %v1103 = vld [vmem:[%s124 + $0x1da0] sm:$0xff]
        %v1104 = vld [vmem:[%s124 + $0x1da8] sm:$0xff]
        %v1105 = vld [vmem:[%s124 + $0x1db0] sm:$0xff]
        %v1106 = vld [vmem:[%s124 + $0x1db8] sm:$0xff]
        %v1107 = vld [vmem:[%s124 + $0x1dc0] sm:$0xff]
        %v1108 = vld [vmem:[%s124 + $0x1dc8] sm:$0xff]
        %v1109 = vld [vmem:[%s124 + $0x1dd0] sm:$0xff]
        %v1110 = vld [vmem:[%s124 + $0x1dd8] sm:$0xff]
        %v1111 = vld [vmem:[%s124 + $0x1de0] sm:$0xff]
        %v1112 = vld [vmem:[%s124 + $0x1de8] sm:$0xff]
        %v1113 = vld [vmem:[%s124 + $0x1df0] sm:$0xff]
        %v1114 = vld [vmem:[%s124 + $0x1df8] sm:$0xff]
        %v1115 = vld [vmem:[%s124 + $0x1e00] sm:$0xff]
        %v1116 = vld [vmem:[%s124 + $0x1e08] sm:$0xff]
        %v1117 = vld [vmem:[%s124 + $0x1e10] sm:$0xff]
        %v1118 = vld [vmem:[%s124 + $0x1e18] sm:$0xff]
        %v1119 = vld [vmem:[%s124 + $0x1e20] sm:$0xff]
        %v1120 = vld [vmem:[%s124 + $0x1e28] sm:$0xff]
        %v1121 = vld [vmem:[%s124 + $0x1e30] sm:$0xff]
        %v1122 = vld [vmem:[%s124 + $0x1e38] sm:$0xff]
        %v1123 = vld [vmem:[%s124 + $0x1e40] sm:$0xff]
        %v1124 = vld [vmem:[%s124 + $0x1e48] sm:$0xff]
        %v1125 = vld [vmem:[%s124 + $0x1e50] sm:$0xff]
        %v1126 = vld [vmem:[%s124 + $0x1e58] sm:$0xff]
        %v1127 = vld [vmem:[%s124 + $0x1e60] sm:$0xff]
        %v1128 = vld [vmem:[%s124 + $0x1e68] sm:$0xff]
        %v1129 = vld [vmem:[%s124 + $0x1e70] sm:$0xff]
        %v1130 = vld [vmem:[%s124 + $0x1e78] sm:$0xff]
        %v1131 = vld [vmem:[%s124 + $0x1e80] sm:$0xff]
        %v1132 = vld [vmem:[%s124 + $0x1e88] sm:$0xff]
        %v1133 = vld [vmem:[%s124 + $0x1e90] sm:$0xff]
        %v1134 = vld [vmem:[%s124 + $0x1e98] sm:$0xff]
        %v1135 = vld [vmem:[%s124 + $0x1ea0] sm:$0xff]
        %v1136 = vld [vmem:[%s124 + $0x1ea8] sm:$0xff]
        %v1137 = vld [vmem:[%s124 + $0x1eb0] sm:$0xff]
        %v1138 = vld [vmem:[%s124 + $0x1eb8] sm:$0xff]
        %v1139 = vld [vmem:[%s124 + $0x1ec0] sm:$0xff]
        %v1140 = vld [vmem:[%s124 + $0x1ec8] sm:$0xff]
        %v1141 = vld [vmem:[%s124 + $0x1ed0] sm:$0xff]
        %v1142 = vld [vmem:[%s124 + $0x1ed8] sm:$0xff]
        %v1143 = vld [vmem:[%s124 + $0x1ee0] sm:$0xff]
        %v1144 = vld [vmem:[%s124 + $0x1ee8] sm:$0xff]
        %v1145 = vld [vmem:[%s124 + $0x1ef0] sm:$0xff]
        %v1146 = vld [vmem:[%s124 + $0x1ef8] sm:$0xff]
        %v1147 = vld [vmem:[%s124 + $0x1f00] sm:$0xff]
        %v1148 = vld [vmem:[%s124 + $0x1f08] sm:$0xff]
        %v1149 = vld [vmem:[%s124 + $0x1f10] sm:$0xff]
        %v1150 = vld [vmem:[%s124 + $0x1f18] sm:$0xff]
        %v1151 = vld [vmem:[%s124 + $0x1f20] sm:$0xff]
        %v1152 = vld [vmem:[%s124 + $0x1f28] sm:$0xff]
        %v1153 = vld [vmem:[%s124 + $0x1f30] sm:$0xff]
        %v1154 = vld [vmem:[%s124 + $0x1f38] sm:$0xff]
        %v1155 = vld [vmem:[%s124 + $0x1f40] sm:$0xff]
        %v1156 = vld [vmem:[%s124 + $0x1f48] sm:$0xff]
        %v1157 = vld [vmem:[%s124 + $0x1f50] sm:$0xff]
        %v1158 = vld [vmem:[%s124 + $0x1f58] sm:$0xff]
        %v1159 = vld [vmem:[%s124 + $0x1f60] sm:$0xff]
        %v1160 = vld [vmem:[%s124 + $0x1f68] sm:$0xff]
        %v1161 = vld [vmem:[%s124 + $0x1f70] sm:$0xff]
        %v1162 = vld [vmem:[%s124 + $0x1f78] sm:$0xff]
        %v1163 = vld [vmem:[%s124 + $0x1f80] sm:$0xff]
        %v1164 = vld [vmem:[%s124 + $0x1f88] sm:$0xff]
        %v1165 = vld [vmem:[%s124 + $0x1f90] sm:$0xff]
        %v1166 = vld [vmem:[%s124 + $0x1f98] sm:$0xff]
        %v1167 = vld [vmem:[%s124 + $0x1fa0] sm:$0xff]
        %v1168 = vld [vmem:[%s124 + $0x1fa8] sm:$0xff]
        %v1169 = vld [vmem:[%s124 + $0x1fb0] sm:$0xff]
        %v1170 = vld [vmem:[%s124 + $0x1fb8] sm:$0xff]
        %v1171 = vld [vmem:[%s124 + $0x1fc0] sm:$0xff]
        %v1172 = vld [vmem:[%s124 + $0x1fc8] sm:$0xff]
        %v1173 = vld [vmem:[%s124 + $0x1fd0] sm:$0xff]
        %v1174 = vld [vmem:[%s124 + $0x1fd8] sm:$0xff]
        %v1175 = vld [vmem:[%s124 + $0x1fe0] sm:$0xff]
        %v1176 = vld [vmem:[%s124 + $0x1fe8] sm:$0xff]
        %v1177 = vld [vmem:[%s124 + $0x1ff0] sm:$0xff]
        %v1178 = vld [vmem:[%s124 + $0x1ff8] sm:$0xff]
        %v1179 = vsub.f32 0.0, %v155
        %v1180 = vsub.f32 0.0, %v156
        %v1181 = vsub.f32 0.0, %v157
        %v1182 = vsub.f32 0.0, %v158
        %v1183 = vsub.f32 0.0, %v159
        %v1184 = vsub.f32 0.0, %v160
        %v1185 = vsub.f32 0.0, %v161
        %v1186 = vsub.f32 0.0, %v162
        %v1187 = vsub.f32 0.0, %v163
        %v1188 = vsub.f32 0.0, %v164
        %v1189 = vsub.f32 0.0, %v165
        %v1190 = vsub.f32 0.0, %v166
        %v1191 = vsub.f32 0.0, %v167
        %v1192 = vsub.f32 0.0, %v168
        %v1193 = vsub.f32 0.0, %v169
        %v1194 = vsub.f32 0.0, %v170
        %v1195 = vsub.f32 0.0, %v171
        %v1196 = vsub.f32 0.0, %v172
        %v1197 = vsub.f32 0.0, %v173
        %v1198 = vsub.f32 0.0, %v174
        %v1199 = vsub.f32 0.0, %v175
        %v1200 = vsub.f32 0.0, %v176
        %v1201 = vsub.f32 0.0, %v177
        %v1202 = vsub.f32 0.0, %v178
        %v1203 = vsub.f32 0.0, %v179
        %v1204 = vsub.f32 0.0, %v180
        %v1205 = vsub.f32 0.0, %v181
        %v1206 = vsub.f32 0.0, %v182
        %v1207 = vsub.f32 0.0, %v183
        %v1208 = vsub.f32 0.0, %v184
        %v1209 = vsub.f32 0.0, %v185
        %v1210 = vsub.f32 0.0, %v186
        %v1211 = vsub.f32 0.0, %v187
        %v1212 = vsub.f32 0.0, %v188
        %v1213 = vsub.f32 0.0, %v189
        %v1214 = vsub.f32 0.0, %v190
        %v1215 = vsub.f32 0.0, %v191
        %v1216 = vsub.f32 0.0, %v192
        %v1217 = vsub.f32 0.0, %v193
        %v1218 = vsub.f32 0.0, %v194
        %v1219 = vsub.f32 0.0, %v195
        %v1220 = vsub.f32 0.0, %v196
        %v1221 = vsub.f32 0.0, %v197
        %v1222 = vsub.f32 0.0, %v198
        %v1223 = vsub.f32 0.0, %v199
        %v1224 = vsub.f32 0.0, %v200
        %v1225 = vsub.f32 0.0, %v201
        %v1226 = vsub.f32 0.0, %v202
        %v1227 = vsub.f32 0.0, %v203
        %v1228 = vsub.f32 0.0, %v204
        %v1229 = vsub.f32 0.0, %v205
        %v1230 = vsub.f32 0.0, %v206
        %v1231 = vsub.f32 0.0, %v207
        %v1232 = vsub.f32 0.0, %v208
        %v1233 = vsub.f32 0.0, %v209
        %v1234 = vsub.f32 0.0, %v210
        %v1235 = vsub.f32 0.0, %v211
        %v1236 = vsub.f32 0.0, %v212
        %v1237 = vsub.f32 0.0, %v213
        %v1238 = vsub.f32 0.0, %v214
        %v1239 = vsub.f32 0.0, %v215
        %v1240 = vsub.f32 0.0, %v216
        %v1241 = vsub.f32 0.0, %v217
        %v1242 = vsub.f32 0.0, %v218
        %v1243 = vsub.f32 0.0, %v219
        %v1244 = vsub.f32 0.0, %v220
        %v1245 = vsub.f32 0.0, %v221
        %v1246 = vsub.f32 0.0, %v222
        %v1247 = vsub.f32 0.0, %v223
        %v1248 = vsub.f32 0.0, %v224
        %v1249 = vsub.f32 0.0, %v225
        %v1250 = vsub.f32 0.0, %v226
        %v1251 = vsub.f32 0.0, %v227
        %v1252 = vsub.f32 0.0, %v228
        %v1253 = vsub.f32 0.0, %v229
        %v1254 = vsub.f32 0.0, %v230
        %v1255 = vsub.f32 0.0, %v231
        %v1256 = vsub.f32 0.0, %v232
        %v1257 = vsub.f32 0.0, %v233
        %v1258 = vsub.f32 0.0, %v234
        %v1259 = vsub.f32 0.0, %v235
        %v1260 = vsub.f32 0.0, %v236
        %v1261 = vsub.f32 0.0, %v237
        %v1262 = vsub.f32 0.0, %v238
        %v1263 = vsub.f32 0.0, %v239
        %v1264 = vsub.f32 0.0, %v240
        %v1265 = vsub.f32 0.0, %v241
        %v1266 = vsub.f32 0.0, %v242
        %v1267 = vsub.f32 0.0, %v243
        %v1268 = vsub.f32 0.0, %v244
        %v1269 = vsub.f32 0.0, %v245
        %v1270 = vsub.f32 0.0, %v246
        %v1271 = vsub.f32 0.0, %v247
        %v1272 = vsub.f32 0.0, %v248
        %v1273 = vsub.f32 0.0, %v249
        %v1274 = vsub.f32 0.0, %v250
        %v1275 = vsub.f32 0.0, %v251
        %v1276 = vsub.f32 0.0, %v252
        %v1277 = vsub.f32 0.0, %v253
        %v1278 = vsub.f32 0.0, %v254
        %v1279 = vsub.f32 0.0, %v255
        %v1280 = vsub.f32 0.0, %v256
        %v1281 = vsub.f32 0.0, %v257
        %v1282 = vsub.f32 0.0, %v258
        %v1283 = vsub.f32 0.0, %v259
        %v1284 = vsub.f32 0.0, %v260
        %v1285 = vsub.f32 0.0, %v261
        %v1286 = vsub.f32 0.0, %v262
        %v1287 = vsub.f32 0.0, %v263
        %v1288 = vsub.f32 0.0, %v264
        %v1289 = vsub.f32 0.0, %v265
        %v1290 = vsub.f32 0.0, %v266
        %v1291 = vsub.f32 0.0, %v267
        %v1292 = vsub.f32 0.0, %v268
        %v1293 = vsub.f32 0.0, %v269
        %v1294 = vsub.f32 0.0, %v270
        %v1295 = vsub.f32 0.0, %v271
        %v1296 = vsub.f32 0.0, %v272
        %v1297 = vsub.f32 0.0, %v273
        %v1298 = vsub.f32 0.0, %v274
        %v1299 = vsub.f32 0.0, %v275
        %v1300 = vsub.f32 0.0, %v276
        %v1301 = vsub.f32 0.0, %v277
        %v1302 = vsub.f32 0.0, %v278
        %v1303 = vsub.f32 0.0, %v279
        %v1304 = vsub.f32 0.0, %v280
        %v1305 = vsub.f32 0.0, %v281
        %v1306 = vsub.f32 0.0, %v282
        %v1307 = vsub.f32 0.0, %v283
        %v1308 = vsub.f32 0.0, %v284
        %v1309 = vsub.f32 0.0, %v285
        %v1310 = vsub.f32 0.0, %v286
        %v1311 = vsub.f32 0.0, %v287
        %v1312 = vsub.f32 0.0, %v288
        %v1313 = vsub.f32 0.0, %v289
        %v1314 = vsub.f32 0.0, %v290
        %v1315 = vsub.f32 0.0, %v291
        %v1316 = vsub.f32 0.0, %v292
        %v1317 = vsub.f32 0.0, %v293
        %v1318 = vsub.f32 0.0, %v294
        %v1319 = vsub.f32 0.0, %v295
        %v1320 = vsub.f32 0.0, %v296
        %v1321 = vsub.f32 0.0, %v297
        %v1322 = vsub.f32 0.0, %v298
        %v1323 = vsub.f32 0.0, %v299
        %v1324 = vsub.f32 0.0, %v300
        %v1325 = vsub.f32 0.0, %v301
        %v1326 = vsub.f32 0.0, %v302
        %v1327 = vsub.f32 0.0, %v303
        %v1328 = vsub.f32 0.0, %v304
        %v1329 = vsub.f32 0.0, %v305
        %v1330 = vsub.f32 0.0, %v306
        %v1331 = vsub.f32 0.0, %v307
        %v1332 = vsub.f32 0.0, %v308
        %v1333 = vsub.f32 0.0, %v309
        %v1334 = vsub.f32 0.0, %v310
        %v1335 = vsub.f32 0.0, %v311
        %v1336 = vsub.f32 0.0, %v312
        %v1337 = vsub.f32 0.0, %v313
        %v1338 = vsub.f32 0.0, %v314
        %v1339 = vsub.f32 0.0, %v315
        %v1340 = vsub.f32 0.0, %v316
        %v1341 = vsub.f32 0.0, %v317
        %v1342 = vsub.f32 0.0, %v318
        %v1343 = vsub.f32 0.0, %v319
        %v1344 = vsub.f32 0.0, %v320
        %v1345 = vsub.f32 0.0, %v321
        %v1346 = vsub.f32 0.0, %v322
        %v1347 = vsub.f32 0.0, %v323
        %v1348 = vsub.f32 0.0, %v324
        %v1349 = vsub.f32 0.0, %v325
        %v1350 = vsub.f32 0.0, %v326
        %v1351 = vsub.f32 0.0, %v327
        %v1352 = vsub.f32 0.0, %v328
        %v1353 = vsub.f32 0.0, %v329
        %v1354 = vsub.f32 0.0, %v330
        %v1355 = vsub.f32 0.0, %v331
        %v1356 = vsub.f32 0.0, %v332
        %v1357 = vsub.f32 0.0, %v333
        %v1358 = vsub.f32 0.0, %v334
        %v1359 = vsub.f32 0.0, %v335
        %v1360 = vsub.f32 0.0, %v336
        %v1361 = vsub.f32 0.0, %v337
        %v1362 = vsub.f32 0.0, %v338
        %v1363 = vsub.f32 0.0, %v339
        %v1364 = vsub.f32 0.0, %v340
        %v1365 = vsub.f32 0.0, %v341
        %v1366 = vsub.f32 0.0, %v342
        %v1367 = vsub.f32 0.0, %v343
        %v1368 = vsub.f32 0.0, %v344
        %v1369 = vsub.f32 0.0, %v345
        %v1370 = vsub.f32 0.0, %v346
        %v1371 = vsub.f32 0.0, %v347
        %v1372 = vsub.f32 0.0, %v348
        %v1373 = vsub.f32 0.0, %v349
        %v1374 = vsub.f32 0.0, %v350
        %v1375 = vsub.f32 0.0, %v351
        %v1376 = vsub.f32 0.0, %v352
        %v1377 = vsub.f32 0.0, %v353
        %v1378 = vsub.f32 0.0, %v354
        %v1379 = vsub.f32 0.0, %v355
        %v1380 = vsub.f32 0.0, %v356
        %v1381 = vsub.f32 0.0, %v357
        %v1382 = vsub.f32 0.0, %v358
        %v1383 = vsub.f32 0.0, %v359
        %v1384 = vsub.f32 0.0, %v360
        %v1385 = vsub.f32 0.0, %v361
        %v1386 = vsub.f32 0.0, %v362
        %v1387 = vsub.f32 0.0, %v363
        %v1388 = vsub.f32 0.0, %v364
        %v1389 = vsub.f32 0.0, %v365
        %v1390 = vsub.f32 0.0, %v366
        %v1391 = vsub.f32 0.0, %v367
        %v1392 = vsub.f32 0.0, %v368
        %v1393 = vsub.f32 0.0, %v369
        %v1394 = vsub.f32 0.0, %v370
        %v1395 = vsub.f32 0.0, %v371
        %v1396 = vsub.f32 0.0, %v372
        %v1397 = vsub.f32 0.0, %v373
        %v1398 = vsub.f32 0.0, %v374
        %v1399 = vsub.f32 0.0, %v375
        %v1400 = vsub.f32 0.0, %v376
        %v1401 = vsub.f32 0.0, %v377
        %v1402 = vsub.f32 0.0, %v378
        %v1403 = vsub.f32 0.0, %v379
        %v1404 = vsub.f32 0.0, %v380
        %v1405 = vsub.f32 0.0, %v381
        %v1406 = vsub.f32 0.0, %v382
        %v1407 = vsub.f32 0.0, %v383
        %v1408 = vsub.f32 0.0, %v384
        %v1409 = vsub.f32 0.0, %v385
        %v1410 = vsub.f32 0.0, %v386
        %v1411 = vsub.f32 0.0, %v387
        %v1412 = vsub.f32 0.0, %v388
        %v1413 = vsub.f32 0.0, %v389
        %v1414 = vsub.f32 0.0, %v390
        %v1415 = vsub.f32 0.0, %v391
        %v1416 = vsub.f32 0.0, %v392
        %v1417 = vsub.f32 0.0, %v393
        %v1418 = vsub.f32 0.0, %v394
        %v1419 = vsub.f32 0.0, %v395
        %v1420 = vsub.f32 0.0, %v396
        %v1421 = vsub.f32 0.0, %v397
        %v1422 = vsub.f32 0.0, %v398
        %v1423 = vsub.f32 0.0, %v399
        %v1424 = vsub.f32 0.0, %v400
        %v1425 = vsub.f32 0.0, %v401
        %v1426 = vsub.f32 0.0, %v402
        %v1427 = vsub.f32 0.0, %v403
        %v1428 = vsub.f32 0.0, %v404
        %v1429 = vsub.f32 0.0, %v405
        %v1430 = vsub.f32 0.0, %v406
        %v1431 = vsub.f32 0.0, %v407
        %v1432 = vsub.f32 0.0, %v408
        %v1433 = vsub.f32 0.0, %v409
        %v1434 = vsub.f32 0.0, %v410
        %v1435 = vsub.f32 0.0, %v411
        %v1436 = vsub.f32 0.0, %v412
        %v1437 = vsub.f32 0.0, %v413
        %v1438 = vsub.f32 0.0, %v414
        %v1439 = vsub.f32 0.0, %v415
        %v1440 = vsub.f32 0.0, %v416
        %v1441 = vsub.f32 0.0, %v417
        %v1442 = vsub.f32 0.0, %v418
        %v1443 = vsub.f32 0.0, %v419
        %v1444 = vsub.f32 0.0, %v420
        %v1445 = vsub.f32 0.0, %v421
        %v1446 = vsub.f32 0.0, %v422
        %v1447 = vsub.f32 0.0, %v423
        %v1448 = vsub.f32 0.0, %v424
        %v1449 = vsub.f32 0.0, %v425
        %v1450 = vsub.f32 0.0, %v426
        %v1451 = vsub.f32 0.0, %v427
        %v1452 = vsub.f32 0.0, %v428
        %v1453 = vsub.f32 0.0, %v429
        %v1454 = vsub.f32 0.0, %v430
        %v1455 = vsub.f32 0.0, %v431
        %v1456 = vsub.f32 0.0, %v432
        %v1457 = vsub.f32 0.0, %v433
        %v1458 = vsub.f32 0.0, %v434
        %v1459 = vsub.f32 0.0, %v435
        %v1460 = vsub.f32 0.0, %v436
        %v1461 = vsub.f32 0.0, %v437
        %v1462 = vsub.f32 0.0, %v438
        %v1463 = vsub.f32 0.0, %v439
        %v1464 = vsub.f32 0.0, %v440
        %v1465 = vsub.f32 0.0, %v441
        %v1466 = vsub.f32 0.0, %v442
        %v1467 = vsub.f32 0.0, %v443
        %v1468 = vsub.f32 0.0, %v444
        %v1469 = vsub.f32 0.0, %v445
        %v1470 = vsub.f32 0.0, %v446
        %v1471 = vsub.f32 0.0, %v447
        %v1472 = vsub.f32 0.0, %v448
        %v1473 = vsub.f32 0.0, %v449
        %v1474 = vsub.f32 0.0, %v450
        %v1475 = vsub.f32 0.0, %v451
        %v1476 = vsub.f32 0.0, %v452
        %v1477 = vsub.f32 0.0, %v453
        %v1478 = vsub.f32 0.0, %v454
        %v1479 = vsub.f32 0.0, %v455
        %v1480 = vsub.f32 0.0, %v456
        %v1481 = vsub.f32 0.0, %v457
        %v1482 = vsub.f32 0.0, %v458
        %v1483 = vsub.f32 0.0, %v459
        %v1484 = vsub.f32 0.0, %v460
        %v1485 = vsub.f32 0.0, %v461
        %v1486 = vsub.f32 0.0, %v462
        %v1487 = vsub.f32 0.0, %v463
        %v1488 = vsub.f32 0.0, %v464
        %v1489 = vsub.f32 0.0, %v465
        %v1490 = vsub.f32 0.0, %v466
        %v1491 = vsub.f32 0.0, %v467
        %v1492 = vsub.f32 0.0, %v468
        %v1493 = vsub.f32 0.0, %v469
        %v1494 = vsub.f32 0.0, %v470
        %v1495 = vsub.f32 0.0, %v471
        %v1496 = vsub.f32 0.0, %v472
        %v1497 = vsub.f32 0.0, %v473
        %v1498 = vsub.f32 0.0, %v474
        %v1499 = vsub.f32 0.0, %v475
        %v1500 = vsub.f32 0.0, %v476
        %v1501 = vsub.f32 0.0, %v477
        %v1502 = vsub.f32 0.0, %v478
        %v1503 = vsub.f32 0.0, %v479
        %v1504 = vsub.f32 0.0, %v480
        %v1505 = vsub.f32 0.0, %v481
        %v1506 = vsub.f32 0.0, %v482
        %v1507 = vsub.f32 0.0, %v483
        %v1508 = vsub.f32 0.0, %v484
        %v1509 = vsub.f32 0.0, %v485
        %v1510 = vsub.f32 0.0, %v486
        %v1511 = vsub.f32 0.0, %v487
        %v1512 = vsub.f32 0.0, %v488
        %v1513 = vsub.f32 0.0, %v489
        %v1514 = vsub.f32 0.0, %v490
        %v1515 = vsub.f32 0.0, %v491
        %v1516 = vsub.f32 0.0, %v492
        %v1517 = vsub.f32 0.0, %v493
        %v1518 = vsub.f32 0.0, %v494
        %v1519 = vsub.f32 0.0, %v495
        %v1520 = vsub.f32 0.0, %v496
        %v1521 = vsub.f32 0.0, %v497
        %v1522 = vsub.f32 0.0, %v498
        %v1523 = vsub.f32 0.0, %v499
        %v1524 = vsub.f32 0.0, %v500
        %v1525 = vsub.f32 0.0, %v501
        %v1526 = vsub.f32 0.0, %v502
        %v1527 = vsub.f32 0.0, %v503
        %v1528 = vsub.f32 0.0, %v504
        %v1529 = vsub.f32 0.0, %v505
        %v1530 = vsub.f32 0.0, %v506
        %v1531 = vsub.f32 0.0, %v507
        %v1532 = vsub.f32 0.0, %v508
        %v1533 = vsub.f32 0.0, %v509
        %v1534 = vsub.f32 0.0, %v510
        %v1535 = vsub.f32 0.0, %v511
        %v1536 = vsub.f32 0.0, %v512
        %v1537 = vsub.f32 0.0, %v513
        %v1538 = vsub.f32 0.0, %v514
        %v1539 = vsub.f32 0.0, %v515
        %v1540 = vsub.f32 0.0, %v516
        %v1541 = vsub.f32 0.0, %v517
        %v1542 = vsub.f32 0.0, %v518
        %v1543 = vsub.f32 0.0, %v519
        %v1544 = vsub.f32 0.0, %v520
        %v1545 = vsub.f32 0.0, %v521
        %v1546 = vsub.f32 0.0, %v522
        %v1547 = vsub.f32 0.0, %v523
        %v1548 = vsub.f32 0.0, %v524
        %v1549 = vsub.f32 0.0, %v525
        %v1550 = vsub.f32 0.0, %v526
        %v1551 = vsub.f32 0.0, %v527
        %v1552 = vsub.f32 0.0, %v528
        %v1553 = vsub.f32 0.0, %v529
        %v1554 = vsub.f32 0.0, %v530
        %v1555 = vsub.f32 0.0, %v531
        %v1556 = vsub.f32 0.0, %v532
        %v1557 = vsub.f32 0.0, %v533
        %v1558 = vsub.f32 0.0, %v534
        %v1559 = vsub.f32 0.0, %v535
        %v1560 = vsub.f32 0.0, %v536
        %v1561 = vsub.f32 0.0, %v537
        %v1562 = vsub.f32 0.0, %v538
        %v1563 = vsub.f32 0.0, %v539
        %v1564 = vsub.f32 0.0, %v540
        %v1565 = vsub.f32 0.0, %v541
        %v1566 = vsub.f32 0.0, %v542
        %v1567 = vsub.f32 0.0, %v543
        %v1568 = vsub.f32 0.0, %v544
        %v1569 = vsub.f32 0.0, %v545
        %v1570 = vsub.f32 0.0, %v546
        %v1571 = vsub.f32 0.0, %v547
        %v1572 = vsub.f32 0.0, %v548
        %v1573 = vsub.f32 0.0, %v549
        %v1574 = vsub.f32 0.0, %v550
        %v1575 = vsub.f32 0.0, %v551
        %v1576 = vsub.f32 0.0, %v552
        %v1577 = vsub.f32 0.0, %v553
        %v1578 = vsub.f32 0.0, %v554
        %v1579 = vsub.f32 0.0, %v555
        %v1580 = vsub.f32 0.0, %v556
        %v1581 = vsub.f32 0.0, %v557
        %v1582 = vsub.f32 0.0, %v558
        %v1583 = vsub.f32 0.0, %v559
        %v1584 = vsub.f32 0.0, %v560
        %v1585 = vsub.f32 0.0, %v561
        %v1586 = vsub.f32 0.0, %v562
        %v1587 = vsub.f32 0.0, %v563
        %v1588 = vsub.f32 0.0, %v564
        %v1589 = vsub.f32 0.0, %v565
        %v1590 = vsub.f32 0.0, %v566
        %v1591 = vsub.f32 0.0, %v567
        %v1592 = vsub.f32 0.0, %v568
        %v1593 = vsub.f32 0.0, %v569
        %v1594 = vsub.f32 0.0, %v570
        %v1595 = vsub.f32 0.0, %v571
        %v1596 = vsub.f32 0.0, %v572
        %v1597 = vsub.f32 0.0, %v573
        %v1598 = vsub.f32 0.0, %v574
        %v1599 = vsub.f32 0.0, %v575
        %v1600 = vsub.f32 0.0, %v576
        %v1601 = vsub.f32 0.0, %v577
        %v1602 = vsub.f32 0.0, %v578
        %v1603 = vsub.f32 0.0, %v579
        %v1604 = vsub.f32 0.0, %v580
        %v1605 = vsub.f32 0.0, %v581
        %v1606 = vsub.f32 0.0, %v582
        %v1607 = vsub.f32 0.0, %v583
        %v1608 = vsub.f32 0.0, %v584
        %v1609 = vsub.f32 0.0, %v585
        %v1610 = vsub.f32 0.0, %v586
        %v1611 = vsub.f32 0.0, %v587
        %v1612 = vsub.f32 0.0, %v588
        %v1613 = vsub.f32 0.0, %v589
        %v1614 = vsub.f32 0.0, %v590
        %v1615 = vsub.f32 0.0, %v591
        %v1616 = vsub.f32 0.0, %v592
        %v1617 = vsub.f32 0.0, %v593
        %v1618 = vsub.f32 0.0, %v594
        %v1619 = vsub.f32 0.0, %v595
        %v1620 = vsub.f32 0.0, %v596
        %v1621 = vsub.f32 0.0, %v597
        %v1622 = vsub.f32 0.0, %v598
        %v1623 = vsub.f32 0.0, %v599
        %v1624 = vsub.f32 0.0, %v600
        %v1625 = vsub.f32 0.0, %v601
        %v1626 = vsub.f32 0.0, %v602
        %v1627 = vsub.f32 0.0, %v603
        %v1628 = vsub.f32 0.0, %v604
        %v1629 = vsub.f32 0.0, %v605
        %v1630 = vsub.f32 0.0, %v606
        %v1631 = vsub.f32 0.0, %v607
        %v1632 = vsub.f32 0.0, %v608
        %v1633 = vsub.f32 0.0, %v609
        %v1634 = vsub.f32 0.0, %v610
        %v1635 = vsub.f32 0.0, %v611
        %v1636 = vsub.f32 0.0, %v612
        %v1637 = vsub.f32 0.0, %v613
        %v1638 = vsub.f32 0.0, %v614
        %v1639 = vsub.f32 0.0, %v615
        %v1640 = vsub.f32 0.0, %v616
        %v1641 = vsub.f32 0.0, %v617
        %v1642 = vsub.f32 0.0, %v618
        %v1643 = vsub.f32 0.0, %v619
        %v1644 = vsub.f32 0.0, %v620
        %v1645 = vsub.f32 0.0, %v621
        %v1646 = vsub.f32 0.0, %v622
        %v1647 = vsub.f32 0.0, %v623
        %v1648 = vsub.f32 0.0, %v624
        %v1649 = vsub.f32 0.0, %v625
        %v1650 = vsub.f32 0.0, %v626
        %v1651 = vsub.f32 0.0, %v627
        %v1652 = vsub.f32 0.0, %v628
        %v1653 = vsub.f32 0.0, %v629
        %v1654 = vsub.f32 0.0, %v630
        %v1655 = vsub.f32 0.0, %v631
        %v1656 = vsub.f32 0.0, %v632
        %v1657 = vsub.f32 0.0, %v633
        %v1658 = vsub.f32 0.0, %v634
        %v1659 = vsub.f32 0.0, %v635
        %v1660 = vsub.f32 0.0, %v636
        %v1661 = vsub.f32 0.0, %v637
        %v1662 = vsub.f32 0.0, %v638
        %v1663 = vsub.f32 0.0, %v639
        %v1664 = vsub.f32 0.0, %v640
        %v1665 = vsub.f32 0.0, %v641
        %v1666 = vsub.f32 0.0, %v642
        %v1667 = vsub.f32 0.0, %v643
        %v1668 = vsub.f32 0.0, %v644
        %v1669 = vsub.f32 0.0, %v645
        %v1670 = vsub.f32 0.0, %v646
        %v1671 = vsub.f32 0.0, %v647
        %v1672 = vsub.f32 0.0, %v648
        %v1673 = vsub.f32 0.0, %v649
        %v1674 = vsub.f32 0.0, %v650
        %v1675 = vsub.f32 0.0, %v651
        %v1676 = vsub.f32 0.0, %v652
        %v1677 = vsub.f32 0.0, %v653
        %v1678 = vsub.f32 0.0, %v654
        %v1679 = vsub.f32 0.0, %v655
        %v1680 = vsub.f32 0.0, %v656
        %v1681 = vsub.f32 0.0, %v657
        %v1682 = vsub.f32 0.0, %v658
        %v1683 = vsub.f32 0.0, %v659
        %v1684 = vsub.f32 0.0, %v660
        %v1685 = vsub.f32 0.0, %v661
        %v1686 = vsub.f32 0.0, %v662
        %v1687 = vsub.f32 0.0, %v663
        %v1688 = vsub.f32 0.0, %v664
        %v1689 = vsub.f32 0.0, %v665
        %v1690 = vsub.f32 0.0, %v666
        %v1691 = vsub.f32 0.0, %v667
        %v1692 = vsub.f32 0.0, %v668
        %v1693 = vsub.f32 0.0, %v669
        %v1694 = vsub.f32 0.0, %v670
        %v1695 = vsub.f32 0.0, %v671
        %v1696 = vsub.f32 0.0, %v672
        %v1697 = vsub.f32 0.0, %v673
        %v1698 = vsub.f32 0.0, %v674
        %v1699 = vsub.f32 0.0, %v675
        %v1700 = vsub.f32 0.0, %v676
        %v1701 = vsub.f32 0.0, %v677
        %v1702 = vsub.f32 0.0, %v678
        %v1703 = vsub.f32 0.0, %v679
        %v1704 = vsub.f32 0.0, %v680
        %v1705 = vsub.f32 0.0, %v681
        %v1706 = vsub.f32 0.0, %v682
        %v1707 = vsub.f32 0.0, %v683
        %v1708 = vsub.f32 0.0, %v684
        %v1709 = vsub.f32 0.0, %v685
        %v1710 = vsub.f32 0.0, %v686
        %v1711 = vsub.f32 0.0, %v687
        %v1712 = vsub.f32 0.0, %v688
        %v1713 = vsub.f32 0.0, %v689
        %v1714 = vsub.f32 0.0, %v690
        %v1715 = vsub.f32 0.0, %v691
        %v1716 = vsub.f32 0.0, %v692
        %v1717 = vsub.f32 0.0, %v693
        %v1718 = vsub.f32 0.0, %v694
        %v1719 = vsub.f32 0.0, %v695
        %v1720 = vsub.f32 0.0, %v696
        %v1721 = vsub.f32 0.0, %v697
        %v1722 = vsub.f32 0.0, %v698
        %v1723 = vsub.f32 0.0, %v699
        %v1724 = vsub.f32 0.0, %v700
        %v1725 = vsub.f32 0.0, %v701
        %v1726 = vsub.f32 0.0, %v702
        %v1727 = vsub.f32 0.0, %v703
        %v1728 = vsub.f32 0.0, %v704
        %v1729 = vsub.f32 0.0, %v705
        %v1730 = vsub.f32 0.0, %v706
        %v1731 = vsub.f32 0.0, %v707
        %v1732 = vsub.f32 0.0, %v708
        %v1733 = vsub.f32 0.0, %v709
        %v1734 = vsub.f32 0.0, %v710
        %v1735 = vsub.f32 0.0, %v711
        %v1736 = vsub.f32 0.0, %v712
        %v1737 = vsub.f32 0.0, %v713
        %v1738 = vsub.f32 0.0, %v714
        %v1739 = vsub.f32 0.0, %v715
        %v1740 = vsub.f32 0.0, %v716
        %v1741 = vsub.f32 0.0, %v717
        %v1742 = vsub.f32 0.0, %v718
        %v1743 = vsub.f32 0.0, %v719
        %v1744 = vsub.f32 0.0, %v720
        %v1745 = vsub.f32 0.0, %v721
        %v1746 = vsub.f32 0.0, %v722
        %v1747 = vsub.f32 0.0, %v723
        %v1748 = vsub.f32 0.0, %v724
        %v1749 = vsub.f32 0.0, %v725
        %v1750 = vsub.f32 0.0, %v726
        %v1751 = vsub.f32 0.0, %v727
        %v1752 = vsub.f32 0.0, %v728
        %v1753 = vsub.f32 0.0, %v729
        %v1754 = vsub.f32 0.0, %v730
        %v1755 = vsub.f32 0.0, %v731
        %v1756 = vsub.f32 0.0, %v732
        %v1757 = vsub.f32 0.0, %v733
        %v1758 = vsub.f32 0.0, %v734
        %v1759 = vsub.f32 0.0, %v735
        %v1760 = vsub.f32 0.0, %v736
        %v1761 = vsub.f32 0.0, %v737
        %v1762 = vsub.f32 0.0, %v738
        %v1763 = vsub.f32 0.0, %v739
        %v1764 = vsub.f32 0.0, %v740
        %v1765 = vsub.f32 0.0, %v741
        %v1766 = vsub.f32 0.0, %v742
        %v1767 = vsub.f32 0.0, %v743
        %v1768 = vsub.f32 0.0, %v744
        %v1769 = vsub.f32 0.0, %v745
        %v1770 = vsub.f32 0.0, %v746
        %v1771 = vsub.f32 0.0, %v747
        %v1772 = vsub.f32 0.0, %v748
        %v1773 = vsub.f32 0.0, %v749
        %v1774 = vsub.f32 0.0, %v750
        %v1775 = vsub.f32 0.0, %v751
        %v1776 = vsub.f32 0.0, %v752
        %v1777 = vsub.f32 0.0, %v753
        %v1778 = vsub.f32 0.0, %v754
        %v1779 = vsub.f32 0.0, %v755
        %v1780 = vsub.f32 0.0, %v756
        %v1781 = vsub.f32 0.0, %v757
        %v1782 = vsub.f32 0.0, %v758
        %v1783 = vsub.f32 0.0, %v759
        %v1784 = vsub.f32 0.0, %v760
        %v1785 = vsub.f32 0.0, %v761
        %v1786 = vsub.f32 0.0, %v762
        %v1787 = vsub.f32 0.0, %v763
        %v1788 = vsub.f32 0.0, %v764
        %v1789 = vsub.f32 0.0, %v765
        %v1790 = vsub.f32 0.0, %v766
        %v1791 = vsub.f32 0.0, %v767
        %v1792 = vsub.f32 0.0, %v768
        %v1793 = vsub.f32 0.0, %v769
        %v1794 = vsub.f32 0.0, %v770
        %v1795 = vsub.f32 0.0, %v771
        %v1796 = vsub.f32 0.0, %v772
        %v1797 = vsub.f32 0.0, %v773
        %v1798 = vsub.f32 0.0, %v774
        %v1799 = vsub.f32 0.0, %v775
        %v1800 = vsub.f32 0.0, %v776
        %v1801 = vsub.f32 0.0, %v777
        %v1802 = vsub.f32 0.0, %v778
        %v1803 = vsub.f32 0.0, %v779
        %v1804 = vsub.f32 0.0, %v780
        %v1805 = vsub.f32 0.0, %v781
        %v1806 = vsub.f32 0.0, %v782
        %v1807 = vsub.f32 0.0, %v783
        %v1808 = vsub.f32 0.0, %v784
        %v1809 = vsub.f32 0.0, %v785
        %v1810 = vsub.f32 0.0, %v786
        %v1811 = vsub.f32 0.0, %v787
        %v1812 = vsub.f32 0.0, %v788
        %v1813 = vsub.f32 0.0, %v789
        %v1814 = vsub.f32 0.0, %v790
        %v1815 = vsub.f32 0.0, %v791
        %v1816 = vsub.f32 0.0, %v792
        %v1817 = vsub.f32 0.0, %v793
        %v1818 = vsub.f32 0.0, %v794
        %v1819 = vsub.f32 0.0, %v795
        %v1820 = vsub.f32 0.0, %v796
        %v1821 = vsub.f32 0.0, %v797
        %v1822 = vsub.f32 0.0, %v798
        %v1823 = vsub.f32 0.0, %v799
        %v1824 = vsub.f32 0.0, %v800
        %v1825 = vsub.f32 0.0, %v801
        %v1826 = vsub.f32 0.0, %v802
        %v1827 = vsub.f32 0.0, %v803
        %v1828 = vsub.f32 0.0, %v804
        %v1829 = vsub.f32 0.0, %v805
        %v1830 = vsub.f32 0.0, %v806
        %v1831 = vsub.f32 0.0, %v807
        %v1832 = vsub.f32 0.0, %v808
        %v1833 = vsub.f32 0.0, %v809
        %v1834 = vsub.f32 0.0, %v810
        %v1835 = vsub.f32 0.0, %v811
        %v1836 = vsub.f32 0.0, %v812
        %v1837 = vsub.f32 0.0, %v813
        %v1838 = vsub.f32 0.0, %v814
        %v1839 = vsub.f32 0.0, %v815
        %v1840 = vsub.f32 0.0, %v816
        %v1841 = vsub.f32 0.0, %v817
        %v1842 = vsub.f32 0.0, %v818
        %v1843 = vsub.f32 0.0, %v819
        %v1844 = vsub.f32 0.0, %v820
        %v1845 = vsub.f32 0.0, %v821
        %v1846 = vsub.f32 0.0, %v822
        %v1847 = vsub.f32 0.0, %v823
        %v1848 = vsub.f32 0.0, %v824
        %v1849 = vsub.f32 0.0, %v825
        %v1850 = vsub.f32 0.0, %v826
        %v1851 = vsub.f32 0.0, %v827
        %v1852 = vsub.f32 0.0, %v828
        %v1853 = vsub.f32 0.0, %v829
        %v1854 = vsub.f32 0.0, %v830
        %v1855 = vsub.f32 0.0, %v831
        %v1856 = vsub.f32 0.0, %v832
        %v1857 = vsub.f32 0.0, %v833
        %v1858 = vsub.f32 0.0, %v834
        %v1859 = vsub.f32 0.0, %v835
        %v1860 = vsub.f32 0.0, %v836
        %v1861 = vsub.f32 0.0, %v837
        %v1862 = vsub.f32 0.0, %v838
        %v1863 = vsub.f32 0.0, %v839
        %v1864 = vsub.f32 0.0, %v840
        %v1865 = vsub.f32 0.0, %v841
        %v1866 = vsub.f32 0.0, %v842
        %v1867 = vsub.f32 0.0, %v843
        %v1868 = vsub.f32 0.0, %v844
        %v1869 = vsub.f32 0.0, %v845
        %v1870 = vsub.f32 0.0, %v846
        %v1871 = vsub.f32 0.0, %v847
        %v1872 = vsub.f32 0.0, %v848
        %v1873 = vsub.f32 0.0, %v849
        %v1874 = vsub.f32 0.0, %v850
        %v1875 = vsub.f32 0.0, %v851
        %v1876 = vsub.f32 0.0, %v852
        %v1877 = vsub.f32 0.0, %v853
        %v1878 = vsub.f32 0.0, %v854
        %v1879 = vsub.f32 0.0, %v855
        %v1880 = vsub.f32 0.0, %v856
        %v1881 = vsub.f32 0.0, %v857
        %v1882 = vsub.f32 0.0, %v858
        %v1883 = vsub.f32 0.0, %v859
        %v1884 = vsub.f32 0.0, %v860
        %v1885 = vsub.f32 0.0, %v861
        %v1886 = vsub.f32 0.0, %v862
        %v1887 = vsub.f32 0.0, %v863
        %v1888 = vsub.f32 0.0, %v864
        %v1889 = vsub.f32 0.0, %v865
        %v1890 = vsub.f32 0.0, %v866
        %v1891 = vsub.f32 0.0, %v867
        %v1892 = vsub.f32 0.0, %v868
        %v1893 = vsub.f32 0.0, %v869
        %v1894 = vsub.f32 0.0, %v870
        %v1895 = vsub.f32 0.0, %v871
        %v1896 = vsub.f32 0.0, %v872
        %v1897 = vsub.f32 0.0, %v873
        %v1898 = vsub.f32 0.0, %v874
        %v1899 = vsub.f32 0.0, %v875
        %v1900 = vsub.f32 0.0, %v876
        %v1901 = vsub.f32 0.0, %v877
        %v1902 = vsub.f32 0.0, %v878
        %v1903 = vsub.f32 0.0, %v879
        %v1904 = vsub.f32 0.0, %v880
        %v1905 = vsub.f32 0.0, %v881
        %v1906 = vsub.f32 0.0, %v882
        %v1907 = vsub.f32 0.0, %v883
        %v1908 = vsub.f32 0.0, %v884
        %v1909 = vsub.f32 0.0, %v885
        %v1910 = vsub.f32 0.0, %v886
        %v1911 = vsub.f32 0.0, %v887
        %v1912 = vsub.f32 0.0, %v888
        %v1913 = vsub.f32 0.0, %v889
        %v1914 = vsub.f32 0.0, %v890
        %v1915 = vsub.f32 0.0, %v891
        %v1916 = vsub.f32 0.0, %v892
        %v1917 = vsub.f32 0.0, %v893
        %v1918 = vsub.f32 0.0, %v894
        %v1919 = vsub.f32 0.0, %v895
        %v1920 = vsub.f32 0.0, %v896
        %v1921 = vsub.f32 0.0, %v897
        %v1922 = vsub.f32 0.0, %v898
        %v1923 = vsub.f32 0.0, %v899
        %v1924 = vsub.f32 0.0, %v900
        %v1925 = vsub.f32 0.0, %v901
        %v1926 = vsub.f32 0.0, %v902
        %v1927 = vsub.f32 0.0, %v903
        %v1928 = vsub.f32 0.0, %v904
        %v1929 = vsub.f32 0.0, %v905
        %v1930 = vsub.f32 0.0, %v906
        %v1931 = vsub.f32 0.0, %v907
        %v1932 = vsub.f32 0.0, %v908
        %v1933 = vsub.f32 0.0, %v909
        %v1934 = vsub.f32 0.0, %v910
        %v1935 = vsub.f32 0.0, %v911
        %v1936 = vsub.f32 0.0, %v912
        %v1937 = vsub.f32 0.0, %v913
        %v1938 = vsub.f32 0.0, %v914
        %v1939 = vsub.f32 0.0, %v915
        %v1940 = vsub.f32 0.0, %v916
        %v1941 = vsub.f32 0.0, %v917
        %v1942 = vsub.f32 0.0, %v918
        %v1943 = vsub.f32 0.0, %v919
        %v1944 = vsub.f32 0.0, %v920
        %v1945 = vsub.f32 0.0, %v921
        %v1946 = vsub.f32 0.0, %v922
        %v1947 = vsub.f32 0.0, %v923
        %v1948 = vsub.f32 0.0, %v924
        %v1949 = vsub.f32 0.0, %v925
        %v1950 = vsub.f32 0.0, %v926
        %v1951 = vsub.f32 0.0, %v927
        %v1952 = vsub.f32 0.0, %v928
        %v1953 = vsub.f32 0.0, %v929
        %v1954 = vsub.f32 0.0, %v930
        %v1955 = vsub.f32 0.0, %v931
        %v1956 = vsub.f32 0.0, %v932
        %v1957 = vsub.f32 0.0, %v933
        %v1958 = vsub.f32 0.0, %v934
        %v1959 = vsub.f32 0.0, %v935
        %v1960 = vsub.f32 0.0, %v936
        %v1961 = vsub.f32 0.0, %v937
        %v1962 = vsub.f32 0.0, %v938
        %v1963 = vsub.f32 0.0, %v939
        %v1964 = vsub.f32 0.0, %v940
        %v1965 = vsub.f32 0.0, %v941
        %v1966 = vsub.f32 0.0, %v942
        %v1967 = vsub.f32 0.0, %v943
        %v1968 = vsub.f32 0.0, %v944
        %v1969 = vsub.f32 0.0, %v945
        %v1970 = vsub.f32 0.0, %v946
        %v1971 = vsub.f32 0.0, %v947
        %v1972 = vsub.f32 0.0, %v948
        %v1973 = vsub.f32 0.0, %v949
        %v1974 = vsub.f32 0.0, %v950
        %v1975 = vsub.f32 0.0, %v951
        %v1976 = vsub.f32 0.0, %v952
        %v1977 = vsub.f32 0.0, %v953
        %v1978 = vsub.f32 0.0, %v954
        %v1979 = vsub.f32 0.0, %v955
        %v1980 = vsub.f32 0.0, %v956
        %v1981 = vsub.f32 0.0, %v957
        %v1982 = vsub.f32 0.0, %v958
        %v1983 = vsub.f32 0.0, %v959
        %v1984 = vsub.f32 0.0, %v960
        %v1985 = vsub.f32 0.0, %v961
        %v1986 = vsub.f32 0.0, %v962
        %v1987 = vsub.f32 0.0, %v963
        %v1988 = vsub.f32 0.0, %v964
        %v1989 = vsub.f32 0.0, %v965
        %v1990 = vsub.f32 0.0, %v966
        %v1991 = vsub.f32 0.0, %v967
        %v1992 = vsub.f32 0.0, %v968
        %v1993 = vsub.f32 0.0, %v969
        %v1994 = vsub.f32 0.0, %v970
        %v1995 = vsub.f32 0.0, %v971
        %v1996 = vsub.f32 0.0, %v972
        %v1997 = vsub.f32 0.0, %v973
        %v1998 = vsub.f32 0.0, %v974
        %v1999 = vsub.f32 0.0, %v975
        %v2000 = vsub.f32 0.0, %v976
        %v2001 = vsub.f32 0.0, %v977
        %v2002 = vsub.f32 0.0, %v978
        %v2003 = vsub.f32 0.0, %v979
        %v2004 = vsub.f32 0.0, %v980
        %v2005 = vsub.f32 0.0, %v981
        %v2006 = vsub.f32 0.0, %v982
        %v2007 = vsub.f32 0.0, %v983
        %v2008 = vsub.f32 0.0, %v984
        %v2009 = vsub.f32 0.0, %v985
        %v2010 = vsub.f32 0.0, %v986
        %v2011 = vsub.f32 0.0, %v987
        %v2012 = vsub.f32 0.0, %v988
        %v2013 = vsub.f32 0.0, %v989
        %v2014 = vsub.f32 0.0, %v990
        %v2015 = vsub.f32 0.0, %v991
        %v2016 = vsub.f32 0.0, %v992
        %v2017 = vsub.f32 0.0, %v993
        %v2018 = vsub.f32 0.0, %v994
        %v2019 = vsub.f32 0.0, %v995
        %v2020 = vsub.f32 0.0, %v996
        %v2021 = vsub.f32 0.0, %v997
        %v2022 = vsub.f32 0.0, %v998
        %v2023 = vsub.f32 0.0, %v999
        %v2024 = vsub.f32 0.0, %v1000
        %v2025 = vsub.f32 0.0, %v1001
        %v2026 = vsub.f32 0.0, %v1002
        %v2027 = vsub.f32 0.0, %v1003
        %v2028 = vsub.f32 0.0, %v1004
        %v2029 = vsub.f32 0.0, %v1005
        %v2030 = vsub.f32 0.0, %v1006
        %v2031 = vsub.f32 0.0, %v1007
        %v2032 = vsub.f32 0.0, %v1008
        %v2033 = vsub.f32 0.0, %v1009
        %v2034 = vsub.f32 0.0, %v1010
        %v2035 = vsub.f32 0.0, %v1011
        %v2036 = vsub.f32 0.0, %v1012
        %v2037 = vsub.f32 0.0, %v1013
        %v2038 = vsub.f32 0.0, %v1014
        %v2039 = vsub.f32 0.0, %v1015
        %v2040 = vsub.f32 0.0, %v1016
        %v2041 = vsub.f32 0.0, %v1017
        %v2042 = vsub.f32 0.0, %v1018
        %v2043 = vsub.f32 0.0, %v1019
        %v2044 = vsub.f32 0.0, %v1020
        %v2045 = vsub.f32 0.0, %v1021
        %v2046 = vsub.f32 0.0, %v1022
        %v2047 = vsub.f32 0.0, %v1023
        %v2048 = vsub.f32 0.0, %v1024
        %v2049 = vsub.f32 0.0, %v1025
        %v2050 = vsub.f32 0.0, %v1026
        %v2051 = vsub.f32 0.0, %v1027
        %v2052 = vsub.f32 0.0, %v1028
        %v2053 = vsub.f32 0.0, %v1029
        %v2054 = vsub.f32 0.0, %v1030
        %v2055 = vsub.f32 0.0, %v1031
        %v2056 = vsub.f32 0.0, %v1032
        %v2057 = vsub.f32 0.0, %v1033
        %v2058 = vsub.f32 0.0, %v1034
        %v2059 = vsub.f32 0.0, %v1035
        %v2060 = vsub.f32 0.0, %v1036
        %v2061 = vsub.f32 0.0, %v1037
        %v2062 = vsub.f32 0.0, %v1038
        %v2063 = vsub.f32 0.0, %v1039
        %v2064 = vsub.f32 0.0, %v1040
        %v2065 = vsub.f32 0.0, %v1041
        %v2066 = vsub.f32 0.0, %v1042
        %v2067 = vsub.f32 0.0, %v1043
        %v2068 = vsub.f32 0.0, %v1044
        %v2069 = vsub.f32 0.0, %v1045
        %v2070 = vsub.f32 0.0, %v1046
        %v2071 = vsub.f32 0.0, %v1047
        %v2072 = vsub.f32 0.0, %v1048
        %v2073 = vsub.f32 0.0, %v1049
        %v2074 = vsub.f32 0.0, %v1050
        %v2075 = vsub.f32 0.0, %v1051
        %v2076 = vsub.f32 0.0, %v1052
        %v2077 = vsub.f32 0.0, %v1053
        %v2078 = vsub.f32 0.0, %v1054
        %v2079 = vsub.f32 0.0, %v1055
        %v2080 = vsub.f32 0.0, %v1056
        %v2081 = vsub.f32 0.0, %v1057
        %v2082 = vsub.f32 0.0, %v1058
        %v2083 = vsub.f32 0.0, %v1059
        %v2084 = vsub.f32 0.0, %v1060
        %v2085 = vsub.f32 0.0, %v1061
        %v2086 = vsub.f32 0.0, %v1062
        %v2087 = vsub.f32 0.0, %v1063
        %v2088 = vsub.f32 0.0, %v1064
        %v2089 = vsub.f32 0.0, %v1065
        %v2090 = vsub.f32 0.0, %v1066
        %v2091 = vsub.f32 0.0, %v1067
        %v2092 = vsub.f32 0.0, %v1068
        %v2093 = vsub.f32 0.0, %v1069
        %v2094 = vsub.f32 0.0, %v1070
        %v2095 = vsub.f32 0.0, %v1071
        %v2096 = vsub.f32 0.0, %v1072
        %v2097 = vsub.f32 0.0, %v1073
        %v2098 = vsub.f32 0.0, %v1074
        %v2099 = vsub.f32 0.0, %v1075
        %v2100 = vsub.f32 0.0, %v1076
        %v2101 = vsub.f32 0.0, %v1077
        %v2102 = vsub.f32 0.0, %v1078
        %v2103 = vsub.f32 0.0, %v1079
        %v2104 = vsub.f32 0.0, %v1080
        %v2105 = vsub.f32 0.0, %v1081
        %v2106 = vsub.f32 0.0, %v1082
        %v2107 = vsub.f32 0.0, %v1083
        %v2108 = vsub.f32 0.0, %v1084
        %v2109 = vsub.f32 0.0, %v1085
        %v2110 = vsub.f32 0.0, %v1086
        %v2111 = vsub.f32 0.0, %v1087
        %v2112 = vsub.f32 0.0, %v1088
        %v2113 = vsub.f32 0.0, %v1089
        %v2114 = vsub.f32 0.0, %v1090
        %v2115 = vsub.f32 0.0, %v1091
        %v2116 = vsub.f32 0.0, %v1092
        %v2117 = vsub.f32 0.0, %v1093
        %v2118 = vsub.f32 0.0, %v1094
        %v2119 = vsub.f32 0.0, %v1095
        %v2120 = vsub.f32 0.0, %v1096
        %v2121 = vsub.f32 0.0, %v1097
        %v2122 = vsub.f32 0.0, %v1098
        %v2123 = vsub.f32 0.0, %v1099
        %v2124 = vsub.f32 0.0, %v1100
        %v2125 = vsub.f32 0.0, %v1101
        %v2126 = vsub.f32 0.0, %v1102
        %v2127 = vsub.f32 0.0, %v1103
        %v2128 = vsub.f32 0.0, %v1104
        %v2129 = vsub.f32 0.0, %v1105
        %v2130 = vsub.f32 0.0, %v1106
        %v2131 = vsub.f32 0.0, %v1107
        %v2132 = vsub.f32 0.0, %v1108
        %v2133 = vsub.f32 0.0, %v1109
        %v2134 = vsub.f32 0.0, %v1110
        %v2135 = vsub.f32 0.0, %v1111
        %v2136 = vsub.f32 0.0, %v1112
        %v2137 = vsub.f32 0.0, %v1113
        %v2138 = vsub.f32 0.0, %v1114
        %v2139 = vsub.f32 0.0, %v1115
        %v2140 = vsub.f32 0.0, %v1116
        %v2141 = vsub.f32 0.0, %v1117
        %v2142 = vsub.f32 0.0, %v1118
        %v2143 = vsub.f32 0.0, %v1119
        %v2144 = vsub.f32 0.0, %v1120
        %v2145 = vsub.f32 0.0, %v1121
        %v2146 = vsub.f32 0.0, %v1122
        %v2147 = vsub.f32 0.0, %v1123
        %v2148 = vsub.f32 0.0, %v1124
        %v2149 = vsub.f32 0.0, %v1125
        %v2150 = vsub.f32 0.0, %v1126
        %v2151 = vsub.f32 0.0, %v1127
        %v2152 = vsub.f32 0.0, %v1128
        %v2153 = vsub.f32 0.0, %v1129
        %v2154 = vsub.f32 0.0, %v1130
        %v2155 = vsub.f32 0.0, %v1131
        %v2156 = vsub.f32 0.0, %v1132
        %v2157 = vsub.f32 0.0, %v1133
        %v2158 = vsub.f32 0.0, %v1134
        %v2159 = vsub.f32 0.0, %v1135
        %v2160 = vsub.f32 0.0, %v1136
        %v2161 = vsub.f32 0.0, %v1137
        %v2162 = vsub.f32 0.0, %v1138
        %v2163 = vsub.f32 0.0, %v1139
        %v2164 = vsub.f32 0.0, %v1140
        %v2165 = vsub.f32 0.0, %v1141
        %v2166 = vsub.f32 0.0, %v1142
        %v2167 = vsub.f32 0.0, %v1143
        %v2168 = vsub.f32 0.0, %v1144
        %v2169 = vsub.f32 0.0, %v1145
        %v2170 = vsub.f32 0.0, %v1146
        %v2171 = vsub.f32 0.0, %v1147
        %v2172 = vsub.f32 0.0, %v1148
        %v2173 = vsub.f32 0.0, %v1149
        %v2174 = vsub.f32 0.0, %v1150
        %v2175 = vsub.f32 0.0, %v1151
        %v2176 = vsub.f32 0.0, %v1152
        %v2177 = vsub.f32 0.0, %v1153
        %v2178 = vsub.f32 0.0, %v1154
        %v2179 = vsub.f32 0.0, %v1155
        %v2180 = vsub.f32 0.0, %v1156
        %v2181 = vsub.f32 0.0, %v1157
        %v2182 = vsub.f32 0.0, %v1158
        %v2183 = vsub.f32 0.0, %v1159
        %v2184 = vsub.f32 0.0, %v1160
        %v2185 = vsub.f32 0.0, %v1161
        %v2186 = vsub.f32 0.0, %v1162
        %v2187 = vsub.f32 0.0, %v1163
        %v2188 = vsub.f32 0.0, %v1164
        %v2189 = vsub.f32 0.0, %v1165
        %v2190 = vsub.f32 0.0, %v1166
        %v2191 = vsub.f32 0.0, %v1167
        %v2192 = vsub.f32 0.0, %v1168
        %v2193 = vsub.f32 0.0, %v1169
        %v2194 = vsub.f32 0.0, %v1170
        %v2195 = vsub.f32 0.0, %v1171
        %v2196 = vsub.f32 0.0, %v1172
        %v2197 = vsub.f32 0.0, %v1173
        %v2198 = vsub.f32 0.0, %v1174
        %v2199 = vsub.f32 0.0, %v1175
        %v2200 = vsub.f32 0.0, %v1176
        %v2201 = vsub.f32 0.0, %v1177
        %v2202 = vsub.f32 0.0, %v1178
        %2203 = vst [vmem:[%s142] sm:$0xff] %v1179
        %2204 = vst [vmem:[%s142 + $0x8] sm:$0xff] %v1180
        %2205 = vst [vmem:[%s142 + $0x10] sm:$0xff] %v1181
        %2206 = vst [vmem:[%s142 + $0x18] sm:$0xff] %v1182
        %2207 = vst [vmem:[%s142 + $0x20] sm:$0xff] %v1183
        %2208 = vst [vmem:[%s142 + $0x28] sm:$0xff] %v1184
        %2209 = vst [vmem:[%s142 + $0x30] sm:$0xff] %v1185
        %2210 = vst [vmem:[%s142 + $0x38] sm:$0xff] %v1186
        %2211 = vst [vmem:[%s142 + $0x40] sm:$0xff] %v1187
        %2212 = vst [vmem:[%s142 + $0x48] sm:$0xff] %v1188
        %2213 = vst [vmem:[%s142 + $0x50] sm:$0xff] %v1189
        %2214 = vst [vmem:[%s142 + $0x58] sm:$0xff] %v1190
        %2215 = vst [vmem:[%s142 + $0x60] sm:$0xff] %v1191
        %2216 = vst [vmem:[%s142 + $0x68] sm:$0xff] %v1192
        %2217 = vst [vmem:[%s142 + $0x70] sm:$0xff] %v1193
        %2218 = vst [vmem:[%s142 + $0x78] sm:$0xff] %v1194
        %2219 = vst [vmem:[%s142 + $0x80] sm:$0xff] %v1195
        %2220 = vst [vmem:[%s142 + $0x88] sm:$0xff] %v1196
        %2221 = vst [vmem:[%s142 + $0x90] sm:$0xff] %v1197
        %2222 = vst [vmem:[%s142 + $0x98] sm:$0xff] %v1198
        %2223 = vst [vmem:[%s142 + $0xa0] sm:$0xff] %v1199
        %2224 = vst [vmem:[%s142 + $0xa8] sm:$0xff] %v1200
        %2225 = vst [vmem:[%s142 + $0xb0] sm:$0xff] %v1201
        %2226 = vst [vmem:[%s142 + $0xb8] sm:$0xff] %v1202
        %2227 = vst [vmem:[%s142 + $0xc0] sm:$0xff] %v1203
        %2228 = vst [vmem:[%s142 + $0xc8] sm:$0xff] %v1204
        %2229 = vst [vmem:[%s142 + $0xd0] sm:$0xff] %v1205
        %2230 = vst [vmem:[%s142 + $0xd8] sm:$0xff] %v1206
        %2231 = vst [vmem:[%s142 + $0xe0] sm:$0xff] %v1207
        %2232 = vst [vmem:[%s142 + $0xe8] sm:$0xff] %v1208
        %2233 = vst [vmem:[%s142 + $0xf0] sm:$0xff] %v1209
        %2234 = vst [vmem:[%s142 + $0xf8] sm:$0xff] %v1210
        %2235 = vst [vmem:[%s142 + $0x100] sm:$0xff] %v1211
        %2236 = vst [vmem:[%s142 + $0x108] sm:$0xff] %v1212
        %2237 = vst [vmem:[%s142 + $0x110] sm:$0xff] %v1213
        %2238 = vst [vmem:[%s142 + $0x118] sm:$0xff] %v1214
        %2239 = vst [vmem:[%s142 + $0x120] sm:$0xff] %v1215
        %2240 = vst [vmem:[%s142 + $0x128] sm:$0xff] %v1216
        %2241 = vst [vmem:[%s142 + $0x130] sm:$0xff] %v1217
        %2242 = vst [vmem:[%s142 + $0x138] sm:$0xff] %v1218
        %2243 = vst [vmem:[%s142 + $0x140] sm:$0xff] %v1219
        %2244 = vst [vmem:[%s142 + $0x148] sm:$0xff] %v1220
        %2245 = vst [vmem:[%s142 + $0x150] sm:$0xff] %v1221
        %2246 = vst [vmem:[%s142 + $0x158] sm:$0xff] %v1222
        %2247 = vst [vmem:[%s142 + $0x160] sm:$0xff] %v1223
        %2248 = vst [vmem:[%s142 + $0x168] sm:$0xff] %v1224
        %2249 = vst [vmem:[%s142 + $0x170] sm:$0xff] %v1225
        %2250 = vst [vmem:[%s142 + $0x178] sm:$0xff] %v1226
        %2251 = vst [vmem:[%s142 + $0x180] sm:$0xff] %v1227
        %2252 = vst [vmem:[%s142 + $0x188] sm:$0xff] %v1228
        %2253 = vst [vmem:[%s142 + $0x190] sm:$0xff] %v1229
        %2254 = vst [vmem:[%s142 + $0x198] sm:$0xff] %v1230
        %2255 = vst [vmem:[%s142 + $0x1a0] sm:$0xff] %v1231
        %2256 = vst [vmem:[%s142 + $0x1a8] sm:$0xff] %v1232
        %2257 = vst [vmem:[%s142 + $0x1b0] sm:$0xff] %v1233
        %2258 = vst [vmem:[%s142 + $0x1b8] sm:$0xff] %v1234
        %2259 = vst [vmem:[%s142 + $0x1c0] sm:$0xff] %v1235
        %2260 = vst [vmem:[%s142 + $0x1c8] sm:$0xff] %v1236
        %2261 = vst [vmem:[%s142 + $0x1d0] sm:$0xff] %v1237
        %2262 = vst [vmem:[%s142 + $0x1d8] sm:$0xff] %v1238
        %2263 = vst [vmem:[%s142 + $0x1e0] sm:$0xff] %v1239
        %2264 = vst [vmem:[%s142 + $0x1e8] sm:$0xff] %v1240
        %2265 = vst [vmem:[%s142 + $0x1f0] sm:$0xff] %v1241
        %2266 = vst [vmem:[%s142 + $0x1f8] sm:$0xff] %v1242
        %2267 = vst [vmem:[%s142 + $0x200] sm:$0xff] %v1243
        %2268 = vst [vmem:[%s142 + $0x208] sm:$0xff] %v1244
        %2269 = vst [vmem:[%s142 + $0x210] sm:$0xff] %v1245
        %2270 = vst [vmem:[%s142 + $0x218] sm:$0xff] %v1246
        %2271 = vst [vmem:[%s142 + $0x220] sm:$0xff] %v1247
        %2272 = vst [vmem:[%s142 + $0x228] sm:$0xff] %v1248
        %2273 = vst [vmem:[%s142 + $0x230] sm:$0xff] %v1249
        %2274 = vst [vmem:[%s142 + $0x238] sm:$0xff] %v1250
        %2275 = vst [vmem:[%s142 + $0x240] sm:$0xff] %v1251
        %2276 = vst [vmem:[%s142 + $0x248] sm:$0xff] %v1252
        %2277 = vst [vmem:[%s142 + $0x250] sm:$0xff] %v1253
        %2278 = vst [vmem:[%s142 + $0x258] sm:$0xff] %v1254
        %2279 = vst [vmem:[%s142 + $0x260] sm:$0xff] %v1255
        %2280 = vst [vmem:[%s142 + $0x268] sm:$0xff] %v1256
        %2281 = vst [vmem:[%s142 + $0x270] sm:$0xff] %v1257
        %2282 = vst [vmem:[%s142 + $0x278] sm:$0xff] %v1258
        %2283 = vst [vmem:[%s142 + $0x280] sm:$0xff] %v1259
        %2284 = vst [vmem:[%s142 + $0x288] sm:$0xff] %v1260
        %2285 = vst [vmem:[%s142 + $0x290] sm:$0xff] %v1261
        %2286 = vst [vmem:[%s142 + $0x298] sm:$0xff] %v1262
        %2287 = vst [vmem:[%s142 + $0x2a0] sm:$0xff] %v1263
        %2288 = vst [vmem:[%s142 + $0x2a8] sm:$0xff] %v1264
        %2289 = vst [vmem:[%s142 + $0x2b0] sm:$0xff] %v1265
        %2290 = vst [vmem:[%s142 + $0x2b8] sm:$0xff] %v1266
        %2291 = vst [vmem:[%s142 + $0x2c0] sm:$0xff] %v1267
        %2292 = vst [vmem:[%s142 + $0x2c8] sm:$0xff] %v1268
        %2293 = vst [vmem:[%s142 + $0x2d0] sm:$0xff] %v1269
        %2294 = vst [vmem:[%s142 + $0x2d8] sm:$0xff] %v1270
        %2295 = vst [vmem:[%s142 + $0x2e0] sm:$0xff] %v1271
        %2296 = vst [vmem:[%s142 + $0x2e8] sm:$0xff] %v1272
        %2297 = vst [vmem:[%s142 + $0x2f0] sm:$0xff] %v1273
        %2298 = vst [vmem:[%s142 + $0x2f8] sm:$0xff] %v1274
        %2299 = vst [vmem:[%s142 + $0x300] sm:$0xff] %v1275
        %2300 = vst [vmem:[%s142 + $0x308] sm:$0xff] %v1276
        %2301 = vst [vmem:[%s142 + $0x310] sm:$0xff] %v1277
        %2302 = vst [vmem:[%s142 + $0x318] sm:$0xff] %v1278
        %2303 = vst [vmem:[%s142 + $0x320] sm:$0xff] %v1279
        %2304 = vst [vmem:[%s142 + $0x328] sm:$0xff] %v1280
        %2305 = vst [vmem:[%s142 + $0x330] sm:$0xff] %v1281
        %2306 = vst [vmem:[%s142 + $0x338] sm:$0xff] %v1282
        %2307 = vst [vmem:[%s142 + $0x340] sm:$0xff] %v1283
        %2308 = vst [vmem:[%s142 + $0x348] sm:$0xff] %v1284
        %2309 = vst [vmem:[%s142 + $0x350] sm:$0xff] %v1285
        %2310 = vst [vmem:[%s142 + $0x358] sm:$0xff] %v1286
        %2311 = vst [vmem:[%s142 + $0x360] sm:$0xff] %v1287
        %2312 = vst [vmem:[%s142 + $0x368] sm:$0xff] %v1288
        %2313 = vst [vmem:[%s142 + $0x370] sm:$0xff] %v1289
        %2314 = vst [vmem:[%s142 + $0x378] sm:$0xff] %v1290
        %2315 = vst [vmem:[%s142 + $0x380] sm:$0xff] %v1291
        %2316 = vst [vmem:[%s142 + $0x388] sm:$0xff] %v1292
        %2317 = vst [vmem:[%s142 + $0x390] sm:$0xff] %v1293
        %2318 = vst [vmem:[%s142 + $0x398] sm:$0xff] %v1294
        %2319 = vst [vmem:[%s142 + $0x3a0] sm:$0xff] %v1295
        %2320 = vst [vmem:[%s142 + $0x3a8] sm:$0xff] %v1296
        %2321 = vst [vmem:[%s142 + $0x3b0] sm:$0xff] %v1297
        %2322 = vst [vmem:[%s142 + $0x3b8] sm:$0xff] %v1298
        %2323 = vst [vmem:[%s142 + $0x3c0] sm:$0xff] %v1299
        %2324 = vst [vmem:[%s142 + $0x3c8] sm:$0xff] %v1300
        %2325 = vst [vmem:[%s142 + $0x3d0] sm:$0xff] %v1301
        %2326 = vst [vmem:[%s142 + $0x3d8] sm:$0xff] %v1302
        %2327 = vst [vmem:[%s142 + $0x3e0] sm:$0xff] %v1303
        %2328 = vst [vmem:[%s142 + $0x3e8] sm:$0xff] %v1304
        %2329 = vst [vmem:[%s142 + $0x3f0] sm:$0xff] %v1305
        %2330 = vst [vmem:[%s142 + $0x3f8] sm:$0xff] %v1306
        %2331 = vst [vmem:[%s142 + $0x400] sm:$0xff] %v1307
        %2332 = vst [vmem:[%s142 + $0x408] sm:$0xff] %v1308
        %2333 = vst [vmem:[%s142 + $0x410] sm:$0xff] %v1309
        %2334 = vst [vmem:[%s142 + $0x418] sm:$0xff] %v1310
        %2335 = vst [vmem:[%s142 + $0x420] sm:$0xff] %v1311
        %2336 = vst [vmem:[%s142 + $0x428] sm:$0xff] %v1312
        %2337 = vst [vmem:[%s142 + $0x430] sm:$0xff] %v1313
        %2338 = vst [vmem:[%s142 + $0x438] sm:$0xff] %v1314
        %2339 = vst [vmem:[%s142 + $0x440] sm:$0xff] %v1315
        %2340 = vst [vmem:[%s142 + $0x448] sm:$0xff] %v1316
        %2341 = vst [vmem:[%s142 + $0x450] sm:$0xff] %v1317
        %2342 = vst [vmem:[%s142 + $0x458] sm:$0xff] %v1318
        %2343 = vst [vmem:[%s142 + $0x460] sm:$0xff] %v1319
        %2344 = vst [vmem:[%s142 + $0x468] sm:$0xff] %v1320
        %2345 = vst [vmem:[%s142 + $0x470] sm:$0xff] %v1321
        %2346 = vst [vmem:[%s142 + $0x478] sm:$0xff] %v1322
        %2347 = vst [vmem:[%s142 + $0x480] sm:$0xff] %v1323
        %2348 = vst [vmem:[%s142 + $0x488] sm:$0xff] %v1324
        %2349 = vst [vmem:[%s142 + $0x490] sm:$0xff] %v1325
        %2350 = vst [vmem:[%s142 + $0x498] sm:$0xff] %v1326
        %2351 = vst [vmem:[%s142 + $0x4a0] sm:$0xff] %v1327
        %2352 = vst [vmem:[%s142 + $0x4a8] sm:$0xff] %v1328
        %2353 = vst [vmem:[%s142 + $0x4b0] sm:$0xff] %v1329
        %2354 = vst [vmem:[%s142 + $0x4b8] sm:$0xff] %v1330
        %2355 = vst [vmem:[%s142 + $0x4c0] sm:$0xff] %v1331
        %2356 = vst [vmem:[%s142 + $0x4c8] sm:$0xff] %v1332
        %2357 = vst [vmem:[%s142 + $0x4d0] sm:$0xff] %v1333
        %2358 = vst [vmem:[%s142 + $0x4d8] sm:$0xff] %v1334
        %2359 = vst [vmem:[%s142 + $0x4e0] sm:$0xff] %v1335
        %2360 = vst [vmem:[%s142 + $0x4e8] sm:$0xff] %v1336
        %2361 = vst [vmem:[%s142 + $0x4f0] sm:$0xff] %v1337
        %2362 = vst [vmem:[%s142 + $0x4f8] sm:$0xff] %v1338
        %2363 = vst [vmem:[%s142 + $0x500] sm:$0xff] %v1339
        %2364 = vst [vmem:[%s142 + $0x508] sm:$0xff] %v1340
        %2365 = vst [vmem:[%s142 + $0x510] sm:$0xff] %v1341
        %2366 = vst [vmem:[%s142 + $0x518] sm:$0xff] %v1342
        %2367 = vst [vmem:[%s142 + $0x520] sm:$0xff] %v1343
        %2368 = vst [vmem:[%s142 + $0x528] sm:$0xff] %v1344
        %2369 = vst [vmem:[%s142 + $0x530] sm:$0xff] %v1345
        %2370 = vst [vmem:[%s142 + $0x538] sm:$0xff] %v1346
        %2371 = vst [vmem:[%s142 + $0x540] sm:$0xff] %v1347
        %2372 = vst [vmem:[%s142 + $0x548] sm:$0xff] %v1348
        %2373 = vst [vmem:[%s142 + $0x550] sm:$0xff] %v1349
        %2374 = vst [vmem:[%s142 + $0x558] sm:$0xff] %v1350
        %2375 = vst [vmem:[%s142 + $0x560] sm:$0xff] %v1351
        %2376 = vst [vmem:[%s142 + $0x568] sm:$0xff] %v1352
        %2377 = vst [vmem:[%s142 + $0x570] sm:$0xff] %v1353
        %2378 = vst [vmem:[%s142 + $0x578] sm:$0xff] %v1354
        %2379 = vst [vmem:[%s142 + $0x580] sm:$0xff] %v1355
        %2380 = vst [vmem:[%s142 + $0x588] sm:$0xff] %v1356
        %2381 = vst [vmem:[%s142 + $0x590] sm:$0xff] %v1357
        %2382 = vst [vmem:[%s142 + $0x598] sm:$0xff] %v1358
        %2383 = vst [vmem:[%s142 + $0x5a0] sm:$0xff] %v1359
        %2384 = vst [vmem:[%s142 + $0x5a8] sm:$0xff] %v1360
        %2385 = vst [vmem:[%s142 + $0x5b0] sm:$0xff] %v1361
        %2386 = vst [vmem:[%s142 + $0x5b8] sm:$0xff] %v1362
        %2387 = vst [vmem:[%s142 + $0x5c0] sm:$0xff] %v1363
        %2388 = vst [vmem:[%s142 + $0x5c8] sm:$0xff] %v1364
        %2389 = vst [vmem:[%s142 + $0x5d0] sm:$0xff] %v1365
        %2390 = vst [vmem:[%s142 + $0x5d8] sm:$0xff] %v1366
        %2391 = vst [vmem:[%s142 + $0x5e0] sm:$0xff] %v1367
        %2392 = vst [vmem:[%s142 + $0x5e8] sm:$0xff] %v1368
        %2393 = vst [vmem:[%s142 + $0x5f0] sm:$0xff] %v1369
        %2394 = vst [vmem:[%s142 + $0x5f8] sm:$0xff] %v1370
        %2395 = vst [vmem:[%s142 + $0x600] sm:$0xff] %v1371
        %2396 = vst [vmem:[%s142 + $0x608] sm:$0xff] %v1372
        %2397 = vst [vmem:[%s142 + $0x610] sm:$0xff] %v1373
        %2398 = vst [vmem:[%s142 + $0x618] sm:$0xff] %v1374
        %2399 = vst [vmem:[%s142 + $0x620] sm:$0xff] %v1375
        %2400 = vst [vmem:[%s142 + $0x628] sm:$0xff] %v1376
        %2401 = vst [vmem:[%s142 + $0x630] sm:$0xff] %v1377
        %2402 = vst [vmem:[%s142 + $0x638] sm:$0xff] %v1378
        %2403 = vst [vmem:[%s142 + $0x640] sm:$0xff] %v1379
        %2404 = vst [vmem:[%s142 + $0x648] sm:$0xff] %v1380
        %2405 = vst [vmem:[%s142 + $0x650] sm:$0xff] %v1381
        %2406 = vst [vmem:[%s142 + $0x658] sm:$0xff] %v1382
        %2407 = vst [vmem:[%s142 + $0x660] sm:$0xff] %v1383
        %2408 = vst [vmem:[%s142 + $0x668] sm:$0xff] %v1384
        %2409 = vst [vmem:[%s142 + $0x670] sm:$0xff] %v1385
        %2410 = vst [vmem:[%s142 + $0x678] sm:$0xff] %v1386
        %2411 = vst [vmem:[%s142 + $0x680] sm:$0xff] %v1387
        %2412 = vst [vmem:[%s142 + $0x688] sm:$0xff] %v1388
        %2413 = vst [vmem:[%s142 + $0x690] sm:$0xff] %v1389
        %2414 = vst [vmem:[%s142 + $0x698] sm:$0xff] %v1390
        %2415 = vst [vmem:[%s142 + $0x6a0] sm:$0xff] %v1391
        %2416 = vst [vmem:[%s142 + $0x6a8] sm:$0xff] %v1392
        %2417 = vst [vmem:[%s142 + $0x6b0] sm:$0xff] %v1393
        %2418 = vst [vmem:[%s142 + $0x6b8] sm:$0xff] %v1394
        %2419 = vst [vmem:[%s142 + $0x6c0] sm:$0xff] %v1395
        %2420 = vst [vmem:[%s142 + $0x6c8] sm:$0xff] %v1396
        %2421 = vst [vmem:[%s142 + $0x6d0] sm:$0xff] %v1397
        %2422 = vst [vmem:[%s142 + $0x6d8] sm:$0xff] %v1398
        %2423 = vst [vmem:[%s142 + $0x6e0] sm:$0xff] %v1399
        %2424 = vst [vmem:[%s142 + $0x6e8] sm:$0xff] %v1400
        %2425 = vst [vmem:[%s142 + $0x6f0] sm:$0xff] %v1401
        %2426 = vst [vmem:[%s142 + $0x6f8] sm:$0xff] %v1402
        %2427 = vst [vmem:[%s142 + $0x700] sm:$0xff] %v1403
        %2428 = vst [vmem:[%s142 + $0x708] sm:$0xff] %v1404
        %2429 = vst [vmem:[%s142 + $0x710] sm:$0xff] %v1405
        %2430 = vst [vmem:[%s142 + $0x718] sm:$0xff] %v1406
        %2431 = vst [vmem:[%s142 + $0x720] sm:$0xff] %v1407
        %2432 = vst [vmem:[%s142 + $0x728] sm:$0xff] %v1408
        %2433 = vst [vmem:[%s142 + $0x730] sm:$0xff] %v1409
        %2434 = vst [vmem:[%s142 + $0x738] sm:$0xff] %v1410
        %2435 = vst [vmem:[%s142 + $0x740] sm:$0xff] %v1411
        %2436 = vst [vmem:[%s142 + $0x748] sm:$0xff] %v1412
        %2437 = vst [vmem:[%s142 + $0x750] sm:$0xff] %v1413
        %2438 = vst [vmem:[%s142 + $0x758] sm:$0xff] %v1414
        %2439 = vst [vmem:[%s142 + $0x760] sm:$0xff] %v1415
        %2440 = vst [vmem:[%s142 + $0x768] sm:$0xff] %v1416
        %2441 = vst [vmem:[%s142 + $0x770] sm:$0xff] %v1417
        %2442 = vst [vmem:[%s142 + $0x778] sm:$0xff] %v1418
        %2443 = vst [vmem:[%s142 + $0x780] sm:$0xff] %v1419
        %2444 = vst [vmem:[%s142 + $0x788] sm:$0xff] %v1420
        %2445 = vst [vmem:[%s142 + $0x790] sm:$0xff] %v1421
        %2446 = vst [vmem:[%s142 + $0x798] sm:$0xff] %v1422
        %2447 = vst [vmem:[%s142 + $0x7a0] sm:$0xff] %v1423
        %2448 = vst [vmem:[%s142 + $0x7a8] sm:$0xff] %v1424
        %2449 = vst [vmem:[%s142 + $0x7b0] sm:$0xff] %v1425
        %2450 = vst [vmem:[%s142 + $0x7b8] sm:$0xff] %v1426
        %2451 = vst [vmem:[%s142 + $0x7c0] sm:$0xff] %v1427
        %2452 = vst [vmem:[%s142 + $0x7c8] sm:$0xff] %v1428
        %2453 = vst [vmem:[%s142 + $0x7d0] sm:$0xff] %v1429
        %2454 = vst [vmem:[%s142 + $0x7d8] sm:$0xff] %v1430
        %2455 = vst [vmem:[%s142 + $0x7e0] sm:$0xff] %v1431
        %2456 = vst [vmem:[%s142 + $0x7e8] sm:$0xff] %v1432
        %2457 = vst [vmem:[%s142 + $0x7f0] sm:$0xff] %v1433
        %2458 = vst [vmem:[%s142 + $0x7f8] sm:$0xff] %v1434
        %2459 = vst [vmem:[%s142 + $0x800] sm:$0xff] %v1435
        %2460 = vst [vmem:[%s142 + $0x808] sm:$0xff] %v1436
        %2461 = vst [vmem:[%s142 + $0x810] sm:$0xff] %v1437
        %2462 = vst [vmem:[%s142 + $0x818] sm:$0xff] %v1438
        %2463 = vst [vmem:[%s142 + $0x820] sm:$0xff] %v1439
        %2464 = vst [vmem:[%s142 + $0x828] sm:$0xff] %v1440
        %2465 = vst [vmem:[%s142 + $0x830] sm:$0xff] %v1441
        %2466 = vst [vmem:[%s142 + $0x838] sm:$0xff] %v1442
        %2467 = vst [vmem:[%s142 + $0x840] sm:$0xff] %v1443
        %2468 = vst [vmem:[%s142 + $0x848] sm:$0xff] %v1444
        %2469 = vst [vmem:[%s142 + $0x850] sm:$0xff] %v1445
        %2470 = vst [vmem:[%s142 + $0x858] sm:$0xff] %v1446
        %2471 = vst [vmem:[%s142 + $0x860] sm:$0xff] %v1447
        %2472 = vst [vmem:[%s142 + $0x868] sm:$0xff] %v1448
        %2473 = vst [vmem:[%s142 + $0x870] sm:$0xff] %v1449
        %2474 = vst [vmem:[%s142 + $0x878] sm:$0xff] %v1450
        %2475 = vst [vmem:[%s142 + $0x880] sm:$0xff] %v1451
        %2476 = vst [vmem:[%s142 + $0x888] sm:$0xff] %v1452
        %2477 = vst [vmem:[%s142 + $0x890] sm:$0xff] %v1453
        %2478 = vst [vmem:[%s142 + $0x898] sm:$0xff] %v1454
        %2479 = vst [vmem:[%s142 + $0x8a0] sm:$0xff] %v1455
        %2480 = vst [vmem:[%s142 + $0x8a8] sm:$0xff] %v1456
        %2481 = vst [vmem:[%s142 + $0x8b0] sm:$0xff] %v1457
        %2482 = vst [vmem:[%s142 + $0x8b8] sm:$0xff] %v1458
        %2483 = vst [vmem:[%s142 + $0x8c0] sm:$0xff] %v1459
        %2484 = vst [vmem:[%s142 + $0x8c8] sm:$0xff] %v1460
        %2485 = vst [vmem:[%s142 + $0x8d0] sm:$0xff] %v1461
        %2486 = vst [vmem:[%s142 + $0x8d8] sm:$0xff] %v1462
        %2487 = vst [vmem:[%s142 + $0x8e0] sm:$0xff] %v1463
        %2488 = vst [vmem:[%s142 + $0x8e8] sm:$0xff] %v1464
        %2489 = vst [vmem:[%s142 + $0x8f0] sm:$0xff] %v1465
        %2490 = vst [vmem:[%s142 + $0x8f8] sm:$0xff] %v1466
        %2491 = vst [vmem:[%s142 + $0x900] sm:$0xff] %v1467
        %2492 = vst [vmem:[%s142 + $0x908] sm:$0xff] %v1468
        %2493 = vst [vmem:[%s142 + $0x910] sm:$0xff] %v1469
        %2494 = vst [vmem:[%s142 + $0x918] sm:$0xff] %v1470
        %2495 = vst [vmem:[%s142 + $0x920] sm:$0xff] %v1471
        %2496 = vst [vmem:[%s142 + $0x928] sm:$0xff] %v1472
        %2497 = vst [vmem:[%s142 + $0x930] sm:$0xff] %v1473
        %2498 = vst [vmem:[%s142 + $0x938] sm:$0xff] %v1474
        %2499 = vst [vmem:[%s142 + $0x940] sm:$0xff] %v1475
        %2500 = vst [vmem:[%s142 + $0x948] sm:$0xff] %v1476
        %2501 = vst [vmem:[%s142 + $0x950] sm:$0xff] %v1477
        %2502 = vst [vmem:[%s142 + $0x958] sm:$0xff] %v1478
        %2503 = vst [vmem:[%s142 + $0x960] sm:$0xff] %v1479
        %2504 = vst [vmem:[%s142 + $0x968] sm:$0xff] %v1480
        %2505 = vst [vmem:[%s142 + $0x970] sm:$0xff] %v1481
        %2506 = vst [vmem:[%s142 + $0x978] sm:$0xff] %v1482
        %2507 = vst [vmem:[%s142 + $0x980] sm:$0xff] %v1483
        %2508 = vst [vmem:[%s142 + $0x988] sm:$0xff] %v1484
        %2509 = vst [vmem:[%s142 + $0x990] sm:$0xff] %v1485
        %2510 = vst [vmem:[%s142 + $0x998] sm:$0xff] %v1486
        %2511 = vst [vmem:[%s142 + $0x9a0] sm:$0xff] %v1487
        %2512 = vst [vmem:[%s142 + $0x9a8] sm:$0xff] %v1488
        %2513 = vst [vmem:[%s142 + $0x9b0] sm:$0xff] %v1489
        %2514 = vst [vmem:[%s142 + $0x9b8] sm:$0xff] %v1490
        %2515 = vst [vmem:[%s142 + $0x9c0] sm:$0xff] %v1491
        %2516 = vst [vmem:[%s142 + $0x9c8] sm:$0xff] %v1492
        %2517 = vst [vmem:[%s142 + $0x9d0] sm:$0xff] %v1493
        %2518 = vst [vmem:[%s142 + $0x9d8] sm:$0xff] %v1494
        %2519 = vst [vmem:[%s142 + $0x9e0] sm:$0xff] %v1495
        %2520 = vst [vmem:[%s142 + $0x9e8] sm:$0xff] %v1496
        %2521 = vst [vmem:[%s142 + $0x9f0] sm:$0xff] %v1497
        %2522 = vst [vmem:[%s142 + $0x9f8] sm:$0xff] %v1498
        %2523 = vst [vmem:[%s142 + $0xa00] sm:$0xff] %v1499
        %2524 = vst [vmem:[%s142 + $0xa08] sm:$0xff] %v1500
        %2525 = vst [vmem:[%s142 + $0xa10] sm:$0xff] %v1501
        %2526 = vst [vmem:[%s142 + $0xa18] sm:$0xff] %v1502
        %2527 = vst [vmem:[%s142 + $0xa20] sm:$0xff] %v1503
        %2528 = vst [vmem:[%s142 + $0xa28] sm:$0xff] %v1504
        %2529 = vst [vmem:[%s142 + $0xa30] sm:$0xff] %v1505
        %2530 = vst [vmem:[%s142 + $0xa38] sm:$0xff] %v1506
        %2531 = vst [vmem:[%s142 + $0xa40] sm:$0xff] %v1507
        %2532 = vst [vmem:[%s142 + $0xa48] sm:$0xff] %v1508
        %2533 = vst [vmem:[%s142 + $0xa50] sm:$0xff] %v1509
        %2534 = vst [vmem:[%s142 + $0xa58] sm:$0xff] %v1510
        %2535 = vst [vmem:[%s142 + $0xa60] sm:$0xff] %v1511
        %2536 = vst [vmem:[%s142 + $0xa68] sm:$0xff] %v1512
        %2537 = vst [vmem:[%s142 + $0xa70] sm:$0xff] %v1513
        %2538 = vst [vmem:[%s142 + $0xa78] sm:$0xff] %v1514
        %2539 = vst [vmem:[%s142 + $0xa80] sm:$0xff] %v1515
        %2540 = vst [vmem:[%s142 + $0xa88] sm:$0xff] %v1516
        %2541 = vst [vmem:[%s142 + $0xa90] sm:$0xff] %v1517
        %2542 = vst [vmem:[%s142 + $0xa98] sm:$0xff] %v1518
        %2543 = vst [vmem:[%s142 + $0xaa0] sm:$0xff] %v1519
        %2544 = vst [vmem:[%s142 + $0xaa8] sm:$0xff] %v1520
        %2545 = vst [vmem:[%s142 + $0xab0] sm:$0xff] %v1521
        %2546 = vst [vmem:[%s142 + $0xab8] sm:$0xff] %v1522
        %2547 = vst [vmem:[%s142 + $0xac0] sm:$0xff] %v1523
        %2548 = vst [vmem:[%s142 + $0xac8] sm:$0xff] %v1524
        %2549 = vst [vmem:[%s142 + $0xad0] sm:$0xff] %v1525
        %2550 = vst [vmem:[%s142 + $0xad8] sm:$0xff] %v1526
        %2551 = vst [vmem:[%s142 + $0xae0] sm:$0xff] %v1527
        %2552 = vst [vmem:[%s142 + $0xae8] sm:$0xff] %v1528
        %2553 = vst [vmem:[%s142 + $0xaf0] sm:$0xff] %v1529
        %2554 = vst [vmem:[%s142 + $0xaf8] sm:$0xff] %v1530
        %2555 = vst [vmem:[%s142 + $0xb00] sm:$0xff] %v1531
        %2556 = vst [vmem:[%s142 + $0xb08] sm:$0xff] %v1532
        %2557 = vst [vmem:[%s142 + $0xb10] sm:$0xff] %v1533
        %2558 = vst [vmem:[%s142 + $0xb18] sm:$0xff] %v1534
        %2559 = vst [vmem:[%s142 + $0xb20] sm:$0xff] %v1535
        %2560 = vst [vmem:[%s142 + $0xb28] sm:$0xff] %v1536
        %2561 = vst [vmem:[%s142 + $0xb30] sm:$0xff] %v1537
        %2562 = vst [vmem:[%s142 + $0xb38] sm:$0xff] %v1538
        %2563 = vst [vmem:[%s142 + $0xb40] sm:$0xff] %v1539
        %2564 = vst [vmem:[%s142 + $0xb48] sm:$0xff] %v1540
        %2565 = vst [vmem:[%s142 + $0xb50] sm:$0xff] %v1541
        %2566 = vst [vmem:[%s142 + $0xb58] sm:$0xff] %v1542
        %2567 = vst [vmem:[%s142 + $0xb60] sm:$0xff] %v1543
        %2568 = vst [vmem:[%s142 + $0xb68] sm:$0xff] %v1544
        %2569 = vst [vmem:[%s142 + $0xb70] sm:$0xff] %v1545
        %2570 = vst [vmem:[%s142 + $0xb78] sm:$0xff] %v1546
        %2571 = vst [vmem:[%s142 + $0xb80] sm:$0xff] %v1547
        %2572 = vst [vmem:[%s142 + $0xb88] sm:$0xff] %v1548
        %2573 = vst [vmem:[%s142 + $0xb90] sm:$0xff] %v1549
        %2574 = vst [vmem:[%s142 + $0xb98] sm:$0xff] %v1550
        %2575 = vst [vmem:[%s142 + $0xba0] sm:$0xff] %v1551
        %2576 = vst [vmem:[%s142 + $0xba8] sm:$0xff] %v1552
        %2577 = vst [vmem:[%s142 + $0xbb0] sm:$0xff] %v1553
        %2578 = vst [vmem:[%s142 + $0xbb8] sm:$0xff] %v1554
        %2579 = vst [vmem:[%s142 + $0xbc0] sm:$0xff] %v1555
        %2580 = vst [vmem:[%s142 + $0xbc8] sm:$0xff] %v1556
        %2581 = vst [vmem:[%s142 + $0xbd0] sm:$0xff] %v1557
        %2582 = vst [vmem:[%s142 + $0xbd8] sm:$0xff] %v1558
        %2583 = vst [vmem:[%s142 + $0xbe0] sm:$0xff] %v1559
        %2584 = vst [vmem:[%s142 + $0xbe8] sm:$0xff] %v1560
        %2585 = vst [vmem:[%s142 + $0xbf0] sm:$0xff] %v1561
        %2586 = vst [vmem:[%s142 + $0xbf8] sm:$0xff] %v1562
        %2587 = vst [vmem:[%s142 + $0xc00] sm:$0xff] %v1563
        %2588 = vst [vmem:[%s142 + $0xc08] sm:$0xff] %v1564
        %2589 = vst [vmem:[%s142 + $0xc10] sm:$0xff] %v1565
        %2590 = vst [vmem:[%s142 + $0xc18] sm:$0xff] %v1566
        %2591 = vst [vmem:[%s142 + $0xc20] sm:$0xff] %v1567
        %2592 = vst [vmem:[%s142 + $0xc28] sm:$0xff] %v1568
        %2593 = vst [vmem:[%s142 + $0xc30] sm:$0xff] %v1569
        %2594 = vst [vmem:[%s142 + $0xc38] sm:$0xff] %v1570
        %2595 = vst [vmem:[%s142 + $0xc40] sm:$0xff] %v1571
        %2596 = vst [vmem:[%s142 + $0xc48] sm:$0xff] %v1572
        %2597 = vst [vmem:[%s142 + $0xc50] sm:$0xff] %v1573
        %2598 = vst [vmem:[%s142 + $0xc58] sm:$0xff] %v1574
        %2599 = vst [vmem:[%s142 + $0xc60] sm:$0xff] %v1575
        %2600 = vst [vmem:[%s142 + $0xc68] sm:$0xff] %v1576
        %2601 = vst [vmem:[%s142 + $0xc70] sm:$0xff] %v1577
        %2602 = vst [vmem:[%s142 + $0xc78] sm:$0xff] %v1578
        %2603 = vst [vmem:[%s142 + $0xc80] sm:$0xff] %v1579
        %2604 = vst [vmem:[%s142 + $0xc88] sm:$0xff] %v1580
        %2605 = vst [vmem:[%s142 + $0xc90] sm:$0xff] %v1581
        %2606 = vst [vmem:[%s142 + $0xc98] sm:$0xff] %v1582
        %2607 = vst [vmem:[%s142 + $0xca0] sm:$0xff] %v1583
        %2608 = vst [vmem:[%s142 + $0xca8] sm:$0xff] %v1584
        %2609 = vst [vmem:[%s142 + $0xcb0] sm:$0xff] %v1585
        %2610 = vst [vmem:[%s142 + $0xcb8] sm:$0xff] %v1586
        %2611 = vst [vmem:[%s142 + $0xcc0] sm:$0xff] %v1587
        %2612 = vst [vmem:[%s142 + $0xcc8] sm:$0xff] %v1588
        %2613 = vst [vmem:[%s142 + $0xcd0] sm:$0xff] %v1589
        %2614 = vst [vmem:[%s142 + $0xcd8] sm:$0xff] %v1590
        %2615 = vst [vmem:[%s142 + $0xce0] sm:$0xff] %v1591
        %2616 = vst [vmem:[%s142 + $0xce8] sm:$0xff] %v1592
        %2617 = vst [vmem:[%s142 + $0xcf0] sm:$0xff] %v1593
        %2618 = vst [vmem:[%s142 + $0xcf8] sm:$0xff] %v1594
        %2619 = vst [vmem:[%s142 + $0xd00] sm:$0xff] %v1595
        %2620 = vst [vmem:[%s142 + $0xd08] sm:$0xff] %v1596
        %2621 = vst [vmem:[%s142 + $0xd10] sm:$0xff] %v1597
        %2622 = vst [vmem:[%s142 + $0xd18] sm:$0xff] %v1598
        %2623 = vst [vmem:[%s142 + $0xd20] sm:$0xff] %v1599
        %2624 = vst [vmem:[%s142 + $0xd28] sm:$0xff] %v1600
        %2625 = vst [vmem:[%s142 + $0xd30] sm:$0xff] %v1601
        %2626 = vst [vmem:[%s142 + $0xd38] sm:$0xff] %v1602
        %2627 = vst [vmem:[%s142 + $0xd40] sm:$0xff] %v1603
        %2628 = vst [vmem:[%s142 + $0xd48] sm:$0xff] %v1604
        %2629 = vst [vmem:[%s142 + $0xd50] sm:$0xff] %v1605
        %2630 = vst [vmem:[%s142 + $0xd58] sm:$0xff] %v1606
        %2631 = vst [vmem:[%s142 + $0xd60] sm:$0xff] %v1607
        %2632 = vst [vmem:[%s142 + $0xd68] sm:$0xff] %v1608
        %2633 = vst [vmem:[%s142 + $0xd70] sm:$0xff] %v1609
        %2634 = vst [vmem:[%s142 + $0xd78] sm:$0xff] %v1610
        %2635 = vst [vmem:[%s142 + $0xd80] sm:$0xff] %v1611
        %2636 = vst [vmem:[%s142 + $0xd88] sm:$0xff] %v1612
        %2637 = vst [vmem:[%s142 + $0xd90] sm:$0xff] %v1613
        %2638 = vst [vmem:[%s142 + $0xd98] sm:$0xff] %v1614
        %2639 = vst [vmem:[%s142 + $0xda0] sm:$0xff] %v1615
        %2640 = vst [vmem:[%s142 + $0xda8] sm:$0xff] %v1616
        %2641 = vst [vmem:[%s142 + $0xdb0] sm:$0xff] %v1617
        %2642 = vst [vmem:[%s142 + $0xdb8] sm:$0xff] %v1618
        %2643 = vst [vmem:[%s142 + $0xdc0] sm:$0xff] %v1619
        %2644 = vst [vmem:[%s142 + $0xdc8] sm:$0xff] %v1620
        %2645 = vst [vmem:[%s142 + $0xdd0] sm:$0xff] %v1621
        %2646 = vst [vmem:[%s142 + $0xdd8] sm:$0xff] %v1622
        %2647 = vst [vmem:[%s142 + $0xde0] sm:$0xff] %v1623
        %2648 = vst [vmem:[%s142 + $0xde8] sm:$0xff] %v1624
        %2649 = vst [vmem:[%s142 + $0xdf0] sm:$0xff] %v1625
        %2650 = vst [vmem:[%s142 + $0xdf8] sm:$0xff] %v1626
        %2651 = vst [vmem:[%s142 + $0xe00] sm:$0xff] %v1627
        %2652 = vst [vmem:[%s142 + $0xe08] sm:$0xff] %v1628
        %2653 = vst [vmem:[%s142 + $0xe10] sm:$0xff] %v1629
        %2654 = vst [vmem:[%s142 + $0xe18] sm:$0xff] %v1630
        %2655 = vst [vmem:[%s142 + $0xe20] sm:$0xff] %v1631
        %2656 = vst [vmem:[%s142 + $0xe28] sm:$0xff] %v1632
        %2657 = vst [vmem:[%s142 + $0xe30] sm:$0xff] %v1633
        %2658 = vst [vmem:[%s142 + $0xe38] sm:$0xff] %v1634
        %2659 = vst [vmem:[%s142 + $0xe40] sm:$0xff] %v1635
        %2660 = vst [vmem:[%s142 + $0xe48] sm:$0xff] %v1636
        %2661 = vst [vmem:[%s142 + $0xe50] sm:$0xff] %v1637
        %2662 = vst [vmem:[%s142 + $0xe58] sm:$0xff] %v1638
        %2663 = vst [vmem:[%s142 + $0xe60] sm:$0xff] %v1639
        %2664 = vst [vmem:[%s142 + $0xe68] sm:$0xff] %v1640
        %2665 = vst [vmem:[%s142 + $0xe70] sm:$0xff] %v1641
        %2666 = vst [vmem:[%s142 + $0xe78] sm:$0xff] %v1642
        %2667 = vst [vmem:[%s142 + $0xe80] sm:$0xff] %v1643
        %2668 = vst [vmem:[%s142 + $0xe88] sm:$0xff] %v1644
        %2669 = vst [vmem:[%s142 + $0xe90] sm:$0xff] %v1645
        %2670 = vst [vmem:[%s142 + $0xe98] sm:$0xff] %v1646
        %2671 = vst [vmem:[%s142 + $0xea0] sm:$0xff] %v1647
        %2672 = vst [vmem:[%s142 + $0xea8] sm:$0xff] %v1648
        %2673 = vst [vmem:[%s142 + $0xeb0] sm:$0xff] %v1649
        %2674 = vst [vmem:[%s142 + $0xeb8] sm:$0xff] %v1650
        %2675 = vst [vmem:[%s142 + $0xec0] sm:$0xff] %v1651
        %2676 = vst [vmem:[%s142 + $0xec8] sm:$0xff] %v1652
        %2677 = vst [vmem:[%s142 + $0xed0] sm:$0xff] %v1653
        %2678 = vst [vmem:[%s142 + $0xed8] sm:$0xff] %v1654
        %2679 = vst [vmem:[%s142 + $0xee0] sm:$0xff] %v1655
        %2680 = vst [vmem:[%s142 + $0xee8] sm:$0xff] %v1656
        %2681 = vst [vmem:[%s142 + $0xef0] sm:$0xff] %v1657
        %2682 = vst [vmem:[%s142 + $0xef8] sm:$0xff] %v1658
        %2683 = vst [vmem:[%s142 + $0xf00] sm:$0xff] %v1659
        %2684 = vst [vmem:[%s142 + $0xf08] sm:$0xff] %v1660
        %2685 = vst [vmem:[%s142 + $0xf10] sm:$0xff] %v1661
        %2686 = vst [vmem:[%s142 + $0xf18] sm:$0xff] %v1662
        %2687 = vst [vmem:[%s142 + $0xf20] sm:$0xff] %v1663
        %2688 = vst [vmem:[%s142 + $0xf28] sm:$0xff] %v1664
        %2689 = vst [vmem:[%s142 + $0xf30] sm:$0xff] %v1665
        %2690 = vst [vmem:[%s142 + $0xf38] sm:$0xff] %v1666
        %2691 = vst [vmem:[%s142 + $0xf40] sm:$0xff] %v1667
        %2692 = vst [vmem:[%s142 + $0xf48] sm:$0xff] %v1668
        %2693 = vst [vmem:[%s142 + $0xf50] sm:$0xff] %v1669
        %2694 = vst [vmem:[%s142 + $0xf58] sm:$0xff] %v1670
        %2695 = vst [vmem:[%s142 + $0xf60] sm:$0xff] %v1671
        %2696 = vst [vmem:[%s142 + $0xf68] sm:$0xff] %v1672
        %2697 = vst [vmem:[%s142 + $0xf70] sm:$0xff] %v1673
        %2698 = vst [vmem:[%s142 + $0xf78] sm:$0xff] %v1674
        %2699 = vst [vmem:[%s142 + $0xf80] sm:$0xff] %v1675
        %2700 = vst [vmem:[%s142 + $0xf88] sm:$0xff] %v1676
        %2701 = vst [vmem:[%s142 + $0xf90] sm:$0xff] %v1677
        %2702 = vst [vmem:[%s142 + $0xf98] sm:$0xff] %v1678
        %2703 = vst [vmem:[%s142 + $0xfa0] sm:$0xff] %v1679
        %2704 = vst [vmem:[%s142 + $0xfa8] sm:$0xff] %v1680
        %2705 = vst [vmem:[%s142 + $0xfb0] sm:$0xff] %v1681
        %2706 = vst [vmem:[%s142 + $0xfb8] sm:$0xff] %v1682
        %2707 = vst [vmem:[%s142 + $0xfc0] sm:$0xff] %v1683
        %2708 = vst [vmem:[%s142 + $0xfc8] sm:$0xff] %v1684
        %2709 = vst [vmem:[%s142 + $0xfd0] sm:$0xff] %v1685
        %2710 = vst [vmem:[%s142 + $0xfd8] sm:$0xff] %v1686
        %2711 = vst [vmem:[%s142 + $0xfe0] sm:$0xff] %v1687
        %2712 = vst [vmem:[%s142 + $0xfe8] sm:$0xff] %v1688
        %2713 = vst [vmem:[%s142 + $0xff0] sm:$0xff] %v1689
        %2714 = vst [vmem:[%s142 + $0xff8] sm:$0xff] %v1690
        %2715 = vst [vmem:[%s142 + $0x1000] sm:$0xff] %v1691
        %2716 = vst [vmem:[%s142 + $0x1008] sm:$0xff] %v1692
        %2717 = vst [vmem:[%s142 + $0x1010] sm:$0xff] %v1693
        %2718 = vst [vmem:[%s142 + $0x1018] sm:$0xff] %v1694
        %2719 = vst [vmem:[%s142 + $0x1020] sm:$0xff] %v1695
        %2720 = vst [vmem:[%s142 + $0x1028] sm:$0xff] %v1696
        %2721 = vst [vmem:[%s142 + $0x1030] sm:$0xff] %v1697
        %2722 = vst [vmem:[%s142 + $0x1038] sm:$0xff] %v1698
        %2723 = vst [vmem:[%s142 + $0x1040] sm:$0xff] %v1699
        %2724 = vst [vmem:[%s142 + $0x1048] sm:$0xff] %v1700
        %2725 = vst [vmem:[%s142 + $0x1050] sm:$0xff] %v1701
        %2726 = vst [vmem:[%s142 + $0x1058] sm:$0xff] %v1702
        %2727 = vst [vmem:[%s142 + $0x1060] sm:$0xff] %v1703
        %2728 = vst [vmem:[%s142 + $0x1068] sm:$0xff] %v1704
        %2729 = vst [vmem:[%s142 + $0x1070] sm:$0xff] %v1705
        %2730 = vst [vmem:[%s142 + $0x1078] sm:$0xff] %v1706
        %2731 = vst [vmem:[%s142 + $0x1080] sm:$0xff] %v1707
        %2732 = vst [vmem:[%s142 + $0x1088] sm:$0xff] %v1708
        %2733 = vst [vmem:[%s142 + $0x1090] sm:$0xff] %v1709
        %2734 = vst [vmem:[%s142 + $0x1098] sm:$0xff] %v1710
        %2735 = vst [vmem:[%s142 + $0x10a0] sm:$0xff] %v1711
        %2736 = vst [vmem:[%s142 + $0x10a8] sm:$0xff] %v1712
        %2737 = vst [vmem:[%s142 + $0x10b0] sm:$0xff] %v1713
        %2738 = vst [vmem:[%s142 + $0x10b8] sm:$0xff] %v1714
        %2739 = vst [vmem:[%s142 + $0x10c0] sm:$0xff] %v1715
        %2740 = vst [vmem:[%s142 + $0x10c8] sm:$0xff] %v1716
        %2741 = vst [vmem:[%s142 + $0x10d0] sm:$0xff] %v1717
        %2742 = vst [vmem:[%s142 + $0x10d8] sm:$0xff] %v1718
        %2743 = vst [vmem:[%s142 + $0x10e0] sm:$0xff] %v1719
        %2744 = vst [vmem:[%s142 + $0x10e8] sm:$0xff] %v1720
        %2745 = vst [vmem:[%s142 + $0x10f0] sm:$0xff] %v1721
        %2746 = vst [vmem:[%s142 + $0x10f8] sm:$0xff] %v1722
        %2747 = vst [vmem:[%s142 + $0x1100] sm:$0xff] %v1723
        %2748 = vst [vmem:[%s142 + $0x1108] sm:$0xff] %v1724
        %2749 = vst [vmem:[%s142 + $0x1110] sm:$0xff] %v1725
        %2750 = vst [vmem:[%s142 + $0x1118] sm:$0xff] %v1726
        %2751 = vst [vmem:[%s142 + $0x1120] sm:$0xff] %v1727
        %2752 = vst [vmem:[%s142 + $0x1128] sm:$0xff] %v1728
        %2753 = vst [vmem:[%s142 + $0x1130] sm:$0xff] %v1729
        %2754 = vst [vmem:[%s142 + $0x1138] sm:$0xff] %v1730
        %2755 = vst [vmem:[%s142 + $0x1140] sm:$0xff] %v1731
        %2756 = vst [vmem:[%s142 + $0x1148] sm:$0xff] %v1732
        %2757 = vst [vmem:[%s142 + $0x1150] sm:$0xff] %v1733
        %2758 = vst [vmem:[%s142 + $0x1158] sm:$0xff] %v1734
        %2759 = vst [vmem:[%s142 + $0x1160] sm:$0xff] %v1735
        %2760 = vst [vmem:[%s142 + $0x1168] sm:$0xff] %v1736
        %2761 = vst [vmem:[%s142 + $0x1170] sm:$0xff] %v1737
        %2762 = vst [vmem:[%s142 + $0x1178] sm:$0xff] %v1738
        %2763 = vst [vmem:[%s142 + $0x1180] sm:$0xff] %v1739
        %2764 = vst [vmem:[%s142 + $0x1188] sm:$0xff] %v1740
        %2765 = vst [vmem:[%s142 + $0x1190] sm:$0xff] %v1741
        %2766 = vst [vmem:[%s142 + $0x1198] sm:$0xff] %v1742
        %2767 = vst [vmem:[%s142 + $0x11a0] sm:$0xff] %v1743
        %2768 = vst [vmem:[%s142 + $0x11a8] sm:$0xff] %v1744
        %2769 = vst [vmem:[%s142 + $0x11b0] sm:$0xff] %v1745
        %2770 = vst [vmem:[%s142 + $0x11b8] sm:$0xff] %v1746
        %2771 = vst [vmem:[%s142 + $0x11c0] sm:$0xff] %v1747
        %2772 = vst [vmem:[%s142 + $0x11c8] sm:$0xff] %v1748
        %2773 = vst [vmem:[%s142 + $0x11d0] sm:$0xff] %v1749
        %2774 = vst [vmem:[%s142 + $0x11d8] sm:$0xff] %v1750
        %2775 = vst [vmem:[%s142 + $0x11e0] sm:$0xff] %v1751
        %2776 = vst [vmem:[%s142 + $0x11e8] sm:$0xff] %v1752
        %2777 = vst [vmem:[%s142 + $0x11f0] sm:$0xff] %v1753
        %2778 = vst [vmem:[%s142 + $0x11f8] sm:$0xff] %v1754
        %2779 = vst [vmem:[%s142 + $0x1200] sm:$0xff] %v1755
        %2780 = vst [vmem:[%s142 + $0x1208] sm:$0xff] %v1756
        %2781 = vst [vmem:[%s142 + $0x1210] sm:$0xff] %v1757
        %2782 = vst [vmem:[%s142 + $0x1218] sm:$0xff] %v1758
        %2783 = vst [vmem:[%s142 + $0x1220] sm:$0xff] %v1759
        %2784 = vst [vmem:[%s142 + $0x1228] sm:$0xff] %v1760
        %2785 = vst [vmem:[%s142 + $0x1230] sm:$0xff] %v1761
        %2786 = vst [vmem:[%s142 + $0x1238] sm:$0xff] %v1762
        %2787 = vst [vmem:[%s142 + $0x1240] sm:$0xff] %v1763
        %2788 = vst [vmem:[%s142 + $0x1248] sm:$0xff] %v1764
        %2789 = vst [vmem:[%s142 + $0x1250] sm:$0xff] %v1765
        %2790 = vst [vmem:[%s142 + $0x1258] sm:$0xff] %v1766
        %2791 = vst [vmem:[%s142 + $0x1260] sm:$0xff] %v1767
        %2792 = vst [vmem:[%s142 + $0x1268] sm:$0xff] %v1768
        %2793 = vst [vmem:[%s142 + $0x1270] sm:$0xff] %v1769
        %2794 = vst [vmem:[%s142 + $0x1278] sm:$0xff] %v1770
        %2795 = vst [vmem:[%s142 + $0x1280] sm:$0xff] %v1771
        %2796 = vst [vmem:[%s142 + $0x1288] sm:$0xff] %v1772
        %2797 = vst [vmem:[%s142 + $0x1290] sm:$0xff] %v1773
        %2798 = vst [vmem:[%s142 + $0x1298] sm:$0xff] %v1774
        %2799 = vst [vmem:[%s142 + $0x12a0] sm:$0xff] %v1775
        %2800 = vst [vmem:[%s142 + $0x12a8] sm:$0xff] %v1776
        %2801 = vst [vmem:[%s142 + $0x12b0] sm:$0xff] %v1777
        %2802 = vst [vmem:[%s142 + $0x12b8] sm:$0xff] %v1778
        %2803 = vst [vmem:[%s142 + $0x12c0] sm:$0xff] %v1779
        %2804 = vst [vmem:[%s142 + $0x12c8] sm:$0xff] %v1780
        %2805 = vst [vmem:[%s142 + $0x12d0] sm:$0xff] %v1781
        %2806 = vst [vmem:[%s142 + $0x12d8] sm:$0xff] %v1782
        %2807 = vst [vmem:[%s142 + $0x12e0] sm:$0xff] %v1783
        %2808 = vst [vmem:[%s142 + $0x12e8] sm:$0xff] %v1784
        %2809 = vst [vmem:[%s142 + $0x12f0] sm:$0xff] %v1785
        %2810 = vst [vmem:[%s142 + $0x12f8] sm:$0xff] %v1786
        %2811 = vst [vmem:[%s142 + $0x1300] sm:$0xff] %v1787
        %2812 = vst [vmem:[%s142 + $0x1308] sm:$0xff] %v1788
        %2813 = vst [vmem:[%s142 + $0x1310] sm:$0xff] %v1789
        %2814 = vst [vmem:[%s142 + $0x1318] sm:$0xff] %v1790
        %2815 = vst [vmem:[%s142 + $0x1320] sm:$0xff] %v1791
        %2816 = vst [vmem:[%s142 + $0x1328] sm:$0xff] %v1792
        %2817 = vst [vmem:[%s142 + $0x1330] sm:$0xff] %v1793
        %2818 = vst [vmem:[%s142 + $0x1338] sm:$0xff] %v1794
        %2819 = vst [vmem:[%s142 + $0x1340] sm:$0xff] %v1795
        %2820 = vst [vmem:[%s142 + $0x1348] sm:$0xff] %v1796
        %2821 = vst [vmem:[%s142 + $0x1350] sm:$0xff] %v1797
        %2822 = vst [vmem:[%s142 + $0x1358] sm:$0xff] %v1798
        %2823 = vst [vmem:[%s142 + $0x1360] sm:$0xff] %v1799
        %2824 = vst [vmem:[%s142 + $0x1368] sm:$0xff] %v1800
        %2825 = vst [vmem:[%s142 + $0x1370] sm:$0xff] %v1801
        %2826 = vst [vmem:[%s142 + $0x1378] sm:$0xff] %v1802
        %2827 = vst [vmem:[%s142 + $0x1380] sm:$0xff] %v1803
        %2828 = vst [vmem:[%s142 + $0x1388] sm:$0xff] %v1804
        %2829 = vst [vmem:[%s142 + $0x1390] sm:$0xff] %v1805
        %2830 = vst [vmem:[%s142 + $0x1398] sm:$0xff] %v1806
        %2831 = vst [vmem:[%s142 + $0x13a0] sm:$0xff] %v1807
        %2832 = vst [vmem:[%s142 + $0x13a8] sm:$0xff] %v1808
        %2833 = vst [vmem:[%s142 + $0x13b0] sm:$0xff] %v1809
        %2834 = vst [vmem:[%s142 + $0x13b8] sm:$0xff] %v1810
        %2835 = vst [vmem:[%s142 + $0x13c0] sm:$0xff] %v1811
        %2836 = vst [vmem:[%s142 + $0x13c8] sm:$0xff] %v1812
        %2837 = vst [vmem:[%s142 + $0x13d0] sm:$0xff] %v1813
        %2838 = vst [vmem:[%s142 + $0x13d8] sm:$0xff] %v1814
        %2839 = vst [vmem:[%s142 + $0x13e0] sm:$0xff] %v1815
        %2840 = vst [vmem:[%s142 + $0x13e8] sm:$0xff] %v1816
        %2841 = vst [vmem:[%s142 + $0x13f0] sm:$0xff] %v1817
        %2842 = vst [vmem:[%s142 + $0x13f8] sm:$0xff] %v1818
        %2843 = vst [vmem:[%s142 + $0x1400] sm:$0xff] %v1819
        %2844 = vst [vmem:[%s142 + $0x1408] sm:$0xff] %v1820
        %2845 = vst [vmem:[%s142 + $0x1410] sm:$0xff] %v1821
        %2846 = vst [vmem:[%s142 + $0x1418] sm:$0xff] %v1822
        %2847 = vst [vmem:[%s142 + $0x1420] sm:$0xff] %v1823
        %2848 = vst [vmem:[%s142 + $0x1428] sm:$0xff] %v1824
        %2849 = vst [vmem:[%s142 + $0x1430] sm:$0xff] %v1825
        %2850 = vst [vmem:[%s142 + $0x1438] sm:$0xff] %v1826
        %2851 = vst [vmem:[%s142 + $0x1440] sm:$0xff] %v1827
        %2852 = vst [vmem:[%s142 + $0x1448] sm:$0xff] %v1828
        %2853 = vst [vmem:[%s142 + $0x1450] sm:$0xff] %v1829
        %2854 = vst [vmem:[%s142 + $0x1458] sm:$0xff] %v1830
        %2855 = vst [vmem:[%s142 + $0x1460] sm:$0xff] %v1831
        %2856 = vst [vmem:[%s142 + $0x1468] sm:$0xff] %v1832
        %2857 = vst [vmem:[%s142 + $0x1470] sm:$0xff] %v1833
        %2858 = vst [vmem:[%s142 + $0x1478] sm:$0xff] %v1834
        %2859 = vst [vmem:[%s142 + $0x1480] sm:$0xff] %v1835
        %2860 = vst [vmem:[%s142 + $0x1488] sm:$0xff] %v1836
        %2861 = vst [vmem:[%s142 + $0x1490] sm:$0xff] %v1837
        %2862 = vst [vmem:[%s142 + $0x1498] sm:$0xff] %v1838
        %2863 = vst [vmem:[%s142 + $0x14a0] sm:$0xff] %v1839
        %2864 = vst [vmem:[%s142 + $0x14a8] sm:$0xff] %v1840
        %2865 = vst [vmem:[%s142 + $0x14b0] sm:$0xff] %v1841
        %2866 = vst [vmem:[%s142 + $0x14b8] sm:$0xff] %v1842
        %2867 = vst [vmem:[%s142 + $0x14c0] sm:$0xff] %v1843
        %2868 = vst [vmem:[%s142 + $0x14c8] sm:$0xff] %v1844
        %2869 = vst [vmem:[%s142 + $0x14d0] sm:$0xff] %v1845
        %2870 = vst [vmem:[%s142 + $0x14d8] sm:$0xff] %v1846
        %2871 = vst [vmem:[%s142 + $0x14e0] sm:$0xff] %v1847
        %2872 = vst [vmem:[%s142 + $0x14e8] sm:$0xff] %v1848
        %2873 = vst [vmem:[%s142 + $0x14f0] sm:$0xff] %v1849
        %2874 = vst [vmem:[%s142 + $0x14f8] sm:$0xff] %v1850
        %2875 = vst [vmem:[%s142 + $0x1500] sm:$0xff] %v1851
        %2876 = vst [vmem:[%s142 + $0x1508] sm:$0xff] %v1852
        %2877 = vst [vmem:[%s142 + $0x1510] sm:$0xff] %v1853
        %2878 = vst [vmem:[%s142 + $0x1518] sm:$0xff] %v1854
        %2879 = vst [vmem:[%s142 + $0x1520] sm:$0xff] %v1855
        %2880 = vst [vmem:[%s142 + $0x1528] sm:$0xff] %v1856
        %2881 = vst [vmem:[%s142 + $0x1530] sm:$0xff] %v1857
        %2882 = vst [vmem:[%s142 + $0x1538] sm:$0xff] %v1858
        %2883 = vst [vmem:[%s142 + $0x1540] sm:$0xff] %v1859
        %2884 = vst [vmem:[%s142 + $0x1548] sm:$0xff] %v1860
        %2885 = vst [vmem:[%s142 + $0x1550] sm:$0xff] %v1861
        %2886 = vst [vmem:[%s142 + $0x1558] sm:$0xff] %v1862
        %2887 = vst [vmem:[%s142 + $0x1560] sm:$0xff] %v1863
        %2888 = vst [vmem:[%s142 + $0x1568] sm:$0xff] %v1864
        %2889 = vst [vmem:[%s142 + $0x1570] sm:$0xff] %v1865
        %2890 = vst [vmem:[%s142 + $0x1578] sm:$0xff] %v1866
        %2891 = vst [vmem:[%s142 + $0x1580] sm:$0xff] %v1867
        %2892 = vst [vmem:[%s142 + $0x1588] sm:$0xff] %v1868
        %2893 = vst [vmem:[%s142 + $0x1590] sm:$0xff] %v1869
        %2894 = vst [vmem:[%s142 + $0x1598] sm:$0xff] %v1870
        %2895 = vst [vmem:[%s142 + $0x15a0] sm:$0xff] %v1871
        %2896 = vst [vmem:[%s142 + $0x15a8] sm:$0xff] %v1872
        %2897 = vst [vmem:[%s142 + $0x15b0] sm:$0xff] %v1873
        %2898 = vst [vmem:[%s142 + $0x15b8] sm:$0xff] %v1874
        %2899 = vst [vmem:[%s142 + $0x15c0] sm:$0xff] %v1875
        %2900 = vst [vmem:[%s142 + $0x15c8] sm:$0xff] %v1876
        %2901 = vst [vmem:[%s142 + $0x15d0] sm:$0xff] %v1877
        %2902 = vst [vmem:[%s142 + $0x15d8] sm:$0xff] %v1878
        %2903 = vst [vmem:[%s142 + $0x15e0] sm:$0xff] %v1879
        %2904 = vst [vmem:[%s142 + $0x15e8] sm:$0xff] %v1880
        %2905 = vst [vmem:[%s142 + $0x15f0] sm:$0xff] %v1881
        %2906 = vst [vmem:[%s142 + $0x15f8] sm:$0xff] %v1882
        %2907 = vst [vmem:[%s142 + $0x1600] sm:$0xff] %v1883
        %2908 = vst [vmem:[%s142 + $0x1608] sm:$0xff] %v1884
        %2909 = vst [vmem:[%s142 + $0x1610] sm:$0xff] %v1885
        %2910 = vst [vmem:[%s142 + $0x1618] sm:$0xff] %v1886
        %2911 = vst [vmem:[%s142 + $0x1620] sm:$0xff] %v1887
        %2912 = vst [vmem:[%s142 + $0x1628] sm:$0xff] %v1888
        %2913 = vst [vmem:[%s142 + $0x1630] sm:$0xff] %v1889
        %2914 = vst [vmem:[%s142 + $0x1638] sm:$0xff] %v1890
        %2915 = vst [vmem:[%s142 + $0x1640] sm:$0xff] %v1891
        %2916 = vst [vmem:[%s142 + $0x1648] sm:$0xff] %v1892
        %2917 = vst [vmem:[%s142 + $0x1650] sm:$0xff] %v1893
        %2918 = vst [vmem:[%s142 + $0x1658] sm:$0xff] %v1894
        %2919 = vst [vmem:[%s142 + $0x1660] sm:$0xff] %v1895
        %2920 = vst [vmem:[%s142 + $0x1668] sm:$0xff] %v1896
        %2921 = vst [vmem:[%s142 + $0x1670] sm:$0xff] %v1897
        %2922 = vst [vmem:[%s142 + $0x1678] sm:$0xff] %v1898
        %2923 = vst [vmem:[%s142 + $0x1680] sm:$0xff] %v1899
        %2924 = vst [vmem:[%s142 + $0x1688] sm:$0xff] %v1900
        %2925 = vst [vmem:[%s142 + $0x1690] sm:$0xff] %v1901
        %2926 = vst [vmem:[%s142 + $0x1698] sm:$0xff] %v1902
        %2927 = vst [vmem:[%s142 + $0x16a0] sm:$0xff] %v1903
        %2928 = vst [vmem:[%s142 + $0x16a8] sm:$0xff] %v1904
        %2929 = vst [vmem:[%s142 + $0x16b0] sm:$0xff] %v1905
        %2930 = vst [vmem:[%s142 + $0x16b8] sm:$0xff] %v1906
        %2931 = vst [vmem:[%s142 + $0x16c0] sm:$0xff] %v1907
        %2932 = vst [vmem:[%s142 + $0x16c8] sm:$0xff] %v1908
        %2933 = vst [vmem:[%s142 + $0x16d0] sm:$0xff] %v1909
        %2934 = vst [vmem:[%s142 + $0x16d8] sm:$0xff] %v1910
        %2935 = vst [vmem:[%s142 + $0x16e0] sm:$0xff] %v1911
        %2936 = vst [vmem:[%s142 + $0x16e8] sm:$0xff] %v1912
        %2937 = vst [vmem:[%s142 + $0x16f0] sm:$0xff] %v1913
        %2938 = vst [vmem:[%s142 + $0x16f8] sm:$0xff] %v1914
        %2939 = vst [vmem:[%s142 + $0x1700] sm:$0xff] %v1915
        %2940 = vst [vmem:[%s142 + $0x1708] sm:$0xff] %v1916
        %2941 = vst [vmem:[%s142 + $0x1710] sm:$0xff] %v1917
        %2942 = vst [vmem:[%s142 + $0x1718] sm:$0xff] %v1918
        %2943 = vst [vmem:[%s142 + $0x1720] sm:$0xff] %v1919
        %2944 = vst [vmem:[%s142 + $0x1728] sm:$0xff] %v1920
        %2945 = vst [vmem:[%s142 + $0x1730] sm:$0xff] %v1921
        %2946 = vst [vmem:[%s142 + $0x1738] sm:$0xff] %v1922
        %2947 = vst [vmem:[%s142 + $0x1740] sm:$0xff] %v1923
        %2948 = vst [vmem:[%s142 + $0x1748] sm:$0xff] %v1924
        %2949 = vst [vmem:[%s142 + $0x1750] sm:$0xff] %v1925
        %2950 = vst [vmem:[%s142 + $0x1758] sm:$0xff] %v1926
        %2951 = vst [vmem:[%s142 + $0x1760] sm:$0xff] %v1927
        %2952 = vst [vmem:[%s142 + $0x1768] sm:$0xff] %v1928
        %2953 = vst [vmem:[%s142 + $0x1770] sm:$0xff] %v1929
        %2954 = vst [vmem:[%s142 + $0x1778] sm:$0xff] %v1930
        %2955 = vst [vmem:[%s142 + $0x1780] sm:$0xff] %v1931
        %2956 = vst [vmem:[%s142 + $0x1788] sm:$0xff] %v1932
        %2957 = vst [vmem:[%s142 + $0x1790] sm:$0xff] %v1933
        %2958 = vst [vmem:[%s142 + $0x1798] sm:$0xff] %v1934
        %2959 = vst [vmem:[%s142 + $0x17a0] sm:$0xff] %v1935
        %2960 = vst [vmem:[%s142 + $0x17a8] sm:$0xff] %v1936
        %2961 = vst [vmem:[%s142 + $0x17b0] sm:$0xff] %v1937
        %2962 = vst [vmem:[%s142 + $0x17b8] sm:$0xff] %v1938
        %2963 = vst [vmem:[%s142 + $0x17c0] sm:$0xff] %v1939
        %2964 = vst [vmem:[%s142 + $0x17c8] sm:$0xff] %v1940
        %2965 = vst [vmem:[%s142 + $0x17d0] sm:$0xff] %v1941
        %2966 = vst [vmem:[%s142 + $0x17d8] sm:$0xff] %v1942
        %2967 = vst [vmem:[%s142 + $0x17e0] sm:$0xff] %v1943
        %2968 = vst [vmem:[%s142 + $0x17e8] sm:$0xff] %v1944
        %2969 = vst [vmem:[%s142 + $0x17f0] sm:$0xff] %v1945
        %2970 = vst [vmem:[%s142 + $0x17f8] sm:$0xff] %v1946
        %2971 = vst [vmem:[%s142 + $0x1800] sm:$0xff] %v1947
        %2972 = vst [vmem:[%s142 + $0x1808] sm:$0xff] %v1948
        %2973 = vst [vmem:[%s142 + $0x1810] sm:$0xff] %v1949
        %2974 = vst [vmem:[%s142 + $0x1818] sm:$0xff] %v1950
        %2975 = vst [vmem:[%s142 + $0x1820] sm:$0xff] %v1951
        %2976 = vst [vmem:[%s142 + $0x1828] sm:$0xff] %v1952
        %2977 = vst [vmem:[%s142 + $0x1830] sm:$0xff] %v1953
        %2978 = vst [vmem:[%s142 + $0x1838] sm:$0xff] %v1954
        %2979 = vst [vmem:[%s142 + $0x1840] sm:$0xff] %v1955
        %2980 = vst [vmem:[%s142 + $0x1848] sm:$0xff] %v1956
        %2981 = vst [vmem:[%s142 + $0x1850] sm:$0xff] %v1957
        %2982 = vst [vmem:[%s142 + $0x1858] sm:$0xff] %v1958
        %2983 = vst [vmem:[%s142 + $0x1860] sm:$0xff] %v1959
        %2984 = vst [vmem:[%s142 + $0x1868] sm:$0xff] %v1960
        %2985 = vst [vmem:[%s142 + $0x1870] sm:$0xff] %v1961
        %2986 = vst [vmem:[%s142 + $0x1878] sm:$0xff] %v1962
        %2987 = vst [vmem:[%s142 + $0x1880] sm:$0xff] %v1963
        %2988 = vst [vmem:[%s142 + $0x1888] sm:$0xff] %v1964
        %2989 = vst [vmem:[%s142 + $0x1890] sm:$0xff] %v1965
        %2990 = vst [vmem:[%s142 + $0x1898] sm:$0xff] %v1966
        %2991 = vst [vmem:[%s142 + $0x18a0] sm:$0xff] %v1967
        %2992 = vst [vmem:[%s142 + $0x18a8] sm:$0xff] %v1968
        %2993 = vst [vmem:[%s142 + $0x18b0] sm:$0xff] %v1969
        %2994 = vst [vmem:[%s142 + $0x18b8] sm:$0xff] %v1970
        %2995 = vst [vmem:[%s142 + $0x18c0] sm:$0xff] %v1971
        %2996 = vst [vmem:[%s142 + $0x18c8] sm:$0xff] %v1972
        %2997 = vst [vmem:[%s142 + $0x18d0] sm:$0xff] %v1973
        %2998 = vst [vmem:[%s142 + $0x18d8] sm:$0xff] %v1974
        %2999 = vst [vmem:[%s142 + $0x18e0] sm:$0xff] %v1975
        %3000 = vst [vmem:[%s142 + $0x18e8] sm:$0xff] %v1976
        %3001 = vst [vmem:[%s142 + $0x18f0] sm:$0xff] %v1977
        %3002 = vst [vmem:[%s142 + $0x18f8] sm:$0xff] %v1978
        %3003 = vst [vmem:[%s142 + $0x1900] sm:$0xff] %v1979
        %3004 = vst [vmem:[%s142 + $0x1908] sm:$0xff] %v1980
        %3005 = vst [vmem:[%s142 + $0x1910] sm:$0xff] %v1981
        %3006 = vst [vmem:[%s142 + $0x1918] sm:$0xff] %v1982
        %3007 = vst [vmem:[%s142 + $0x1920] sm:$0xff] %v1983
        %3008 = vst [vmem:[%s142 + $0x1928] sm:$0xff] %v1984
        %3009 = vst [vmem:[%s142 + $0x1930] sm:$0xff] %v1985
        %3010 = vst [vmem:[%s142 + $0x1938] sm:$0xff] %v1986
        %3011 = vst [vmem:[%s142 + $0x1940] sm:$0xff] %v1987
        %3012 = vst [vmem:[%s142 + $0x1948] sm:$0xff] %v1988
        %3013 = vst [vmem:[%s142 + $0x1950] sm:$0xff] %v1989
        %3014 = vst [vmem:[%s142 + $0x1958] sm:$0xff] %v1990
        %3015 = vst [vmem:[%s142 + $0x1960] sm:$0xff] %v1991
        %3016 = vst [vmem:[%s142 + $0x1968] sm:$0xff] %v1992
        %3017 = vst [vmem:[%s142 + $0x1970] sm:$0xff] %v1993
        %3018 = vst [vmem:[%s142 + $0x1978] sm:$0xff] %v1994
        %3019 = vst [vmem:[%s142 + $0x1980] sm:$0xff] %v1995
        %3020 = vst [vmem:[%s142 + $0x1988] sm:$0xff] %v1996
        %3021 = vst [vmem:[%s142 + $0x1990] sm:$0xff] %v1997
        %3022 = vst [vmem:[%s142 + $0x1998] sm:$0xff] %v1998
        %3023 = vst [vmem:[%s142 + $0x19a0] sm:$0xff] %v1999
        %3024 = vst [vmem:[%s142 + $0x19a8] sm:$0xff] %v2000
        %3025 = vst [vmem:[%s142 + $0x19b0] sm:$0xff] %v2001
        %3026 = vst [vmem:[%s142 + $0x19b8] sm:$0xff] %v2002
        %3027 = vst [vmem:[%s142 + $0x19c0] sm:$0xff] %v2003
        %3028 = vst [vmem:[%s142 + $0x19c8] sm:$0xff] %v2004
        %3029 = vst [vmem:[%s142 + $0x19d0] sm:$0xff] %v2005
        %3030 = vst [vmem:[%s142 + $0x19d8] sm:$0xff] %v2006
        %3031 = vst [vmem:[%s142 + $0x19e0] sm:$0xff] %v2007
        %3032 = vst [vmem:[%s142 + $0x19e8] sm:$0xff] %v2008
        %3033 = vst [vmem:[%s142 + $0x19f0] sm:$0xff] %v2009
        %3034 = vst [vmem:[%s142 + $0x19f8] sm:$0xff] %v2010
        %3035 = vst [vmem:[%s142 + $0x1a00] sm:$0xff] %v2011
        %3036 = vst [vmem:[%s142 + $0x1a08] sm:$0xff] %v2012
        %3037 = vst [vmem:[%s142 + $0x1a10] sm:$0xff] %v2013
        %3038 = vst [vmem:[%s142 + $0x1a18] sm:$0xff] %v2014
        %3039 = vst [vmem:[%s142 + $0x1a20] sm:$0xff] %v2015
        %3040 = vst [vmem:[%s142 + $0x1a28] sm:$0xff] %v2016
        %3041 = vst [vmem:[%s142 + $0x1a30] sm:$0xff] %v2017
        %3042 = vst [vmem:[%s142 + $0x1a38] sm:$0xff] %v2018
        %3043 = vst [vmem:[%s142 + $0x1a40] sm:$0xff] %v2019
        %3044 = vst [vmem:[%s142 + $0x1a48] sm:$0xff] %v2020
        %3045 = vst [vmem:[%s142 + $0x1a50] sm:$0xff] %v2021
        %3046 = vst [vmem:[%s142 + $0x1a58] sm:$0xff] %v2022
        %3047 = vst [vmem:[%s142 + $0x1a60] sm:$0xff] %v2023
        %3048 = vst [vmem:[%s142 + $0x1a68] sm:$0xff] %v2024
        %3049 = vst [vmem:[%s142 + $0x1a70] sm:$0xff] %v2025
        %3050 = vst [vmem:[%s142 + $0x1a78] sm:$0xff] %v2026
        %3051 = vst [vmem:[%s142 + $0x1a80] sm:$0xff] %v2027
        %3052 = vst [vmem:[%s142 + $0x1a88] sm:$0xff] %v2028
        %3053 = vst [vmem:[%s142 + $0x1a90] sm:$0xff] %v2029
        %3054 = vst [vmem:[%s142 + $0x1a98] sm:$0xff] %v2030
        %3055 = vst [vmem:[%s142 + $0x1aa0] sm:$0xff] %v2031
        %3056 = vst [vmem:[%s142 + $0x1aa8] sm:$0xff] %v2032
        %3057 = vst [vmem:[%s142 + $0x1ab0] sm:$0xff] %v2033
        %3058 = vst [vmem:[%s142 + $0x1ab8] sm:$0xff] %v2034
        %3059 = vst [vmem:[%s142 + $0x1ac0] sm:$0xff] %v2035
        %3060 = vst [vmem:[%s142 + $0x1ac8] sm:$0xff] %v2036
        %3061 = vst [vmem:[%s142 + $0x1ad0] sm:$0xff] %v2037
        %3062 = vst [vmem:[%s142 + $0x1ad8] sm:$0xff] %v2038
        %3063 = vst [vmem:[%s142 + $0x1ae0] sm:$0xff] %v2039
        %3064 = vst [vmem:[%s142 + $0x1ae8] sm:$0xff] %v2040
        %3065 = vst [vmem:[%s142 + $0x1af0] sm:$0xff] %v2041
        %3066 = vst [vmem:[%s142 + $0x1af8] sm:$0xff] %v2042
        %3067 = vst [vmem:[%s142 + $0x1b00] sm:$0xff] %v2043
        %3068 = vst [vmem:[%s142 + $0x1b08] sm:$0xff] %v2044
        %3069 = vst [vmem:[%s142 + $0x1b10] sm:$0xff] %v2045
        %3070 = vst [vmem:[%s142 + $0x1b18] sm:$0xff] %v2046
        %3071 = vst [vmem:[%s142 + $0x1b20] sm:$0xff] %v2047
        %3072 = vst [vmem:[%s142 + $0x1b28] sm:$0xff] %v2048
        %3073 = vst [vmem:[%s142 + $0x1b30] sm:$0xff] %v2049
        %3074 = vst [vmem:[%s142 + $0x1b38] sm:$0xff] %v2050
        %3075 = vst [vmem:[%s142 + $0x1b40] sm:$0xff] %v2051
        %3076 = vst [vmem:[%s142 + $0x1b48] sm:$0xff] %v2052
        %3077 = vst [vmem:[%s142 + $0x1b50] sm:$0xff] %v2053
        %3078 = vst [vmem:[%s142 + $0x1b58] sm:$0xff] %v2054
        %3079 = vst [vmem:[%s142 + $0x1b60] sm:$0xff] %v2055
        %3080 = vst [vmem:[%s142 + $0x1b68] sm:$0xff] %v2056
        %3081 = vst [vmem:[%s142 + $0x1b70] sm:$0xff] %v2057
        %3082 = vst [vmem:[%s142 + $0x1b78] sm:$0xff] %v2058
        %3083 = vst [vmem:[%s142 + $0x1b80] sm:$0xff] %v2059
        %3084 = vst [vmem:[%s142 + $0x1b88] sm:$0xff] %v2060
        %3085 = vst [vmem:[%s142 + $0x1b90] sm:$0xff] %v2061
        %3086 = vst [vmem:[%s142 + $0x1b98] sm:$0xff] %v2062
        %3087 = vst [vmem:[%s142 + $0x1ba0] sm:$0xff] %v2063
        %3088 = vst [vmem:[%s142 + $0x1ba8] sm:$0xff] %v2064
        %3089 = vst [vmem:[%s142 + $0x1bb0] sm:$0xff] %v2065
        %3090 = vst [vmem:[%s142 + $0x1bb8] sm:$0xff] %v2066
        %3091 = vst [vmem:[%s142 + $0x1bc0] sm:$0xff] %v2067
        %3092 = vst [vmem:[%s142 + $0x1bc8] sm:$0xff] %v2068
        %3093 = vst [vmem:[%s142 + $0x1bd0] sm:$0xff] %v2069
        %3094 = vst [vmem:[%s142 + $0x1bd8] sm:$0xff] %v2070
        %3095 = vst [vmem:[%s142 + $0x1be0] sm:$0xff] %v2071
        %3096 = vst [vmem:[%s142 + $0x1be8] sm:$0xff] %v2072
        %3097 = vst [vmem:[%s142 + $0x1bf0] sm:$0xff] %v2073
        %3098 = vst [vmem:[%s142 + $0x1bf8] sm:$0xff] %v2074
        %3099 = vst [vmem:[%s142 + $0x1c00] sm:$0xff] %v2075
        %3100 = vst [vmem:[%s142 + $0x1c08] sm:$0xff] %v2076
        %3101 = vst [vmem:[%s142 + $0x1c10] sm:$0xff] %v2077
        %3102 = vst [vmem:[%s142 + $0x1c18] sm:$0xff] %v2078
        %3103 = vst [vmem:[%s142 + $0x1c20] sm:$0xff] %v2079
        %3104 = vst [vmem:[%s142 + $0x1c28] sm:$0xff] %v2080
        %3105 = vst [vmem:[%s142 + $0x1c30] sm:$0xff] %v2081
        %3106 = vst [vmem:[%s142 + $0x1c38] sm:$0xff] %v2082
        %3107 = vst [vmem:[%s142 + $0x1c40] sm:$0xff] %v2083
        %3108 = vst [vmem:[%s142 + $0x1c48] sm:$0xff] %v2084
        %3109 = vst [vmem:[%s142 + $0x1c50] sm:$0xff] %v2085
        %3110 = vst [vmem:[%s142 + $0x1c58] sm:$0xff] %v2086
        %3111 = vst [vmem:[%s142 + $0x1c60] sm:$0xff] %v2087
        %3112 = vst [vmem:[%s142 + $0x1c68] sm:$0xff] %v2088
        %3113 = vst [vmem:[%s142 + $0x1c70] sm:$0xff] %v2089
        %3114 = vst [vmem:[%s142 + $0x1c78] sm:$0xff] %v2090
        %3115 = vst [vmem:[%s142 + $0x1c80] sm:$0xff] %v2091
        %3116 = vst [vmem:[%s142 + $0x1c88] sm:$0xff] %v2092
        %3117 = vst [vmem:[%s142 + $0x1c90] sm:$0xff] %v2093
        %3118 = vst [vmem:[%s142 + $0x1c98] sm:$0xff] %v2094
        %3119 = vst [vmem:[%s142 + $0x1ca0] sm:$0xff] %v2095
        %3120 = vst [vmem:[%s142 + $0x1ca8] sm:$0xff] %v2096
        %3121 = vst [vmem:[%s142 + $0x1cb0] sm:$0xff] %v2097
        %3122 = vst [vmem:[%s142 + $0x1cb8] sm:$0xff] %v2098
        %3123 = vst [vmem:[%s142 + $0x1cc0] sm:$0xff] %v2099
        %3124 = vst [vmem:[%s142 + $0x1cc8] sm:$0xff] %v2100
        %3125 = vst [vmem:[%s142 + $0x1cd0] sm:$0xff] %v2101
        %3126 = vst [vmem:[%s142 + $0x1cd8] sm:$0xff] %v2102
        %3127 = vst [vmem:[%s142 + $0x1ce0] sm:$0xff] %v2103
        %3128 = vst [vmem:[%s142 + $0x1ce8] sm:$0xff] %v2104
        %3129 = vst [vmem:[%s142 + $0x1cf0] sm:$0xff] %v2105
        %3130 = vst [vmem:[%s142 + $0x1cf8] sm:$0xff] %v2106
        %3131 = vst [vmem:[%s142 + $0x1d00] sm:$0xff] %v2107
        %3132 = vst [vmem:[%s142 + $0x1d08] sm:$0xff] %v2108
        %3133 = vst [vmem:[%s142 + $0x1d10] sm:$0xff] %v2109
        %3134 = vst [vmem:[%s142 + $0x1d18] sm:$0xff] %v2110
        %3135 = vst [vmem:[%s142 + $0x1d20] sm:$0xff] %v2111
        %3136 = vst [vmem:[%s142 + $0x1d28] sm:$0xff] %v2112
        %3137 = vst [vmem:[%s142 + $0x1d30] sm:$0xff] %v2113
        %3138 = vst [vmem:[%s142 + $0x1d38] sm:$0xff] %v2114
        %3139 = vst [vmem:[%s142 + $0x1d40] sm:$0xff] %v2115
        %3140 = vst [vmem:[%s142 + $0x1d48] sm:$0xff] %v2116
        %3141 = vst [vmem:[%s142 + $0x1d50] sm:$0xff] %v2117
        %3142 = vst [vmem:[%s142 + $0x1d58] sm:$0xff] %v2118
        %3143 = vst [vmem:[%s142 + $0x1d60] sm:$0xff] %v2119
        %3144 = vst [vmem:[%s142 + $0x1d68] sm:$0xff] %v2120
        %3145 = vst [vmem:[%s142 + $0x1d70] sm:$0xff] %v2121
        %3146 = vst [vmem:[%s142 + $0x1d78] sm:$0xff] %v2122
        %3147 = vst [vmem:[%s142 + $0x1d80] sm:$0xff] %v2123
        %3148 = vst [vmem:[%s142 + $0x1d88] sm:$0xff] %v2124
        %3149 = vst [vmem:[%s142 + $0x1d90] sm:$0xff] %v2125
        %3150 = vst [vmem:[%s142 + $0x1d98] sm:$0xff] %v2126
        %3151 = vst [vmem:[%s142 + $0x1da0] sm:$0xff] %v2127
        %3152 = vst [vmem:[%s142 + $0x1da8] sm:$0xff] %v2128
        %3153 = vst [vmem:[%s142 + $0x1db0] sm:$0xff] %v2129
        %3154 = vst [vmem:[%s142 + $0x1db8] sm:$0xff] %v2130
        %3155 = vst [vmem:[%s142 + $0x1dc0] sm:$0xff] %v2131
        %3156 = vst [vmem:[%s142 + $0x1dc8] sm:$0xff] %v2132
        %3157 = vst [vmem:[%s142 + $0x1dd0] sm:$0xff] %v2133
        %3158 = vst [vmem:[%s142 + $0x1dd8] sm:$0xff] %v2134
        %3159 = vst [vmem:[%s142 + $0x1de0] sm:$0xff] %v2135
        %3160 = vst [vmem:[%s142 + $0x1de8] sm:$0xff] %v2136
        %3161 = vst [vmem:[%s142 + $0x1df0] sm:$0xff] %v2137
        %3162 = vst [vmem:[%s142 + $0x1df8] sm:$0xff] %v2138
        %3163 = vst [vmem:[%s142 + $0x1e00] sm:$0xff] %v2139
        %3164 = vst [vmem:[%s142 + $0x1e08] sm:$0xff] %v2140
        %3165 = vst [vmem:[%s142 + $0x1e10] sm:$0xff] %v2141
        %3166 = vst [vmem:[%s142 + $0x1e18] sm:$0xff] %v2142
        %3167 = vst [vmem:[%s142 + $0x1e20] sm:$0xff] %v2143
        %3168 = vst [vmem:[%s142 + $0x1e28] sm:$0xff] %v2144
        %3169 = vst [vmem:[%s142 + $0x1e30] sm:$0xff] %v2145
        %3170 = vst [vmem:[%s142 + $0x1e38] sm:$0xff] %v2146
        %3171 = vst [vmem:[%s142 + $0x1e40] sm:$0xff] %v2147
        %3172 = vst [vmem:[%s142 + $0x1e48] sm:$0xff] %v2148
        %3173 = vst [vmem:[%s142 + $0x1e50] sm:$0xff] %v2149
        %3174 = vst [vmem:[%s142 + $0x1e58] sm:$0xff] %v2150
        %3175 = vst [vmem:[%s142 + $0x1e60] sm:$0xff] %v2151
        %3176 = vst [vmem:[%s142 + $0x1e68] sm:$0xff] %v2152
        %3177 = vst [vmem:[%s142 + $0x1e70] sm:$0xff] %v2153
        %3178 = vst [vmem:[%s142 + $0x1e78] sm:$0xff] %v2154
        %3179 = vst [vmem:[%s142 + $0x1e80] sm:$0xff] %v2155
        %3180 = vst [vmem:[%s142 + $0x1e88] sm:$0xff] %v2156
        %3181 = vst [vmem:[%s142 + $0x1e90] sm:$0xff] %v2157
        %3182 = vst [vmem:[%s142 + $0x1e98] sm:$0xff] %v2158
        %3183 = vst [vmem:[%s142 + $0x1ea0] sm:$0xff] %v2159
        %3184 = vst [vmem:[%s142 + $0x1ea8] sm:$0xff] %v2160
        %3185 = vst [vmem:[%s142 + $0x1eb0] sm:$0xff] %v2161
        %3186 = vst [vmem:[%s142 + $0x1eb8] sm:$0xff] %v2162
        %3187 = vst [vmem:[%s142 + $0x1ec0] sm:$0xff] %v2163
        %3188 = vst [vmem:[%s142 + $0x1ec8] sm:$0xff] %v2164
        %3189 = vst [vmem:[%s142 + $0x1ed0] sm:$0xff] %v2165
        %3190 = vst [vmem:[%s142 + $0x1ed8] sm:$0xff] %v2166
        %3191 = vst [vmem:[%s142 + $0x1ee0] sm:$0xff] %v2167
        %3192 = vst [vmem:[%s142 + $0x1ee8] sm:$0xff] %v2168
        %3193 = vst [vmem:[%s142 + $0x1ef0] sm:$0xff] %v2169
        %3194 = vst [vmem:[%s142 + $0x1ef8] sm:$0xff] %v2170
        %3195 = vst [vmem:[%s142 + $0x1f00] sm:$0xff] %v2171
        %3196 = vst [vmem:[%s142 + $0x1f08] sm:$0xff] %v2172
        %3197 = vst [vmem:[%s142 + $0x1f10] sm:$0xff] %v2173
        %3198 = vst [vmem:[%s142 + $0x1f18] sm:$0xff] %v2174
        %3199 = vst [vmem:[%s142 + $0x1f20] sm:$0xff] %v2175
        %3200 = vst [vmem:[%s142 + $0x1f28] sm:$0xff] %v2176
        %3201 = vst [vmem:[%s142 + $0x1f30] sm:$0xff] %v2177
        %3202 = vst [vmem:[%s142 + $0x1f38] sm:$0xff] %v2178
        %3203 = vst [vmem:[%s142 + $0x1f40] sm:$0xff] %v2179
        %3204 = vst [vmem:[%s142 + $0x1f48] sm:$0xff] %v2180
        %3205 = vst [vmem:[%s142 + $0x1f50] sm:$0xff] %v2181
        %3206 = vst [vmem:[%s142 + $0x1f58] sm:$0xff] %v2182
        %3207 = vst [vmem:[%s142 + $0x1f60] sm:$0xff] %v2183
        %3208 = vst [vmem:[%s142 + $0x1f68] sm:$0xff] %v2184
        %3209 = vst [vmem:[%s142 + $0x1f70] sm:$0xff] %v2185
        %3210 = vst [vmem:[%s142 + $0x1f78] sm:$0xff] %v2186
        %3211 = vst [vmem:[%s142 + $0x1f80] sm:$0xff] %v2187
        %3212 = vst [vmem:[%s142 + $0x1f88] sm:$0xff] %v2188
        %3213 = vst [vmem:[%s142 + $0x1f90] sm:$0xff] %v2189
        %3214 = vst [vmem:[%s142 + $0x1f98] sm:$0xff] %v2190
        %3215 = vst [vmem:[%s142 + $0x1fa0] sm:$0xff] %v2191
        %3216 = vst [vmem:[%s142 + $0x1fa8] sm:$0xff] %v2192
        %3217 = vst [vmem:[%s142 + $0x1fb0] sm:$0xff] %v2193
        %3218 = vst [vmem:[%s142 + $0x1fb8] sm:$0xff] %v2194
        %3219 = vst [vmem:[%s142 + $0x1fc0] sm:$0xff] %v2195
        %3220 = vst [vmem:[%s142 + $0x1fc8] sm:$0xff] %v2196
        %3221 = vst [vmem:[%s142 + $0x1fd0] sm:$0xff] %v2197
        %3222 = vst [vmem:[%s142 + $0x1fd8] sm:$0xff] %v2198
        %3223 = vst [vmem:[%s142 + $0x1fe0] sm:$0xff] %v2199
        %3224 = vst [vmem:[%s142 + $0x1fe8] sm:$0xff] %v2200
        %3225 = vst [vmem:[%s142 + $0x1ff0] sm:$0xff] %v2201
        %3226 = vst [vmem:[%s142 + $0x1ff8] sm:$0xff] %v2202
        %s3227 = sand.u32 %s52, 1
        %s3228 = scalar_lea.sflag [#allocation4], %s3227
        %s3229 = sand.u32 %s52, 1
        %s3230 = smul.addr %s3229, 8192
        %s3231 = scalar_lea.vmem [#allocation5], %s3230
        // Predicated region
        $region29: #{tpu_custom_call.1} parent=23 // pred_check
          %p3232 = pneg %p62
        $region30: #{tpu_custom_call.1} parent=23 // pred_check_branch
          %3234 = sbr.rel (%p3232) target = $region32
        $region31: #{tpu_custom_call.1} parent=23 // pred_region
          %s3235 = smul.u32 32, %s18
          %s3236 = ssub.s32 48, %s3235
          %p3237 = scmp.lt.s32.totalorder %s3236, 32
          %s3238 = scalar_select %p3237, %s3236, 32
          %s3239 = smul.u32 128, %s3238
          %s3240 = smul.u32 %s3239, 32
          %s3242 = ssub.s32 131072, %s3240
          %3243 = vsyncadd %s3228, %s3242
          %p3244 = scmp.ne.s32.totalorder 0, %s3240
          %s3245 = smul.addr %s3235, 32
          %s3246 = smul.addr %s3245, 128
          %s3247 = scalar_lea.hbm %s1, %s3246
          %s3248 = smul.u32 256, %s3238
          %s3249 = sshll.u32 %s3231, 4
          %s3250 = int_to_ptr.vmem [resolvable:$true] %s3249
          %s3251 = sshll.u32 %s3248, 4
          %3255 = dma.vmem_to_hbm [thread:$0]  (%p3244), %s3250, %s3251, %s3247, %s3228, 4096, 4096, 256
        $region32: #{tpu_custom_call.1} parent=23 // pred_fallthru
          _
      $region24: #{tpu_custom_call.1} parent=5 // pred_fallthru
        _
      %p3256 = scmp.le.s32.totalorder 2, %s13
      // Predicated region
      $region33: #{tpu_custom_call.1} parent=5 // pred_check
        %p3257 = pneg %p3256
      $region34: #{tpu_custom_call.1} parent=5 // pred_check_branch
        %3259 = sbr.rel (%p3257) target = $region36
      $region35: #{tpu_custom_call.1} parent=5 // pred_region
        %s3260 = ssub.s32 %s13, 2
        // Predicated region
        $region37: #{tpu_custom_call.1} parent=35 // pred_check
          %p3261 = pneg %p68
        $region38: #{tpu_custom_call.1} parent=35 // pred_check_branch
          %3263 = sbr.rel (%p3261) target = $region40
        $region39: #{tpu_custom_call.1} parent=35 // pred_region
          %s3264 = sand.u32 %s53, 1
          %s3265 = scalar_lea.sflag [#allocation4], %s3264
          %s3266 = sand.u32 %s53, 1
          %s3267 = smul.addr %s3266, 8192
          %s3268 = scalar_lea.vmem [#allocation5], %s3267
          %3269 = dma.done %s3265, 131072
        $region40: #{tpu_custom_call.1} parent=35 // pred_fallthru
          _
      $region36: #{tpu_custom_call.1} parent=5 // pred_fallthru
        _
    $region6: #{tpu_custom_call.1} parent=1 // loop_footer
      %s17 = sadd.s32 1, %s13
    $region7: #{tpu_custom_call.1} parent=1 // loop_footer_branch
      %12 = sbr.rel target = $region3
    $region8: #{tpu_custom_call.1} parent=1 // loop_exit
      _
    %3270 = vsyncpa [#allocation3], 1
    %s3271 = scalar_lea.sflag [#allocation3], 1
    %3272 = vsyncpa %s3271, 1
    %3273 = vsyncpa [#allocation4], 1
    %s3274 = scalar_lea.sflag [#allocation4], 1
    %3275 = vsyncpa %s3274, 1

</llo_original>
